<compile_context>
chip_gen: v6e
topology: v6e:2x2x1
jax: 0.10.0
libtpu: 0.0.40
codegen_flags: <defaults>
</compile_context>

<pallas_src>
import functools

import jax
import jax.numpy as jnp
from jax.experimental import pallas as pl
from jax.experimental.pallas import tpu as pltpu


# -----------------------------------------------------------------------------
# Kernel A: fused BaseMapToNode + node-vector view + spatial hypergraph conv
#   relu( G @ (node(x) @ Whg) + bhg )  ==  relu( x_flat @ W_spatial + b_spatial )
# -----------------------------------------------------------------------------
def _spatial_kernel(x_ref, w_ref, b_ref, o_ref):
    acc = jnp.dot(x_ref[0], w_ref[...], preferred_element_type=jnp.float32)
    o_ref[0] = jnp.maximum(acc + b_ref[...], 0.0).astype(o_ref.dtype)


def spatial_stage(x_flat, w_spatial, b_spatial):
    """x_flat:[BS, T, C*H*W] bf16 -> relu(x @ W + b) : [BS, T, P*Dh] bf16."""
    BS, T, K = x_flat.shape
    N = w_spatial.shape[1]
    return pl.pallas_call(
        _spatial_kernel,
        out_shape=jax.ShapeDtypeStruct((BS, T, N), jnp.bfloat16),
        grid=(BS,),
        in_specs=[
            pl.BlockSpec((1, T, K), lambda b: (b, 0, 0)),
            # Constant-index weight/bias blocks (fetched once across the grid).
            pl.BlockSpec((K, N), lambda b: (0, 0)),
            pl.BlockSpec((1, N), lambda b: (0, 0)),
        ],
        out_specs=pl.BlockSpec((1, T, N), lambda b: (b, 0, 0)),
        compiler_params=pltpu.CompilerParams(dimension_semantics=("parallel",)),
    )(x_flat, w_spatial, b_spatial)


# -----------------------------------------------------------------------------
# Kernel B: whole-sequence GRU per batch sample (gate order r, z, n; PyTorch
# GRUCell semantics).  Input gates hoisted out of the serial t loop.
# -----------------------------------------------------------------------------
def _gru_kernel(hg_ref, w_ih_ref, b_ih_ref, w_hh_ref, b_hh_ref, o_ref, *, num_kpts):
    P = num_kpts
    TP, Dh = hg_ref.shape[1], hg_ref.shape[2]
    T = TP // P

    x = hg_ref[0]                                               # [T*P, Dh] bf16

    # Hoisted input gates: one well-filled M=T*P matmul per gate; per-gate
    # [Dh, Dh] weights keep every result lane-aligned at lane 0.
    xr = jnp.dot(x, w_ih_ref[0], preferred_element_type=jnp.float32) + b_ih_ref[0]
    xz = jnp.dot(x, w_ih_ref[1], preferred_element_type=jnp.float32) + b_ih_ref[1]
    xn = jnp.dot(x, w_ih_ref[2], preferred_element_type=jnp.float32) + b_ih_ref[2]

    w_hh_r, w_hh_z, w_hh_n = w_hh_ref[0], w_hh_ref[1], w_hh_ref[2]   # bf16 [Dh,Dh]
    b_hh_r, b_hh_z, b_hh_n = b_hh_ref[0], b_hh_ref[1], b_hh_ref[2]   # f32  [1,Dh]

    # Recurrence: hidden state carried in vregs; the output tile is filled
    # step-by-step in VMEM and DMA'd back to HBM once per batch sample.
    h = jnp.zeros((P, Dh), jnp.float32)
    for t in range(T):            # T is static; the recurrence is inherently serial
        lo = t * P
        hb = h.astype(w_hh_r.dtype)
        hr = jnp.dot(hb, w_hh_r, preferred_element_type=jnp.float32) + b_hh_r
        hz = jnp.dot(hb, w_hh_z, preferred_element_type=jnp.float32) + b_hh_z
        hn = jnp.dot(hb, w_hh_n, preferred_element_type=jnp.float32) + b_hh_n
        r = jax.nn.sigmoid(xr[lo:lo + P] + hr)
        z = jax.nn.sigmoid(xz[lo:lo + P] + hz)
        n = jnp.tanh(xn[lo:lo + P] + r * hn)
        h = (1.0 - z) * n + z * h
        o_ref[0, lo:lo + P, :] = h


def gru_stage(hg_nodes, w_ih, b_ih, w_hh, b_hh, *, num_kpts):
    """hg_nodes:[BS, T*P, Dh] bf16 -> GRU hidden states [BS, T*P, Dh] f32."""
    BS, TP, Dh = hg_nodes.shape
    return pl.pallas_call(
        functools.partial(_gru_kernel, num_kpts=num_kpts),
        out_shape=jax.ShapeDtypeStruct((BS, TP, Dh), jnp.float32),
        grid=(BS,),
        in_specs=[
            pl.BlockSpec((1, TP, Dh), lambda b: (b, 0, 0)),
            pl.BlockSpec((3, Dh, Dh), lambda b: (0, 0, 0)),
            pl.BlockSpec((3, 1, Dh), lambda b: (0, 0, 0)),
            pl.BlockSpec((3, Dh, Dh), lambda b: (0, 0, 0)),
            pl.BlockSpec((3, 1, Dh), lambda b: (0, 0, 0)),
        ],
        out_specs=pl.BlockSpec((1, TP, Dh), lambda b: (b, 0, 0)),
        compiler_params=pltpu.CompilerParams(dimension_semantics=("parallel",)),
    )(hg_nodes, w_ih, b_ih, w_hh, b_hh)


# -----------------------------------------------------------------------------
# Parameter construction (deterministic, synthetic) and one-time folding
# -----------------------------------------------------------------------------
def incidence_matrix_from_num_points(num_points):
    """Deterministic synthetic hypergraph incidence matrix [P, E]."""
    P = num_points
    e = jnp.arange(P)
    H = jnp.zeros((P, P), jnp.float32)
    for k in range(3):  # hyperedge e connects 3 cyclically adjacent keypoints
        H = H.at[(e + k) % P, e].set(1.0)
    return H


def normalized_hypergraph_adjacency(H_inc):
    """G = Dv^{-1/2} H De^{-1} H^T Dv^{-1/2}."""
    dv = jnp.sum(H_inc, axis=1)
    de = jnp.sum(H_inc, axis=0)
    dv_inv_sqrt = jnp.diag(1.0 / jnp.sqrt(dv))
    de_inv = jnp.diag(1.0 / de)
    return dv_inv_sqrt @ H_inc @ de_inv @ H_inc.T @ dv_inv_sqrt


def init_params(in_channels, num_kpts, feat_size, hidden_dim, pred_dim=2, seed=0):
    key = jax.random.PRNGKey(seed)
    ks = jax.random.split(key, 10)
    din = 4 * feat_size * feat_size
    scale = 0.05
    return {
        "conv_w": scale * jax.random.normal(ks[0], (in_channels, num_kpts * 4), jnp.float32),
        "conv_b": scale * jax.random.normal(ks[1], (num_kpts * 4,), jnp.float32),
        "G": normalized_hypergraph_adjacency(incidence_matrix_from_num_points(num_kpts)),
        "hg_w": scale * jax.random.normal(ks[2], (din, hidden_dim), jnp.float32),
        "hg_b": scale * jax.random.normal(ks[3], (hidden_dim,), jnp.float32),
        "w_ih": scale * jax.random.normal(ks[4], (3, hidden_dim, hidden_dim), jnp.float32),
        "b_ih": scale * jax.random.normal(ks[5], (3, hidden_dim), jnp.float32),
        "w_hh": scale * jax.random.normal(ks[6], (3, hidden_dim, hidden_dim), jnp.float32),
        "b_hh": scale * jax.random.normal(ks[7], (3, hidden_dim), jnp.float32),
        "pred_w": scale * jax.random.normal(ks[8], (hidden_dim, pred_dim), jnp.float32),
        "pred_b": scale * jax.random.normal(ks[9], (pred_dim,), jnp.float32),
    }


def fold_params(params, *, num_kpts, feat_size, hidden_dim):
    """One-time algebraic fusion (outside the forward pass):
       conv -> node view -> (G @ X @ Whg + bhg)  ==>  x_flat @ W_spatial + b_spatial.
       MXU weights are cast to bf16; biases stay f32.
       NOTE: only a win while C ~= 4 (W_spatial bytes/FLOPs scale ~ C)."""
    P, Dh = num_kpts, hidden_dim
    HW = feat_size * feat_size
    C = params["conv_w"].shape[0]
    G = params["G"]                                     # [P, P]

    hg_w_r = params["hg_w"].reshape(4, HW, Dh)          # [c4, hw, d]
    conv_w_r = params["conv_w"].reshape(C, P, 4)        # [c, q, c4]
    conv_b_r = params["conv_b"].reshape(P, 4)           # [q, c4]

    # W_spatial[c*HW+hw, p*Dh+d] = sum_q G[p,q] * sum_c4 conv_w[c,4q+c4] * hg_w[c4*HW+hw,d]
    a = jnp.einsum("cqk,khd->chqd", conv_w_r, hg_w_r)   # [C, HW, q, Dh]
    w_sp = jnp.einsum("pq,chqd->chpd", G, a)            # [C, HW, p, Dh]
    w_spatial = w_sp.reshape(C * HW, P * Dh)

    s = hg_w_r.sum(axis=1)                              # [4, Dh]
    cb = conv_b_r @ s                                   # [P, Dh]
    b_sp = G @ cb + params["hg_b"][None, :]             # [P, Dh]
    b_spatial = b_sp.reshape(1, P * Dh)

    return {
        "w_spatial": w_spatial.astype(jnp.bfloat16),
        "b_spatial": b_spatial.astype(jnp.float32),
        "w_ih": params["w_ih"].astype(jnp.bfloat16),        # [3, Dh, Dh]
        "b_ih": params["b_ih"].reshape(3, 1, Dh).astype(jnp.float32),
        "w_hh": params["w_hh"].astype(jnp.bfloat16),        # [3, Dh, Dh]
        "b_hh": params["b_hh"].reshape(3, 1, Dh).astype(jnp.float32),
        "pred_w": params["pred_w"], "pred_b": params["pred_b"],
    }


# -----------------------------------------------------------------------------
# BHSTPredictor forward
# -----------------------------------------------------------------------------
@functools.partial(jax.jit, static_argnames=("num_kpts", "hidden_dim"))
def bhst_predictor_forward(x, folded, *, num_kpts, hidden_dim):
    BS, T, C, H, W = x.shape
    P, Dh = num_kpts, hidden_dim

    # ---- Kernel A: conv -> node view -> hypergraph conv, fully folded -------
    x_flat = x.reshape(BS, T, C * H * W).astype(jnp.bfloat16)   # bf16 MXU operand
    hg = spatial_stage(x_flat, folded["w_spatial"], folded["b_spatial"])  # [BS,T,P*Dh]

    # Free HBM reshape to per-node rows (row-major: (t, p*Dh+d) == (t*P+p, d)).
    hg_nodes = hg.reshape(BS, T * P, Dh)

    # ---- Kernel B: whole-sequence GRU per batch sample -----------------------
    feat2 = gru_stage(hg_nodes, folded["w_ih"], folded["b_ih"],
                      folded["w_hh"], folded["b_hh"], num_kpts=P)  # [BS, T*P, Dh]
    feat = feat2.reshape(BS, T, P, Dh)

    # ---- prediction head (N=2: lane-sparse + tiny -> plain XLA matmul) -------
    pred = feat @ folded["pred_w"] + folded["pred_b"]              # [BS, T, P, 2]

    return {"pred": pred, "feat": feat, "fpred": None, "bpred": None}


# -----------------------------------------------------------------------------
# Demo
# -----------------------------------------------------------------------------
if __name__ == "__main__":
    BS, T, C, H, W = 2, 8, 4, 8, 8       # feat_size = 8 -> HIDDENSIZ = 4*8*8 = 256
    NUM_KPTS = 16
    HIDDEN_DIM = 32

    key = jax.random.PRNGKey(0)
    x = jax.random.normal(key, (BS, T, C, H, W), jnp.float32)

    params = init_params(C, NUM_KPTS, H, HIDDEN_DIM, seed=0)
    folded = fold_params(params, num_kpts=NUM_KPTS, feat_size=H, hidden_dim=HIDDEN_DIM)

    out = bhst_predictor_forward(x, folded, num_kpts=NUM_KPTS, hidden_dim=HIDDEN_DIM)
    jax.block_until_ready(out["pred"])
    jax.block_until_ready(out["feat"])

    assert out["pred"].shape == (BS, T, NUM_KPTS, 2)
    assert out["feat"].shape == (BS, T, NUM_KPTS, HIDDEN_DIM)
    assert out["fpred"] is None and out["bpred"] is None
    print("KERNEL_OK")
</pallas_src>

<mosaic_0001>
module attributes {stable_mosaic.version = 11 : i64} {
  func.func @_spatial_kernel(%arg0: i32, %arg1: memref<1x8x256xbf16, #tpu.memory_space<vmem>>, %arg2: memref<256x512xbf16, #tpu.memory_space<vmem>>, %arg3: memref<1x512xf32, #tpu.memory_space<vmem>>, %arg4: memref<1x8x512xbf16, #tpu.memory_space<vmem>>) attributes {dimension_semantics = [#tpu.dimension_semantics<parallel>], iteration_bounds = array<i64: 2>, scalar_prefetch = 0 : i64, scratch_operands = 0 : i64, tpu.core_type = #tpu.core_type<tc>, window_params = [{transform_indices = @transform_0, window_bounds = array<i64: 1, 8, 256>}, {pipeline_mode = #tpu.pipeline_mode<synchronous>, transform_indices = @transform_1, window_bounds = array<i64: 256, 512>}, {pipeline_mode = #tpu.pipeline_mode<synchronous>, transform_indices = @transform_2, window_bounds = array<i64: 1, 512>}, {transform_indices = @transform_3, window_bounds = array<i64: 1, 8, 512>}]} {
    %c0 = arith.constant 0 : index
    %c0_0 = arith.constant 0 : index
    %c0_1 = arith.constant 0 : index
    %0 = vector.load %arg1[%c0, %c0_0, %c0_1] : memref<1x8x256xbf16, #tpu.memory_space<vmem>>, vector<1x8x256xbf16>
    %1 = vector.shape_cast %0 : vector<1x8x256xbf16> to vector<8x256xbf16>
    %c0_2 = arith.constant 0 : index
    %c0_3 = arith.constant 0 : index
    %2 = vector.load %arg2[%c0_2, %c0_3] : memref<256x512xbf16, #tpu.memory_space<vmem>>, vector<256x512xbf16>
    %cst = arith.constant dense<0.000000e+00> : vector<8x512xf32>
    %3 = tpu.matmul %1, %2, %cst {dimension_numbers = #tpu.dot_dimension_numbers<[1], [0], [0], [1], [0, 0, 1, 1], [], []>} : vector<8x256xbf16>, vector<256x512xbf16>, vector<8x512xf32> -> vector<8x512xf32>
    %c0_4 = arith.constant 0 : index
    %c0_5 = arith.constant 0 : index
    %4 = vector.load %arg3[%c0_4, %c0_5] : memref<1x512xf32, #tpu.memory_space<vmem>>, vector<1x512xf32>
    %5 = vector.broadcast %4 : vector<1x512xf32> to vector<8x512xf32>
    %6 = arith.addf %3, %5 : vector<8x512xf32>
    %cst_6 = arith.constant 0.000000e+00 : f32
    %7 = vector.broadcast %cst_6 : f32 to vector<8x512xf32>
    %8 = arith.maximumf %6, %7 : vector<8x512xf32>
    %9 = arith.truncf %8 : vector<8x512xf32> to vector<8x512xbf16>
    %c0_7 = arith.constant 0 : index
    %c0_8 = arith.constant 0 : index
    %c0_9 = arith.constant 0 : index
    %10 = vector.load %arg4[%c0_7, %c0_8, %c0_9] : memref<1x8x512xbf16, #tpu.memory_space<vmem>>, vector<1x8x512xbf16>
    %11 = vector.shape_cast %10 : vector<1x8x512xbf16> to vector<8x512xbf16>
    %12 = vector.shape_cast %9 : vector<8x512xbf16> to vector<1x8x512xbf16>
    tpu.vector_store %arg4[%c0_7, %c0_8, %c0_9], %12 {strides = array<i32>} : memref<1x8x512xbf16, #tpu.memory_space<vmem>>, vector<1x8x512xbf16>,
    return
  }
  func.func @transform_0(%arg0: i32) -> (i32, i32, i32) {
    %c0_i32 = arith.constant 0 : i32
    %c0_i32_0 = arith.constant 0 : i32
    %c0_i32_1 = arith.constant 0 : i32
    return %arg0, %c0_i32, %c0_i32_0 : i32, i32, i32
  }
  func.func @transform_1(%arg0: i32) -> (i32, i32) {
    %c0_i32 = arith.constant 0 : i32
    %c0_i32_0 = arith.constant 0 : i32
    %c0_i32_1 = arith.constant 0 : i32
    return %c0_i32, %c0_i32_0 : i32, i32
  }
  func.func @transform_2(%arg0: i32) -> (i32, i32) {
    %c0_i32 = arith.constant 0 : i32
    %c0_i32_0 = arith.constant 0 : i32
    %c0_i32_1 = arith.constant 0 : i32
    return %c0_i32, %c0_i32_0 : i32, i32
  }
  func.func @transform_3(%arg0: i32) -> (i32, i32, i32) {
    %c0_i32 = arith.constant 0 : i32
    %c0_i32_0 = arith.constant 0 : i32
    %c0_i32_1 = arith.constant 0 : i32
    return %arg0, %c0_i32, %c0_i32_0 : i32, i32, i32
  }
}

module attributes {stable_mosaic.version = 11 : i64} {
  func.func @_gru_kernel(%arg0: i32, %arg1: memref<1x128x32xbf16, #tpu.memory_space<vmem>>, %arg2: memref<3x32x32xbf16, #tpu.memory_space<vmem>>, %arg3: memref<3x1x32xf32, #tpu.memory_space<vmem>>, %arg4: memref<3x32x32xbf16, #tpu.memory_space<vmem>>, %arg5: memref<3x1x32xf32, #tpu.memory_space<vmem>>, %arg6: memref<1x128x32xf32, #tpu.memory_space<vmem>>) attributes {dimension_semantics = [#tpu.dimension_semantics<parallel>], iteration_bounds = array<i64: 2>, scalar_prefetch = 0 : i64, scratch_operands = 0 : i64, tpu.core_type = #tpu.core_type<tc>, window_params = [{transform_indices = @transform_0, window_bounds = array<i64: 1, 128, 32>}, {pipeline_mode = #tpu.pipeline_mode<synchronous>, transform_indices = @transform_1, window_bounds = array<i64: 3, 32, 32>}, {pipeline_mode = #tpu.pipeline_mode<synchronous>, transform_indices = @transform_2, window_bounds = array<i64: 3, 1, 32>}, {pipeline_mode = #tpu.pipeline_mode<synchronous>, transform_indices = @transform_3, window_bounds = array<i64: 3, 32, 32>}, {pipeline_mode = #tpu.pipeline_mode<synchronous>, transform_indices = @transform_4, window_bounds = array<i64: 3, 1, 32>}, {transform_indices = @transform_5, window_bounds = array<i64: 1, 128, 32>}]} {
    %c0 = arith.constant 0 : index
    %c0_0 = arith.constant 0 : index
    %c0_1 = arith.constant 0 : index
    %0 = vector.load %arg1[%c0, %c0_0, %c0_1] : memref<1x128x32xbf16, #tpu.memory_space<vmem>>, vector<1x128x32xbf16>
    %1 = vector.shape_cast %0 : vector<1x128x32xbf16> to vector<128x32xbf16>
    %c0_2 = arith.constant 0 : index
    %c0_3 = arith.constant 0 : index
    %c0_4 = arith.constant 0 : index
    %2 = vector.load %arg2[%c0_2, %c0_3, %c0_4] : memref<3x32x32xbf16, #tpu.memory_space<vmem>>, vector<1x32x32xbf16>
    %3 = vector.shape_cast %2 : vector<1x32x32xbf16> to vector<32x32xbf16>
    %cst = arith.constant dense<0.000000e+00> : vector<128x32xf32>
    %4 = tpu.matmul %1, %3, %cst {dimension_numbers = #tpu.dot_dimension_numbers<[1], [0], [0], [1], [0, 0, 1, 1], [], []>} : vector<128x32xbf16>, vector<32x32xbf16>, vector<128x32xf32> -> vector<128x32xf32>
    %c0_5 = arith.constant 0 : index
    %c0_6 = arith.constant 0 : index
    %c0_7 = arith.constant 0 : index
    %5 = vector.load %arg3[%c0_5, %c0_6, %c0_7] : memref<3x1x32xf32, #tpu.memory_space<vmem>>, vector<1x1x32xf32>
    %6 = vector.shape_cast %5 : vector<1x1x32xf32> to vector<1x32xf32>
    %7 = vector.broadcast %6 : vector<1x32xf32> to vector<128x32xf32>
    %8 = arith.addf %4, %7 : vector<128x32xf32>
    %c1 = arith.constant 1 : index
    %c0_8 = arith.constant 0 : index
    %c0_9 = arith.constant 0 : index
    %9 = vector.load %arg2[%c1, %c0_8, %c0_9] : memref<3x32x32xbf16, #tpu.memory_space<vmem>>, vector<1x32x32xbf16>
    %10 = vector.shape_cast %9 : vector<1x32x32xbf16> to vector<32x32xbf16>
    %cst_10 = arith.constant dense<0.000000e+00> : vector<128x32xf32>
    %11 = tpu.matmul %1, %10, %cst_10 {dimension_numbers = #tpu.dot_dimension_numbers<[1], [0], [0], [1], [0, 0, 1, 1], [], []>} : vector<128x32xbf16>, vector<32x32xbf16>, vector<128x32xf32> -> vector<128x32xf32>
    %c1_11 = arith.constant 1 : index
    %c0_12 = arith.constant 0 : index
    %c0_13 = arith.constant 0 : index
    %12 = vector.load %arg3[%c1_11, %c0_12, %c0_13] : memref<3x1x32xf32, #tpu.memory_space<vmem>>, vector<1x1x32xf32>
    %13 = vector.shape_cast %12 : vector<1x1x32xf32> to vector<1x32xf32>
    %14 = vector.broadcast %13 : vector<1x32xf32> to vector<128x32xf32>
    %15 = arith.addf %11, %14 : vector<128x32xf32>
    %c2 = arith.constant 2 : index
    %c0_14 = arith.constant 0 : index
    %c0_15 = arith.constant 0 : index
    %16 = vector.load %arg2[%c2, %c0_14, %c0_15] : memref<3x32x32xbf16, #tpu.memory_space<vmem>>, vector<1x32x32xbf16>
    %17 = vector.shape_cast %16 : vector<1x32x32xbf16> to vector<32x32xbf16>
    %cst_16 = arith.constant dense<0.000000e+00> : vector<128x32xf32>
    %18 = tpu.matmul %1, %17, %cst_16 {dimension_numbers = #tpu.dot_dimension_numbers<[1], [0], [0], [1], [0, 0, 1, 1], [], []>} : vector<128x32xbf16>, vector<32x32xbf16>, vector<128x32xf32> -> vector<128x32xf32>
    %c2_17 = arith.constant 2 : index
    %c0_18 = arith.constant 0 : index
    %c0_19 = arith.constant 0 : index
    %19 = vector.load %arg3[%c2_17, %c0_18, %c0_19] : memref<3x1x32xf32, #tpu.memory_space<vmem>>, vector<1x1x32xf32>
    %20 = vector.shape_cast %19 : vector<1x1x32xf32> to vector<1x32xf32>
    %21 = vector.broadcast %20 : vector<1x32xf32> to vector<128x32xf32>
    %22 = arith.addf %18, %21 : vector<128x32xf32>
    %c0_20 = arith.constant 0 : index
    %c0_21 = arith.constant 0 : index
    %c0_22 = arith.constant 0 : index
    %23 = vector.load %arg4[%c0_20, %c0_21, %c0_22] : memref<3x32x32xbf16, #tpu.memory_space<vmem>>, vector<1x32x32xbf16>
    %24 = vector.shape_cast %23 : vector<1x32x32xbf16> to vector<32x32xbf16>
    %c1_23 = arith.constant 1 : index
    %c0_24 = arith.constant 0 : index
    %c0_25 = arith.constant 0 : index
    %25 = vector.load %arg4[%c1_23, %c0_24, %c0_25] : memref<3x32x32xbf16, #tpu.memory_space<vmem>>, vector<1x32x32xbf16>
    %26 = vector.shape_cast %25 : vector<1x32x32xbf16> to vector<32x32xbf16>
    %c2_26 = arith.constant 2 : index
    %c0_27 = arith.constant 0 : index
    %c0_28 = arith.constant 0 : index
    %27 = vector.load %arg4[%c2_26, %c0_27, %c0_28] : memref<3x32x32xbf16, #tpu.memory_space<vmem>>, vector<1x32x32xbf16>
    %28 = vector.shape_cast %27 : vector<1x32x32xbf16> to vector<32x32xbf16>
    %c0_29 = arith.constant 0 : index
    %c0_30 = arith.constant 0 : index
    %c0_31 = arith.constant 0 : index
    %29 = vector.load %arg5[%c0_29, %c0_30, %c0_31] : memref<3x1x32xf32, #tpu.memory_space<vmem>>, vector<1x1x32xf32>
    %30 = vector.shape_cast %29 : vector<1x1x32xf32> to vector<1x32xf32>
    %c1_32 = arith.constant 1 : index
    %c0_33 = arith.constant 0 : index
    %c0_34 = arith.constant 0 : index
    %31 = vector.load %arg5[%c1_32, %c0_33, %c0_34] : memref<3x1x32xf32, #tpu.memory_space<vmem>>, vector<1x1x32xf32>
    %32 = vector.shape_cast %31 : vector<1x1x32xf32> to vector<1x32xf32>
    %c2_35 = arith.constant 2 : index
    %c0_36 = arith.constant 0 : index
    %c0_37 = arith.constant 0 : index
    %33 = vector.load %arg5[%c2_35, %c0_36, %c0_37] : memref<3x1x32xf32, #tpu.memory_space<vmem>>, vector<1x1x32xf32>
    %34 = vector.shape_cast %33 : vector<1x1x32xf32> to vector<1x32xf32>
    %cst_38 = arith.constant 0.000000e+00 : f32
    %35 = vector.broadcast %cst_38 : f32 to vector<16x32xf32>
    %36 = arith.truncf %35 : vector<16x32xf32> to vector<16x32xbf16>
    %cst_39 = arith.constant dense<0.000000e+00> : vector<16x32xf32>
    %37 = tpu.matmul %36, %24, %cst_39 {dimension_numbers = #tpu.dot_dimension_numbers<[1], [0], [0], [1], [0, 0, 1, 1], [], []>} : vector<16x32xbf16>, vector<32x32xbf16>, vector<16x32xf32> -> vector<16x32xf32>
    %38 = vector.broadcast %30 : vector<1x32xf32> to vector<16x32xf32>
    %39 = arith.addf %37, %38 : vector<16x32xf32>
    %cst_40 = arith.constant dense<0.000000e+00> : vector<16x32xf32>
    %40 = tpu.matmul %36, %26, %cst_40 {dimension_numbers = #tpu.dot_dimension_numbers<[1], [0], [0], [1], [0, 0, 1, 1], [], []>} : vector<16x32xbf16>, vector<32x32xbf16>, vector<16x32xf32> -> vector<16x32xf32>
    %41 = vector.broadcast %32 : vector<1x32xf32> to vector<16x32xf32>
    %42 = arith.addf %40, %41 : vector<16x32xf32>
    %cst_41 = arith.constant dense<0.000000e+00> : vector<16x32xf32>
    %43 = tpu.matmul %36, %28, %cst_41 {dimension_numbers = #tpu.dot_dimension_numbers<[1], [0], [0], [1], [0, 0, 1, 1], [], []>} : vector<16x32xbf16>, vector<32x32xbf16>, vector<16x32xf32> -> vector<16x32xf32>
    %44 = vector.broadcast %34 : vector<1x32xf32> to vector<16x32xf32>
    %45 = arith.addf %43, %44 : vector<16x32xf32>
    %46 = vector.extract_strided_slice %8 {offsets = [0, 0], sizes = [16, 32], strides = [1, 1]} : vector<128x32xf32> to vector<16x32xf32>
    %47 = arith.addf %46, %39 : vector<16x32xf32>
    %48 = arith.negf %47 : vector<16x32xf32>
    %49 = math.exp %48 : vector<16x32xf32>
    %cst_42 = arith.constant 1.000000e+00 : f32
    %50 = vector.broadcast %cst_42 : f32 to vector<16x32xf32>
    %51 = arith.addf %50, %49 : vector<16x32xf32>
    %52 = arith.divf %50, %51 : vector<16x32xf32>
    %53 = vector.extract_strided_slice %15 {offsets = [0, 0], sizes = [16, 32], strides = [1, 1]} : vector<128x32xf32> to vector<16x32xf32>
    %54 = arith.addf %53, %42 : vector<16x32xf32>
    %55 = arith.negf %54 : vector<16x32xf32>
    %56 = math.exp %55 : vector<16x32xf32>
    %cst_43 = arith.constant 1.000000e+00 : f32
    %57 = vector.broadcast %cst_43 : f32 to vector<16x32xf32>
    %58 = arith.addf %57, %56 : vector<16x32xf32>
    %59 = arith.divf %57, %58 : vector<16x32xf32>
    %60 = vector.extract_strided_slice %22 {offsets = [0, 0], sizes = [16, 32], strides = [1, 1]} : vector<128x32xf32> to vector<16x32xf32>
    %61 = arith.mulf %52, %45 : vector<16x32xf32>
    %62 = arith.addf %60, %61 : vector<16x32xf32>
    %63 = math.tanh %62 : vector<16x32xf32>
    %cst_44 = arith.constant 1.000000e+00 : f32
    %64 = vector.broadcast %cst_44 : f32 to vector<16x32xf32>
    %65 = arith.subf %64, %59 : vector<16x32xf32>
    %66 = arith.mulf %65, %63 : vector<16x32xf32>
    %67 = arith.mulf %59, %35 : vector<16x32xf32>
    %68 = arith.addf %66, %67 : vector<16x32xf32>
    %c0_45 = arith.constant 0 : index
    %c0_46 = arith.constant 0 : index
    %c0_47 = arith.constant 0 : index
    %69 = vector.load %arg6[%c0_45, %c0_46, %c0_47] : memref<1x128x32xf32, #tpu.memory_space<vmem>>, vector<1x16x32xf32>
    %70 = vector.shape_cast %69 : vector<1x16x32xf32> to vector<16x32xf32>
    %71 = vector.shape_cast %68 : vector<16x32xf32> to vector<1x16x32xf32>
    tpu.vector_store %arg6[%c0_45, %c0_46, %c0_47], %71 {strides = array<i32>} : memref<1x128x32xf32, #tpu.memory_space<vmem>>, vector<1x16x32xf32>,
    %72 = arith.truncf %68 : vector<16x32xf32> to vector<16x32xbf16>
    %cst_48 = arith.constant dense<0.000000e+00> : vector<16x32xf32>
    %73 = tpu.matmul %72, %24, %cst_48 {dimension_numbers = #tpu.dot_dimension_numbers<[1], [0], [0], [1], [0, 0, 1, 1], [], []>} : vector<16x32xbf16>, vector<32x32xbf16>, vector<16x32xf32> -> vector<16x32xf32>
    %74 = vector.broadcast %30 : vector<1x32xf32> to vector<16x32xf32>
    %75 = arith.addf %73, %74 : vector<16x32xf32>
    %cst_49 = arith.constant dense<0.000000e+00> : vector<16x32xf32>
    %76 = tpu.matmul %72, %26, %cst_49 {dimension_numbers = #tpu.dot_dimension_numbers<[1], [0], [0], [1], [0, 0, 1, 1], [], []>} : vector<16x32xbf16>, vector<32x32xbf16>, vector<16x32xf32> -> vector<16x32xf32>
    %77 = vector.broadcast %32 : vector<1x32xf32> to vector<16x32xf32>
    %78 = arith.addf %76, %77 : vector<16x32xf32>
    %cst_50 = arith.constant dense<0.000000e+00> : vector<16x32xf32>
    %79 = tpu.matmul %72, %28, %cst_50 {dimension_numbers = #tpu.dot_dimension_numbers<[1], [0], [0], [1], [0, 0, 1, 1], [], []>} : vector<16x32xbf16>, vector<32x32xbf16>, vector<16x32xf32> -> vector<16x32xf32>
    %80 = vector.broadcast %34 : vector<1x32xf32> to vector<16x32xf32>
    %81 = arith.addf %79, %80 : vector<16x32xf32>
    %82 = vector.extract_strided_slice %8 {offsets = [16, 0], sizes = [16, 32], strides = [1, 1]} : vector<128x32xf32> to vector<16x32xf32>
    %83 = arith.addf %82, %75 : vector<16x32xf32>
    %84 = arith.negf %83 : vector<16x32xf32>
    %85 = math.exp %84 : vector<16x32xf32>
    %cst_51 = arith.constant 1.000000e+00 : f32
    %86 = vector.broadcast %cst_51 : f32 to vector<16x32xf32>
    %87 = arith.addf %86, %85 : vector<16x32xf32>
    %88 = arith.divf %86, %87 : vector<16x32xf32>
    %89 = vector.extract_strided_slice %15 {offsets = [16, 0], sizes = [16, 32], strides = [1, 1]} : vector<128x32xf32> to vector<16x32xf32>
    %90 = arith.addf %89, %78 : vector<16x32xf32>
    %91 = arith.negf %90 : vector<16x32xf32>
    %92 = math.exp %91 : vector<16x32xf32>
    %cst_52 = arith.constant 1.000000e+00 : f32
    %93 = vector.broadcast %cst_52 : f32 to vector<16x32xf32>
    %94 = arith.addf %93, %92 : vector<16x32xf32>
    %95 = arith.divf %93, %94 : vector<16x32xf32>
    %96 = vector.extract_strided_slice %22 {offsets = [16, 0], sizes = [16, 32], strides = [1, 1]} : vector<128x32xf32> to vector<16x32xf32>
    %97 = arith.mulf %88, %81 : vector<16x32xf32>
    %98 = arith.addf %96, %97 : vector<16x32xf32>
    %99 = math.tanh %98 : vector<16x32xf32>
    %cst_53 = arith.constant 1.000000e+00 : f32
    %100 = vector.broadcast %cst_53 : f32 to vector<16x32xf32>
    %101 = arith.subf %100, %95 : vector<16x32xf32>
    %102 = arith.mulf %101, %99 : vector<16x32xf32>
    %103 = arith.mulf %95, %68 : vector<16x32xf32>
    %104 = arith.addf %102, %103 : vector<16x32xf32>
    %c0_54 = arith.constant 0 : index
    %c16 = arith.constant 16 : index
    %c0_55 = arith.constant 0 : index
    %105 = vector.load %arg6[%c0_54, %c16, %c0_55] : memref<1x128x32xf32, #tpu.memory_space<vmem>>, vector<1x16x32xf32>
    %106 = vector.shape_cast %105 : vector<1x16x32xf32> to vector<16x32xf32>
    %107 = vector.shape_cast %104 : vector<16x32xf32> to vector<1x16x32xf32>
    tpu.vector_store %arg6[%c0_54, %c16, %c0_55], %107 {strides = array<i32>} : memref<1x128x32xf32, #tpu.memory_space<vmem>>, vector<1x16x32xf32>,
    %108 = arith.truncf %104 : vector<16x32xf32> to vector<16x32xbf16>
    %cst_56 = arith.constant dense<0.000000e+00> : vector<16x32xf32>
    %109 = tpu.matmul %108, %24, %cst_56 {dimension_numbers = #tpu.dot_dimension_numbers<[1], [0], [0], [1], [0, 0, 1, 1], [], []>} : vector<16x32xbf16>, vector<32x32xbf16>, vector<16x32xf32> -> vector<16x32xf32>
    %110 = vector.broadcast %30 : vector<1x32xf32> to vector<16x32xf32>
    %111 = arith.addf %109, %110 : vector<16x32xf32>
    %cst_57 = arith.constant dense<0.000000e+00> : vector<16x32xf32>
    %112 = tpu.matmul %108, %26, %cst_57 {dimension_numbers = #tpu.dot_dimension_numbers<[1], [0], [0], [1], [0, 0, 1, 1], [], []>} : vector<16x32xbf16>, vector<32x32xbf16>, vector<16x32xf32> -> vector<16x32xf32>
    %113 = vector.broadcast %32 : vector<1x32xf32> to vector<16x32xf32>
    %114 = arith.addf %112, %113 : vector<16x32xf32>
    %cst_58 = arith.constant dense<0.000000e+00> : vector<16x32xf32>
    %115 = tpu.matmul %108, %28, %cst_58 {dimension_numbers = #tpu.dot_dimension_numbers<[1], [0], [0], [1], [0, 0, 1, 1], [], []>} : vector<16x32xbf16>, vector<32x32xbf16>, vector<16x32xf32> -> vector<16x32xf32>
    %116 = vector.broadcast %34 : vector<1x32xf32> to vector<16x32xf32>
    %117 = arith.addf %115, %116 : vector<16x32xf32>
    %118 = vector.extract_strided_slice %8 {offsets = [32, 0], sizes = [16, 32], strides = [1, 1]} : vector<128x32xf32> to vector<16x32xf32>
    %119 = arith.addf %118, %111 : vector<16x32xf32>
    %120 = arith.negf %119 : vector<16x32xf32>
    %121 = math.exp %120 : vector<16x32xf32>
    %cst_59 = arith.constant 1.000000e+00 : f32
    %122 = vector.broadcast %cst_59 : f32 to vector<16x32xf32>
    %123 = arith.addf %122, %121 : vector<16x32xf32>
    %124 = arith.divf %122, %123 : vector<16x32xf32>
    %125 = vector.extract_strided_slice %15 {offsets = [32, 0], sizes = [16, 32], strides = [1, 1]} : vector<128x32xf32> to vector<16x32xf32>
    %126 = arith.addf %125, %114 : vector<16x32xf32>
    %127 = arith.negf %126 : vector<16x32xf32>
    %128 = math.exp %127 : vector<16x32xf32>
    %cst_60 = arith.constant 1.000000e+00 : f32
    %129 = vector.broadcast %cst_60 : f32 to vector<16x32xf32>
    %130 = arith.addf %129, %128 : vector<16x32xf32>
    %131 = arith.divf %129, %130 : vector<16x32xf32>
    %132 = vector.extract_strided_slice %22 {offsets = [32, 0], sizes = [16, 32], strides = [1, 1]} : vector<128x32xf32> to vector<16x32xf32>
    %133 = arith.mulf %124, %117 : vector<16x32xf32>
    %134 = arith.addf %132, %133 : vector<16x32xf32>
    %135 = math.tanh %134 : vector<16x32xf32>
    %cst_61 = arith.constant 1.000000e+00 : f32
    %136 = vector.broadcast %cst_61 : f32 to vector<16x32xf32>
    %137 = arith.subf %136, %131 : vector<16x32xf32>
    %138 = arith.mulf %137, %135 : vector<16x32xf32>
    %139 = arith.mulf %131, %104 : vector<16x32xf32>
    %140 = arith.addf %138, %139 : vector<16x32xf32>
    %c0_62 = arith.constant 0 : index
    %c32 = arith.constant 32 : index
    %c0_63 = arith.constant 0 : index
    %141 = vector.load %arg6[%c0_62, %c32, %c0_63] : memref<1x128x32xf32, #tpu.memory_space<vmem>>, vector<1x16x32xf32>
    %142 = vector.shape_cast %141 : vector<1x16x32xf32> to vector<16x32xf32>
    %143 = vector.shape_cast %140 : vector<16x32xf32> to vector<1x16x32xf32>
    tpu.vector_store %arg6[%c0_62, %c32, %c0_63], %143 {strides = array<i32>} : memref<1x128x32xf32, #tpu.memory_space<vmem>>, vector<1x16x32xf32>,
    %144 = arith.truncf %140 : vector<16x32xf32> to vector<16x32xbf16>
    %cst_64 = arith.constant dense<0.000000e+00> : vector<16x32xf32>
    %145 = tpu.matmul %144, %24, %cst_64 {dimension_numbers = #tpu.dot_dimension_numbers<[1], [0], [0], [1], [0, 0, 1, 1], [], []>} : vector<16x32xbf16>, vector<32x32xbf16>, vector<16x32xf32> -> vector<16x32xf32>
    %146 = vector.broadcast %30 : vector<1x32xf32> to vector<16x32xf32>
    %147 = arith.addf %145, %146 : vector<16x32xf32>
    %cst_65 = arith.constant dense<0.000000e+00> : vector<16x32xf32>
    %148 = tpu.matmul %144, %26, %cst_65 {dimension_numbers = #tpu.dot_dimension_numbers<[1], [0], [0], [1], [0, 0, 1, 1], [], []>} : vector<16x32xbf16>, vector<32x32xbf16>, vector<16x32xf32> -> vector<16x32xf32>
    %149 = vector.broadcast %32 : vector<1x32xf32> to vector<16x32xf32>
    %150 = arith.addf %148, %149 : vector<16x32xf32>
    %cst_66 = arith.constant dense<0.000000e+00> : vector<16x32xf32>
    %151 = tpu.matmul %144, %28, %cst_66 {dimension_numbers = #tpu.dot_dimension_numbers<[1], [0], [0], [1], [0, 0, 1, 1], [], []>} : vector<16x32xbf16>, vector<32x32xbf16>, vector<16x32xf32> -> vector<16x32xf32>
    %152 = vector.broadcast %34 : vector<1x32xf32> to vector<16x32xf32>
    %153 = arith.addf %151, %152 : vector<16x32xf32>
    %154 = vector.extract_strided_slice %8 {offsets = [48, 0], sizes = [16, 32], strides = [1, 1]} : vector<128x32xf32> to vector<16x32xf32>
    %155 = arith.addf %154, %147 : vector<16x32xf32>
    %156 = arith.negf %155 : vector<16x32xf32>
    %157 = math.exp %156 : vector<16x32xf32>
    %cst_67 = arith.constant 1.000000e+00 : f32
    %158 = vector.broadcast %cst_67 : f32 to vector<16x32xf32>
    %159 = arith.addf %158, %157 : vector<16x32xf32>
    %160 = arith.divf %158, %159 : vector<16x32xf32>
    %161 = vector.extract_strided_slice %15 {offsets = [48, 0], sizes = [16, 32], strides = [1, 1]} : vector<128x32xf32> to vector<16x32xf32>
    %162 = arith.addf %161, %150 : vector<16x32xf32>
    %163 = arith.negf %162 : vector<16x32xf32>
    %164 = math.exp %163 : vector<16x32xf32>
    %cst_68 = arith.constant 1.000000e+00 : f32
    %165 = vector.broadcast %cst_68 : f32 to vector<16x32xf32>
    %166 = arith.addf %165, %164 : vector<16x32xf32>
    %167 = arith.divf %165, %166 : vector<16x32xf32>
    %168 = vector.extract_strided_slice %22 {offsets = [48, 0], sizes = [16, 32], strides = [1, 1]} : vector<128x32xf32> to vector<16x32xf32>
    %169 = arith.mulf %160, %153 : vector<16x32xf32>
    %170 = arith.addf %168, %169 : vector<16x32xf32>
    %171 = math.tanh %170 : vector<16x32xf32>
    %cst_69 = arith.constant 1.000000e+00 : f32
    %172 = vector.broadcast %cst_69 : f32 to vector<16x32xf32>
    %173 = arith.subf %172, %167 : vector<16x32xf32>
    %174 = arith.mulf %173, %171 : vector<16x32xf32>
    %175 = arith.mulf %167, %140 : vector<16x32xf32>
    %176 = arith.addf %174, %175 : vector<16x32xf32>
    %c0_70 = arith.constant 0 : index
    %c48 = arith.constant 48 : index
    %c0_71 = arith.constant 0 : index
    %177 = vector.load %arg6[%c0_70, %c48, %c0_71] : memref<1x128x32xf32, #tpu.memory_space<vmem>>, vector<1x16x32xf32>
    %178 = vector.shape_cast %177 : vector<1x16x32xf32> to vector<16x32xf32>
    %179 = vector.shape_cast %176 : vector<16x32xf32> to vector<1x16x32xf32>
    tpu.vector_store %arg6[%c0_70, %c48, %c0_71], %179 {strides = array<i32>} : memref<1x128x32xf32, #tpu.memory_space<vmem>>, vector<1x16x32xf32>,
    %180 = arith.truncf %176 : vector<16x32xf32> to vector<16x32xbf16>
    %cst_72 = arith.constant dense<0.000000e+00> : vector<16x32xf32>
    %181 = tpu.matmul %180, %24, %cst_72 {dimension_numbers = #tpu.dot_dimension_numbers<[1], [0], [0], [1], [0, 0, 1, 1], [], []>} : vector<16x32xbf16>, vector<32x32xbf16>, vector<16x32xf32> -> vector<16x32xf32>
    %182 = vector.broadcast %30 : vector<1x32xf32> to vector<16x32xf32>
    %183 = arith.addf %181, %182 : vector<16x32xf32>
    %cst_73 = arith.constant dense<0.000000e+00> : vector<16x32xf32>
    %184 = tpu.matmul %180, %26, %cst_73 {dimension_numbers = #tpu.dot_dimension_numbers<[1], [0], [0], [1], [0, 0, 1, 1], [], []>} : vector<16x32xbf16>, vector<32x32xbf16>, vector<16x32xf32> -> vector<16x32xf32>
    %185 = vector.broadcast %32 : vector<1x32xf32> to vector<16x32xf32>
    %186 = arith.addf %184, %185 : vector<16x32xf32>
    %cst_74 = arith.constant dense<0.000000e+00> : vector<16x32xf32>
    %187 = tpu.matmul %180, %28, %cst_74 {dimension_numbers = #tpu.dot_dimension_numbers<[1], [0], [0], [1], [0, 0, 1, 1], [], []>} : vector<16x32xbf16>, vector<32x32xbf16>, vector<16x32xf32> -> vector<16x32xf32>
    %188 = vector.broadcast %34 : vector<1x32xf32> to vector<16x32xf32>
    %189 = arith.addf %187, %188 : vector<16x32xf32>
    %190 = vector.extract_strided_slice %8 {offsets = [64, 0], sizes = [16, 32], strides = [1, 1]} : vector<128x32xf32> to vector<16x32xf32>
    %191 = arith.addf %190, %183 : vector<16x32xf32>
    %192 = arith.negf %191 : vector<16x32xf32>
    %193 = math.exp %192 : vector<16x32xf32>
    %cst_75 = arith.constant 1.000000e+00 : f32
    %194 = vector.broadcast %cst_75 : f32 to vector<16x32xf32>
    %195 = arith.addf %194, %193 : vector<16x32xf32>
    %196 = arith.divf %194, %195 : vector<16x32xf32>
    %197 = vector.extract_strided_slice %15 {offsets = [64, 0], sizes = [16, 32], strides = [1, 1]} : vector<128x32xf32> to vector<16x32xf32>
    %198 = arith.addf %197, %186 : vector<16x32xf32>
    %199 = arith.negf %198 : vector<16x32xf32>
    %200 = math.exp %199 : vector<16x32xf32>
    %cst_76 = arith.constant 1.000000e+00 : f32
    %201 = vector.broadcast %cst_76 : f32 to vector<16x32xf32>
    %202 = arith.addf %201, %200 : vector<16x32xf32>
    %203 = arith.divf %201, %202 : vector<16x32xf32>
    %204 = vector.extract_strided_slice %22 {offsets = [64, 0], sizes = [16, 32], strides = [1, 1]} : vector<128x32xf32> to vector<16x32xf32>
    %205 = arith.mulf %196, %189 : vector<16x32xf32>
    %206 = arith.addf %204, %205 : vector<16x32xf32>
    %207 = math.tanh %206 : vector<16x32xf32>
    %cst_77 = arith.constant 1.000000e+00 : f32
    %208 = vector.broadcast %cst_77 : f32 to vector<16x32xf32>
    %209 = arith.subf %208, %203 : vector<16x32xf32>
    %210 = arith.mulf %209, %207 : vector<16x32xf32>
    %211 = arith.mulf %203, %176 : vector<16x32xf32>
    %212 = arith.addf %210, %211 : vector<16x32xf32>
    %c0_78 = arith.constant 0 : index
    %c64 = arith.constant 64 : index
    %c0_79 = arith.constant 0 : index
    %213 = vector.load %arg6[%c0_78, %c64, %c0_79] : memref<1x128x32xf32, #tpu.memory_space<vmem>>, vector<1x16x32xf32>
    %214 = vector.shape_cast %213 : vector<1x16x32xf32> to vector<16x32xf32>
    %215 = vector.shape_cast %212 : vector<16x32xf32> to vector<1x16x32xf32>
    tpu.vector_store %arg6[%c0_78, %c64, %c0_79], %215 {strides = array<i32>} : memref<1x128x32xf32, #tpu.memory_space<vmem>>, vector<1x16x32xf32>,
    %216 = arith.truncf %212 : vector<16x32xf32> to vector<16x32xbf16>
    %cst_80 = arith.constant dense<0.000000e+00> : vector<16x32xf32>
    %217 = tpu.matmul %216, %24, %cst_80 {dimension_numbers = #tpu.dot_dimension_numbers<[1], [0], [0], [1], [0, 0, 1, 1], [], []>} : vector<16x32xbf16>, vector<32x32xbf16>, vector<16x32xf32> -> vector<16x32xf32>
    %218 = vector.broadcast %30 : vector<1x32xf32> to vector<16x32xf32>
    %219 = arith.addf %217, %218 : vector<16x32xf32>
    %cst_81 = arith.constant dense<0.000000e+00> : vector<16x32xf32>
    %220 = tpu.matmul %216, %26, %cst_81 {dimension_numbers = #tpu.dot_dimension_numbers<[1], [0], [0], [1], [0, 0, 1, 1], [], []>} : vector<16x32xbf16>, vector<32x32xbf16>, vector<16x32xf32> -> vector<16x32xf32>
    %221 = vector.broadcast %32 : vector<1x32xf32> to vector<16x32xf32>
    %222 = arith.addf %220, %221 : vector<16x32xf32>
    %cst_82 = arith.constant dense<0.000000e+00> : vector<16x32xf32>
    %223 = tpu.matmul %216, %28, %cst_82 {dimension_numbers = #tpu.dot_dimension_numbers<[1], [0], [0], [1], [0, 0, 1, 1], [], []>} : vector<16x32xbf16>, vector<32x32xbf16>, vector<16x32xf32> -> vector<16x32xf32>
    %224 = vector.broadcast %34 : vector<1x32xf32> to vector<16x32xf32>
    %225 = arith.addf %223, %224 : vector<16x32xf32>
    %226 = vector.extract_strided_slice %8 {offsets = [80, 0], sizes = [16, 32], strides = [1, 1]} : vector<128x32xf32> to vector<16x32xf32>
    %227 = arith.addf %226, %219 : vector<16x32xf32>
    %228 = arith.negf %227 : vector<16x32xf32>
    %229 = math.exp %228 : vector<16x32xf32>
    %cst_83 = arith.constant 1.000000e+00 : f32
    %230 = vector.broadcast %cst_83 : f32 to vector<16x32xf32>
    %231 = arith.addf %230, %229 : vector<16x32xf32>
    %232 = arith.divf %230, %231 : vector<16x32xf32>
    %233 = vector.extract_strided_slice %15 {offsets = [80, 0], sizes = [16, 32], strides = [1, 1]} : vector<128x32xf32> to vector<16x32xf32>
    %234 = arith.addf %233, %222 : vector<16x32xf32>
    %235 = arith.negf %234 : vector<16x32xf32>
    %236 = math.exp %235 : vector<16x32xf32>
    %cst_84 = arith.constant 1.000000e+00 : f32
    %237 = vector.broadcast %cst_84 : f32 to vector<16x32xf32>
    %238 = arith.addf %237, %236 : vector<16x32xf32>
    %239 = arith.divf %237, %238 : vector<16x32xf32>
    %240 = vector.extract_strided_slice %22 {offsets = [80, 0], sizes = [16, 32], strides = [1, 1]} : vector<128x32xf32> to vector<16x32xf32>
    %241 = arith.mulf %232, %225 : vector<16x32xf32>
    %242 = arith.addf %240, %241 : vector<16x32xf32>
    %243 = math.tanh %242 : vector<16x32xf32>
    %cst_85 = arith.constant 1.000000e+00 : f32
    %244 = vector.broadcast %cst_85 : f32 to vector<16x32xf32>
    %245 = arith.subf %244, %239 : vector<16x32xf32>
    %246 = arith.mulf %245, %243 : vector<16x32xf32>
    %247 = arith.mulf %239, %212 : vector<16x32xf32>
    %248 = arith.addf %246, %247 : vector<16x32xf32>
    %c0_86 = arith.constant 0 : index
    %c80 = arith.constant 80 : index
    %c0_87 = arith.constant 0 : index
    %249 = vector.load %arg6[%c0_86, %c80, %c0_87] : memref<1x128x32xf32, #tpu.memory_space<vmem>>, vector<1x16x32xf32>
    %250 = vector.shape_cast %249 : vector<1x16x32xf32> to vector<16x32xf32>
    %251 = vector.shape_cast %248 : vector<16x32xf32> to vector<1x16x32xf32>
    tpu.vector_store %arg6[%c0_86, %c80, %c0_87], %251 {strides = array<i32>} : memref<1x128x32xf32, #tpu.memory_space<vmem>>, vector<1x16x32xf32>,
    %252 = arith.truncf %248 : vector<16x32xf32> to vector<16x32xbf16>
    %cst_88 = arith.constant dense<0.000000e+00> : vector<16x32xf32>
    %253 = tpu.matmul %252, %24, %cst_88 {dimension_numbers = #tpu.dot_dimension_numbers<[1], [0], [0], [1], [0, 0, 1, 1], [], []>} : vector<16x32xbf16>, vector<32x32xbf16>, vector<16x32xf32> -> vector<16x32xf32>
    %254 = vector.broadcast %30 : vector<1x32xf32> to vector<16x32xf32>
    %255 = arith.addf %253, %254 : vector<16x32xf32>
    %cst_89 = arith.constant dense<0.000000e+00> : vector<16x32xf32>
    %256 = tpu.matmul %252, %26, %cst_89 {dimension_numbers = #tpu.dot_dimension_numbers<[1], [0], [0], [1], [0, 0, 1, 1], [], []>} : vector<16x32xbf16>, vector<32x32xbf16>, vector<16x32xf32> -> vector<16x32xf32>
    %257 = vector.broadcast %32 : vector<1x32xf32> to vector<16x32xf32>
    %258 = arith.addf %256, %257 : vector<16x32xf32>
    %cst_90 = arith.constant dense<0.000000e+00> : vector<16x32xf32>
    %259 = tpu.matmul %252, %28, %cst_90 {dimension_numbers = #tpu.dot_dimension_numbers<[1], [0], [0], [1], [0, 0, 1, 1], [], []>} : vector<16x32xbf16>, vector<32x32xbf16>, vector<16x32xf32> -> vector<16x32xf32>
    %260 = vector.broadcast %34 : vector<1x32xf32> to vector<16x32xf32>
    %261 = arith.addf %259, %260 : vector<16x32xf32>
    %262 = vector.extract_strided_slice %8 {offsets = [96, 0], sizes = [16, 32], strides = [1, 1]} : vector<128x32xf32> to vector<16x32xf32>
    %263 = arith.addf %262, %255 : vector<16x32xf32>
    %264 = arith.negf %263 : vector<16x32xf32>
    %265 = math.exp %264 : vector<16x32xf32>
    %cst_91 = arith.constant 1.000000e+00 : f32
    %266 = vector.broadcast %cst_91 : f32 to vector<16x32xf32>
    %267 = arith.addf %266, %265 : vector<16x32xf32>
    %268 = arith.divf %266, %267 : vector<16x32xf32>
    %269 = vector.extract_strided_slice %15 {offsets = [96, 0], sizes = [16, 32], strides = [1, 1]} : vector<128x32xf32> to vector<16x32xf32>
    %270 = arith.addf %269, %258 : vector<16x32xf32>
    %271 = arith.negf %270 : vector<16x32xf32>
    %272 = math.exp %271 : vector<16x32xf32>
    %cst_92 = arith.constant 1.000000e+00 : f32
    %273 = vector.broadcast %cst_92 : f32 to vector<16x32xf32>
    %274 = arith.addf %273, %272 : vector<16x32xf32>
    %275 = arith.divf %273, %274 : vector<16x32xf32>
    %276 = vector.extract_strided_slice %22 {offsets = [96, 0], sizes = [16, 32], strides = [1, 1]} : vector<128x32xf32> to vector<16x32xf32>
    %277 = arith.mulf %268, %261 : vector<16x32xf32>
    %278 = arith.addf %276, %277 : vector<16x32xf32>
    %279 = math.tanh %278 : vector<16x32xf32>
    %cst_93 = arith.constant 1.000000e+00 : f32
    %280 = vector.broadcast %cst_93 : f32 to vector<16x32xf32>
    %281 = arith.subf %280, %275 : vector<16x32xf32>
    %282 = arith.mulf %281, %279 : vector<16x32xf32>
    %283 = arith.mulf %275, %248 : vector<16x32xf32>
    %284 = arith.addf %282, %283 : vector<16x32xf32>
    %c0_94 = arith.constant 0 : index
    %c96 = arith.constant 96 : index
    %c0_95 = arith.constant 0 : index
    %285 = vector.load %arg6[%c0_94, %c96, %c0_95] : memref<1x128x32xf32, #tpu.memory_space<vmem>>, vector<1x16x32xf32>
    %286 = vector.shape_cast %285 : vector<1x16x32xf32> to vector<16x32xf32>
    %287 = vector.shape_cast %284 : vector<16x32xf32> to vector<1x16x32xf32>
    tpu.vector_store %arg6[%c0_94, %c96, %c0_95], %287 {strides = array<i32>} : memref<1x128x32xf32, #tpu.memory_space<vmem>>, vector<1x16x32xf32>,
    %288 = arith.truncf %284 : vector<16x32xf32> to vector<16x32xbf16>
    %cst_96 = arith.constant dense<0.000000e+00> : vector<16x32xf32>
    %289 = tpu.matmul %288, %24, %cst_96 {dimension_numbers = #tpu.dot_dimension_numbers<[1], [0], [0], [1], [0, 0, 1, 1], [], []>} : vector<16x32xbf16>, vector<32x32xbf16>, vector<16x32xf32> -> vector<16x32xf32>
    %290 = vector.broadcast %30 : vector<1x32xf32> to vector<16x32xf32>
    %291 = arith.addf %289, %290 : vector<16x32xf32>
    %cst_97 = arith.constant dense<0.000000e+00> : vector<16x32xf32>
    %292 = tpu.matmul %288, %26, %cst_97 {dimension_numbers = #tpu.dot_dimension_numbers<[1], [0], [0], [1], [0, 0, 1, 1], [], []>} : vector<16x32xbf16>, vector<32x32xbf16>, vector<16x32xf32> -> vector<16x32xf32>
    %293 = vector.broadcast %32 : vector<1x32xf32> to vector<16x32xf32>
    %294 = arith.addf %292, %293 : vector<16x32xf32>
    %cst_98 = arith.constant dense<0.000000e+00> : vector<16x32xf32>
    %295 = tpu.matmul %288, %28, %cst_98 {dimension_numbers = #tpu.dot_dimension_numbers<[1], [0], [0], [1], [0, 0, 1, 1], [], []>} : vector<16x32xbf16>, vector<32x32xbf16>, vector<16x32xf32> -> vector<16x32xf32>
    %296 = vector.broadcast %34 : vector<1x32xf32> to vector<16x32xf32>
    %297 = arith.addf %295, %296 : vector<16x32xf32>
    %298 = vector.extract_strided_slice %8 {offsets = [112, 0], sizes = [16, 32], strides = [1, 1]} : vector<128x32xf32> to vector<16x32xf32>
    %299 = arith.addf %298, %291 : vector<16x32xf32>
    %300 = arith.negf %299 : vector<16x32xf32>
    %301 = math.exp %300 : vector<16x32xf32>
    %cst_99 = arith.constant 1.000000e+00 : f32
    %302 = vector.broadcast %cst_99 : f32 to vector<16x32xf32>
    %303 = arith.addf %302, %301 : vector<16x32xf32>
    %304 = arith.divf %302, %303 : vector<16x32xf32>
    %305 = vector.extract_strided_slice %15 {offsets = [112, 0], sizes = [16, 32], strides = [1, 1]} : vector<128x32xf32> to vector<16x32xf32>
    %306 = arith.addf %305, %294 : vector<16x32xf32>
    %307 = arith.negf %306 : vector<16x32xf32>
    %308 = math.exp %307 : vector<16x32xf32>
    %cst_100 = arith.constant 1.000000e+00 : f32
    %309 = vector.broadcast %cst_100 : f32 to vector<16x32xf32>
    %310 = arith.addf %309, %308 : vector<16x32xf32>
    %311 = arith.divf %309, %310 : vector<16x32xf32>
    %312 = vector.extract_strided_slice %22 {offsets = [112, 0], sizes = [16, 32], strides = [1, 1]} : vector<128x32xf32> to vector<16x32xf32>
    %313 = arith.mulf %304, %297 : vector<16x32xf32>
    %314 = arith.addf %312, %313 : vector<16x32xf32>
    %315 = math.tanh %314 : vector<16x32xf32>
    %cst_101 = arith.constant 1.000000e+00 : f32
    %316 = vector.broadcast %cst_101 : f32 to vector<16x32xf32>
    %317 = arith.subf %316, %311 : vector<16x32xf32>
    %318 = arith.mulf %317, %315 : vector<16x32xf32>
    %319 = arith.mulf %311, %284 : vector<16x32xf32>
    %320 = arith.addf %318, %319 : vector<16x32xf32>
    %c0_102 = arith.constant 0 : index
    %c112 = arith.constant 112 : index
    %c0_103 = arith.constant 0 : index
    %321 = vector.load %arg6[%c0_102, %c112, %c0_103] : memref<1x128x32xf32, #tpu.memory_space<vmem>>, vector<1x16x32xf32>
    %322 = vector.shape_cast %321 : vector<1x16x32xf32> to vector<16x32xf32>
    %323 = vector.shape_cast %320 : vector<16x32xf32> to vector<1x16x32xf32>
    tpu.vector_store %arg6[%c0_102, %c112, %c0_103], %323 {strides = array<i32>} : memref<1x128x32xf32, #tpu.memory_space<vmem>>, vector<1x16x32xf32>,
    return
  }
  func.func @transform_0(%arg0: i32) -> (i32, i32, i32) {
    %c0_i32 = arith.constant 0 : i32
    %c0_i32_0 = arith.constant 0 : i32
    %c0_i32_1 = arith.constant 0 : i32
    return %arg0, %c0_i32, %c0_i32_0 : i32, i32, i32
  }
  func.func @transform_1(%arg0: i32) -> (i32, i32, i32) {
    %c0_i32 = arith.constant 0 : i32
    %c0_i32_0 = arith.constant 0 : i32
    %c0_i32_1 = arith.constant 0 : i32
    %c0_i32_2 = arith.constant 0 : i32
    return %c0_i32, %c0_i32_0, %c0_i32_1 : i32, i32, i32
  }
  func.func @transform_2(%arg0: i32) -> (i32, i32, i32) {
    %c0_i32 = arith.constant 0 : i32
    %c0_i32_0 = arith.constant 0 : i32
    %c0_i32_1 = arith.constant 0 : i32
    %c0_i32_2 = arith.constant 0 : i32
    return %c0_i32, %c0_i32_0, %c0_i32_1 : i32, i32, i32
  }
  func.func @transform_3(%arg0: i32) -> (i32, i32, i32) {
    %c0_i32 = arith.constant 0 : i32
    %c0_i32_0 = arith.constant 0 : i32
    %c0_i32_1 = arith.constant 0 : i32
    %c0_i32_2 = arith.constant 0 : i32
    return %c0_i32, %c0_i32_0, %c0_i32_1 : i32, i32, i32
  }
  func.func @transform_4(%arg0: i32) -> (i32, i32, i32) {
    %c0_i32 = arith.constant 0 : i32
    %c0_i32_0 = arith.constant 0 : i32
    %c0_i32_1 = arith.constant 0 : i32
    %c0_i32_2 = arith.constant 0 : i32
    return %c0_i32, %c0_i32_0, %c0_i32_1 : i32, i32, i32
  }
  func.func @transform_5(%arg0: i32) -> (i32, i32, i32) {
    %c0_i32 = arith.constant 0 : i32
    %c0_i32_0 = arith.constant 0 : i32
    %c0_i32_1 = arith.constant 0 : i32
    return %arg0, %c0_i32, %c0_i32_0 : i32, i32, i32
  }
}

</mosaic_0001>

<llo_original>
// kernel: bhst_predictor_forward.2
$region0: #{bhst_predictor_forward.2}
  #allocation0 [shape = 'u32[]', space=smem, size = 0x4, offset = 0x4, fixed_abs, tag = 'smem constant byte address 0x4 - core index']
  #allocation1 [shape = 'u32[144,128]{1,0:T(1,128)}', space=vmem, size = 0x12000, scoped, tag = 'internal scratch']
  %s0 = inlined_call_operand.vmem [shape: bf16[2,8,256], index: 0, kind: input, shape index: {}]
  %s1 = inlined_call_operand.vmem [shape: bf16[256,512], index: 1, kind: input, shape index: {}]
  %s2 = inlined_call_operand.vmem [shape: f32[1,512], index: 2, kind: input, shape index: {}]
  %s3 = inlined_call_operand.vmem [shape: bf16[2,8,512], index: 3, kind: output, shape index: {}]
  %s4 = sld [smem:[#allocation0]]
  $region45: #{bhst_predictor_forward.2} parent=0
    _
  %s6 = ssub.s32 1, %s4
  %s7 = scalar_select 0, %s6, %s4
  loop: start=0, step=1, limit=4
  $region2: #{bhst_predictor_forward.2} parent=0 // loop_pre_header
    _
  $region3: #{bhst_predictor_forward.2} parent=0 // loop_header
    %s9 = sphi 0, %s13
    %p10 = scmp.ge.s32.totalorder %s9, 4
    %s19 = sphi 0, %s21
    %s22 = sphi 0, %s19
    %s23 = sphi 0, %s22
    %s39 = sphi 0, %s23
    %s43 = sphi 0, %s43
    %s45 = sphi 0, %s43
    %s46 = sphi 0, %s45
    %s60 = sphi 0, %s46
    %s64 = sphi 0, %s64
    %s66 = sphi 0, %s64
    %s67 = sphi 0, %s66
    %s81 = sphi 0, %s67
    %s87 = sphi 0, %s89
    %s90 = sphi 0, %s87
    %s91 = sphi 0, %s90
    %s107 = sphi 0, %s91
  $region4: #{bhst_predictor_forward.2} parent=0 // loop_header_branch
    %12 = sbr.rel (%p10) target = $region8
  $region5: #{bhst_predictor_forward.2} parent=0 // loop_body
    %s14 = ssub.s32 %s9, 1
    %s15 = ssub.s32 %s9, 2
    %s16 = sadd.s32 %s9, 1
    %s17 = ssub.s32 %s9, %s16
    %p18 = scmp.eq.s32.totalorder %s17, 0
    %s20 = sadd.s32 %s19, 1
    %s21 = scalar_select %p18, %s19, %s20
    %p24 = pneg %p18
    %p25 = scmp.eq.s32.totalorder %s9, 1
    %p26 = por %p24, %p25
    %p27 = scmp.ne.s32.totalorder %s19, %s22
    %p28 = scmp.eq.s32.totalorder %s9, 0
    %p29 = por %p27, %p28
    %p30 = scmp.ne.s32.totalorder %s19, %s22
    %p31 = scmp.eq.s32.totalorder %s14, 1
    %p32 = por %p30, %p31
    %p33 = scmp.ne.s32.totalorder %s22, %s23
    %p34 = scmp.eq.s32.totalorder %s14, 0
    %p35 = por %p33, %p34
    %p36 = scmp.ne.s32.totalorder %s22, %s23
    %p37 = scmp.eq.s32.totalorder %s15, 1
    %p38 = por %p36, %p37
    %p40 = scmp.ne.s32.totalorder %s23, %s39
    %p41 = scmp.eq.s32.totalorder %s15, 0
    %p42 = por %p40, %p41
    %s44 = sadd.s32 %s43, 1
    %p47 = scmp.eq.s32.totalorder %s9, 1
    %p48 = scmp.ne.s32.totalorder %s43, %s45
    %p49 = scmp.eq.s32.totalorder %s9, 0
    %p50 = por %p48, %p49
    %p51 = scmp.ne.s32.totalorder %s43, %s45
    %p52 = scmp.eq.s32.totalorder %s14, 1
    %p53 = por %p51, %p52
    %p54 = scmp.ne.s32.totalorder %s45, %s46
    %p55 = scmp.eq.s32.totalorder %s14, 0
    %p56 = por %p54, %p55
    %p57 = scmp.ne.s32.totalorder %s45, %s46
    %p58 = scmp.eq.s32.totalorder %s15, 1
    %p59 = por %p57, %p58
    %p61 = scmp.ne.s32.totalorder %s46, %s60
    %p62 = scmp.eq.s32.totalorder %s15, 0
    %p63 = por %p61, %p62
    %s65 = sadd.s32 %s64, 1
    %p68 = scmp.eq.s32.totalorder %s9, 1
    %p69 = scmp.ne.s32.totalorder %s64, %s66
    %p70 = scmp.eq.s32.totalorder %s9, 0
    %p71 = por %p69, %p70
    %p72 = scmp.ne.s32.totalorder %s64, %s66
    %p73 = scmp.eq.s32.totalorder %s14, 1
    %p74 = por %p72, %p73
    %p75 = scmp.ne.s32.totalorder %s66, %s67
    %p76 = scmp.eq.s32.totalorder %s14, 0
    %p77 = por %p75, %p76
    %p78 = scmp.ne.s32.totalorder %s66, %s67
    %p79 = scmp.eq.s32.totalorder %s15, 1
    %p80 = por %p78, %p79
    %p82 = scmp.ne.s32.totalorder %s67, %s81
    %p83 = scmp.eq.s32.totalorder %s15, 0
    %p84 = por %p82, %p83
    %s85 = ssub.s32 %s9, %s16
    %p86 = scmp.eq.s32.totalorder %s85, 0
    %s88 = sadd.s32 %s87, 1
    %s89 = scalar_select %p86, %s87, %s88
    %p92 = pneg %p86
    %p93 = scmp.eq.s32.totalorder %s9, 1
    %p94 = por %p92, %p93
    %p95 = scmp.ne.s32.totalorder %s87, %s90
    %p96 = scmp.eq.s32.totalorder %s9, 0
    %p97 = por %p95, %p96
    %p98 = scmp.ne.s32.totalorder %s87, %s90
    %p99 = scmp.eq.s32.totalorder %s14, 1
    %p100 = por %p98, %p99
    %p101 = scmp.ne.s32.totalorder %s90, %s91
    %p102 = scmp.eq.s32.totalorder %s14, 0
    %p103 = por %p101, %p102
    %p104 = scmp.ne.s32.totalorder %s90, %s91
    %p105 = scmp.eq.s32.totalorder %s15, 1
    %p106 = por %p104, %p105
    %p108 = scmp.ne.s32.totalorder %s91, %s107
    %p109 = scmp.eq.s32.totalorder %s15, 0
    %p110 = por %p108, %p109
    %p111 = scmp.le.s32.totalorder 1, %s9
    %p112 = scmp.lt.s32.totalorder %s9, 3
    %p113 = pnand %p111, %p112
    %p114 = pneg %p113
    // Predicated region
    $region9: #{bhst_predictor_forward.2} parent=5 // pred_check
      _
    $region10: #{bhst_predictor_forward.2} parent=5 // pred_check_branch
      %116 = sbr.rel (%p113) target = $region12
    $region11: #{bhst_predictor_forward.2} parent=5 // pred_region
      %s117 = ssub.s32 %s9, 1
      // Predicated region
      $region13: #{bhst_predictor_forward.2} parent=11 // pred_check
        %p118 = pneg %p56
      $region14: #{bhst_predictor_forward.2} parent=11 // pred_check_branch
        %120 = sbr.rel (%p118) target = $region16
      $region15: #{bhst_predictor_forward.2} parent=11 // pred_region
        _
      $region16: #{bhst_predictor_forward.2} parent=11 // pred_fallthru
        _
      // Predicated region
      $region17: #{bhst_predictor_forward.2} parent=11 // pred_check
        %p121 = pneg %p77
      $region18: #{bhst_predictor_forward.2} parent=11 // pred_check_branch
        %123 = sbr.rel (%p121) target = $region20
      $region19: #{bhst_predictor_forward.2} parent=11 // pred_region
        _
      $region20: #{bhst_predictor_forward.2} parent=11 // pred_fallthru
        _
    $region12: #{bhst_predictor_forward.2} parent=5 // pred_fallthru
      _
    %p124 = scmp.lt.s32.totalorder %s9, 2
    // Predicated region
    $region21: #{bhst_predictor_forward.2} parent=5 // pred_check
      %p125 = pneg %p124
    $region22: #{bhst_predictor_forward.2} parent=5 // pred_check_branch
      %127 = sbr.rel (%p125) target = $region24
    $region23: #{bhst_predictor_forward.2} parent=5 // pred_region
      // Predicated region
      $region25: #{bhst_predictor_forward.2} parent=23 // pred_check
        %p128 = pneg %p29
      $region26: #{bhst_predictor_forward.2} parent=23 // pred_check_branch
        %130 = sbr.rel (%p128) target = $region28
      $region27: #{bhst_predictor_forward.2} parent=23 // pred_region
        %p131 = scmp.lt.s32.totalorder %s9, 1
        %s132 = scalar_select %p131, %s9, 1
        %s133 = smul.addr %s132, 2
        %s134 = smul.addr %s133, 4
        %s135 = scalar_lea.vmem %s0, %s134
      $region28: #{bhst_predictor_forward.2} parent=23 // pred_fallthru
        _
    $region24: #{bhst_predictor_forward.2} parent=5 // pred_fallthru
      _
    %p136 = scmp.le.s32.totalorder 1, %s9
    %p137 = scmp.lt.s32.totalorder %s9, 3
    %p138 = pnand %p136, %p137
    %p139 = pneg %p138
    // Predicated region
    $region29: #{bhst_predictor_forward.2} parent=5 // pred_check
      _
    $region30: #{bhst_predictor_forward.2} parent=5 // pred_check_branch
      %141 = sbr.rel (%p138) target = $region32
    $region31: #{bhst_predictor_forward.2} parent=5 // pred_region
      %s142 = ssub.s32 %s9, 1
      %p143 = scmp.lt.s32.totalorder %s14, 1
      %s144 = scalar_select %p143, %s14, 1
      %s145 = smul.addr %s144, 2
      %s146 = smul.addr %s145, 4
      %s147 = scalar_lea.vmem %s0, %s146
      %p148 = pneg %p35
      %p149 = pneg %p32
      %p150 = pneg %p56
      %p151 = pneg %p53
      %p152 = pneg %p77
      %p153 = pneg %p74
      %p154 = pneg %p103
      %p155 = pneg %p100
      %p156 = scmp.lt.s32.totalorder %s14, 1
      %s157 = scalar_select %p156, %s14, 1
      %s158 = smul.addr %s157, 4
      %s159 = smul.addr %s158, 4
      %s160 = scalar_lea.vmem %s3, %s159
      %p161 = scmp.lt.s32.totalorder %s14, 1
      %s162 = scalar_select %p161, %s14, 1
      %s163 = smul.addr %s162, 2
      %s164 = smul.addr %s163, 4
      %s165 = scalar_lea.vmem %s0, %s164
      %p166 = scmp.lt.s32.totalorder %s14, 1
      %s167 = scalar_select %p166, %s14, 1
      %s168 = smul.addr %s167, 4
      %s169 = smul.addr %s168, 4
      %s170 = scalar_lea.vmem %s3, %s169
      %v171 = vld [vmem:[%s165] sm:$0xff]
      %v172 = vld [vmem:[%s1] sm:$0xff]
      %v173 = vld [vmem:[%s1 + $0x8] sm:$0xff]
      %v174 = vld [vmem:[%s1 + $0x10] sm:$0xff]
      %v175 = vld [vmem:[%s1 + $0x18] sm:$0xff]
      %v176 = vld [vmem:[%s1 + $0x20] sm:$0xff]
      %v177 = vld [vmem:[%s1 + $0x28] sm:$0xff]
      %v178 = vld [vmem:[%s1 + $0x30] sm:$0xff]
      %v179 = vld [vmem:[%s1 + $0x38] sm:$0xff]
      %v180 = vld [vmem:[%s1 + $0x40] sm:$0xff]
      %v181 = vld [vmem:[%s1 + $0x48] sm:$0xff]
      %v182 = vld [vmem:[%s1 + $0x50] sm:$0xff]
      %v183 = vld [vmem:[%s1 + $0x58] sm:$0xff]
      %v184 = vld [vmem:[%s1 + $0x60] sm:$0xff]
      %v185 = vld [vmem:[%s1 + $0x68] sm:$0xff]
      %v186 = vld [vmem:[%s1 + $0x70] sm:$0xff]
      %v187 = vld [vmem:[%s1 + $0x78] sm:$0xff]
      %v188 = vld [vmem:[%s1 + $0x80] sm:$0xff]
      %v189 = vld [vmem:[%s1 + $0x88] sm:$0xff]
      %v190 = vld [vmem:[%s1 + $0x90] sm:$0xff]
      %v191 = vld [vmem:[%s1 + $0x98] sm:$0xff]
      %v192 = vld [vmem:[%s1 + $0xa0] sm:$0xff]
      %v193 = vld [vmem:[%s1 + $0xa8] sm:$0xff]
      %v194 = vld [vmem:[%s1 + $0xb0] sm:$0xff]
      %v195 = vld [vmem:[%s1 + $0xb8] sm:$0xff]
      %v196 = vld [vmem:[%s1 + $0xc0] sm:$0xff]
      %v197 = vld [vmem:[%s1 + $0xc8] sm:$0xff]
      %v198 = vld [vmem:[%s1 + $0xd0] sm:$0xff]
      %v199 = vld [vmem:[%s1 + $0xd8] sm:$0xff]
      %v200 = vld [vmem:[%s1 + $0xe0] sm:$0xff]
      %v201 = vld [vmem:[%s1 + $0xe8] sm:$0xff]
      %v202 = vld [vmem:[%s1 + $0xf0] sm:$0xff]
      %v203 = vld [vmem:[%s1 + $0xf8] sm:$0xff]
      %v204 = vld [vmem:[%s1 + $0x100] sm:$0xff]
      %v205 = vld [vmem:[%s1 + $0x108] sm:$0xff]
      %v206 = vld [vmem:[%s1 + $0x110] sm:$0xff]
      %v207 = vld [vmem:[%s1 + $0x118] sm:$0xff]
      %v208 = vld [vmem:[%s1 + $0x120] sm:$0xff]
      %v209 = vld [vmem:[%s1 + $0x128] sm:$0xff]
      %v210 = vld [vmem:[%s1 + $0x130] sm:$0xff]
      %v211 = vld [vmem:[%s1 + $0x138] sm:$0xff]
      %v212 = vld [vmem:[%s1 + $0x140] sm:$0xff]
      %v213 = vld [vmem:[%s1 + $0x148] sm:$0xff]
      %v214 = vld [vmem:[%s1 + $0x150] sm:$0xff]
      %v215 = vld [vmem:[%s1 + $0x158] sm:$0xff]
      %v216 = vld [vmem:[%s1 + $0x160] sm:$0xff]
      %v217 = vld [vmem:[%s1 + $0x168] sm:$0xff]
      %v218 = vld [vmem:[%s1 + $0x170] sm:$0xff]
      %v219 = vld [vmem:[%s1 + $0x178] sm:$0xff]
      %v220 = vld [vmem:[%s1 + $0x180] sm:$0xff]
      %v221 = vld [vmem:[%s1 + $0x188] sm:$0xff]
      %v222 = vld [vmem:[%s1 + $0x190] sm:$0xff]
      %v223 = vld [vmem:[%s1 + $0x198] sm:$0xff]
      %v224 = vld [vmem:[%s1 + $0x1a0] sm:$0xff]
      %v225 = vld [vmem:[%s1 + $0x1a8] sm:$0xff]
      %v226 = vld [vmem:[%s1 + $0x1b0] sm:$0xff]
      %v227 = vld [vmem:[%s1 + $0x1b8] sm:$0xff]
      %v228 = vld [vmem:[%s1 + $0x1c0] sm:$0xff]
      %v229 = vld [vmem:[%s1 + $0x1c8] sm:$0xff]
      %v230 = vld [vmem:[%s1 + $0x1d0] sm:$0xff]
      %v231 = vld [vmem:[%s1 + $0x1d8] sm:$0xff]
      %v232 = vld [vmem:[%s1 + $0x1e0] sm:$0xff]
      %v233 = vld [vmem:[%s1 + $0x1e8] sm:$0xff]
      %v234 = vld [vmem:[%s1 + $0x1f0] sm:$0xff]
      %v235 = vld [vmem:[%s1 + $0x1f8] sm:$0xff]
      %v236 = vld [vmem:[%s2] sm:$0xf]
      %v238 = vlaneseq
      %v239 = vshrl.u32 %v238, 7
      %v240 = vsub.s32 0, %v239
      %v241 = vrot.slane %v236, %v240
      %v242 = vlaneseq
      %v243 = vshrl.u32 %v242, 7
      %v244 = vsub.s32 1, %v243
      %v245 = vrot.slane %v236, %v244
      %v246 = vlaneseq
      %v247 = vshrl.u32 %v246, 7
      %v248 = vsub.s32 2, %v247
      %v249 = vrot.slane %v236, %v248
      %v250 = vlaneseq
      %v251 = vshrl.u32 %v250, 7
      %v252 = vsub.s32 3, %v251
      %v253 = vrot.slane %v236, %v252
      %v259 = vunpack.c.l.b16 %v171
      %v260 = vunpack.c.h.b16 %v171
      %v261 = vpack.c.b16 %v259, %v259
      %v262 = vpack.c.b16 %v260, %v260
      %v329 = vunpack.c.l.b16 %v172
      %v330 = vunpack.c.h.b16 %v172
      %v331 = vunpack.c.l.b16 %v173
      %v332 = vunpack.c.h.b16 %v173
      %v333 = vunpack.c.l.b16 %v174
      %v334 = vunpack.c.h.b16 %v174
      %v335 = vunpack.c.l.b16 %v175
      %v336 = vunpack.c.h.b16 %v175
      %v337 = vunpack.c.l.b16 %v176
      %v338 = vunpack.c.h.b16 %v176
      %v339 = vunpack.c.l.b16 %v177
      %v340 = vunpack.c.h.b16 %v177
      %v341 = vunpack.c.l.b16 %v178
      %v342 = vunpack.c.h.b16 %v178
      %v343 = vunpack.c.l.b16 %v179
      %v344 = vunpack.c.h.b16 %v179
      %v345 = vunpack.c.l.b16 %v180
      %v346 = vunpack.c.h.b16 %v180
      %v347 = vunpack.c.l.b16 %v181
      %v348 = vunpack.c.h.b16 %v181
      %v349 = vunpack.c.l.b16 %v182
      %v350 = vunpack.c.h.b16 %v182
      %v351 = vunpack.c.l.b16 %v183
      %v352 = vunpack.c.h.b16 %v183
      %v353 = vunpack.c.l.b16 %v184
      %v354 = vunpack.c.h.b16 %v184
      %v355 = vunpack.c.l.b16 %v185
      %v356 = vunpack.c.h.b16 %v185
      %v357 = vunpack.c.l.b16 %v186
      %v358 = vunpack.c.h.b16 %v186
      %v359 = vunpack.c.l.b16 %v187
      %v360 = vunpack.c.h.b16 %v187
      %v361 = vunpack.c.l.b16 %v188
      %v362 = vunpack.c.h.b16 %v188
      %v363 = vunpack.c.l.b16 %v189
      %v364 = vunpack.c.h.b16 %v189
      %v365 = vunpack.c.l.b16 %v190
      %v366 = vunpack.c.h.b16 %v190
      %v367 = vunpack.c.l.b16 %v191
      %v368 = vunpack.c.h.b16 %v191
      %v369 = vunpack.c.l.b16 %v192
      %v370 = vunpack.c.h.b16 %v192
      %v371 = vunpack.c.l.b16 %v193
      %v372 = vunpack.c.h.b16 %v193
      %v373 = vunpack.c.l.b16 %v194
      %v374 = vunpack.c.h.b16 %v194
      %v375 = vunpack.c.l.b16 %v195
      %v376 = vunpack.c.h.b16 %v195
      %v377 = vunpack.c.l.b16 %v196
      %v378 = vunpack.c.h.b16 %v196
      %v379 = vunpack.c.l.b16 %v197
      %v380 = vunpack.c.h.b16 %v197
      %v381 = vunpack.c.l.b16 %v198
      %v382 = vunpack.c.h.b16 %v198
      %v383 = vunpack.c.l.b16 %v199
      %v384 = vunpack.c.h.b16 %v199
      %v385 = vunpack.c.l.b16 %v200
      %v386 = vunpack.c.h.b16 %v200
      %v387 = vunpack.c.l.b16 %v201
      %v388 = vunpack.c.h.b16 %v201
      %v389 = vunpack.c.l.b16 %v202
      %v390 = vunpack.c.h.b16 %v202
      %v391 = vunpack.c.l.b16 %v203
      %v392 = vunpack.c.h.b16 %v203
      %v393 = vunpack.c.l.b16 %v204
      %v394 = vunpack.c.h.b16 %v204
      %v395 = vunpack.c.l.b16 %v205
      %v396 = vunpack.c.h.b16 %v205
      %v397 = vunpack.c.l.b16 %v206
      %v398 = vunpack.c.h.b16 %v206
      %v399 = vunpack.c.l.b16 %v207
      %v400 = vunpack.c.h.b16 %v207
      %v401 = vunpack.c.l.b16 %v208
      %v402 = vunpack.c.h.b16 %v208
      %v403 = vunpack.c.l.b16 %v209
      %v404 = vunpack.c.h.b16 %v209
      %v405 = vunpack.c.l.b16 %v210
      %v406 = vunpack.c.h.b16 %v210
      %v407 = vunpack.c.l.b16 %v211
      %v408 = vunpack.c.h.b16 %v211
      %v409 = vunpack.c.l.b16 %v212
      %v410 = vunpack.c.h.b16 %v212
      %v411 = vunpack.c.l.b16 %v213
      %v412 = vunpack.c.h.b16 %v213
      %v413 = vunpack.c.l.b16 %v214
      %v414 = vunpack.c.h.b16 %v214
      %v415 = vunpack.c.l.b16 %v215
      %v416 = vunpack.c.h.b16 %v215
      %v417 = vunpack.c.l.b16 %v216
      %v418 = vunpack.c.h.b16 %v216
      %v419 = vunpack.c.l.b16 %v217
      %v420 = vunpack.c.h.b16 %v217
      %v421 = vunpack.c.l.b16 %v218
      %v422 = vunpack.c.h.b16 %v218
      %v423 = vunpack.c.l.b16 %v219
      %v424 = vunpack.c.h.b16 %v219
      %v425 = vunpack.c.l.b16 %v220
      %v426 = vunpack.c.h.b16 %v220
      %v427 = vunpack.c.l.b16 %v221
      %v428 = vunpack.c.h.b16 %v221
      %v429 = vunpack.c.l.b16 %v222
      %v430 = vunpack.c.h.b16 %v222
      %v431 = vunpack.c.l.b16 %v223
      %v432 = vunpack.c.h.b16 %v223
      %v433 = vunpack.c.l.b16 %v224
      %v434 = vunpack.c.h.b16 %v224
      %v435 = vunpack.c.l.b16 %v225
      %v436 = vunpack.c.h.b16 %v225
      %v437 = vunpack.c.l.b16 %v226
      %v438 = vunpack.c.h.b16 %v226
      %v439 = vunpack.c.l.b16 %v227
      %v440 = vunpack.c.h.b16 %v227
      %v441 = vunpack.c.l.b16 %v228
      %v442 = vunpack.c.h.b16 %v228
      %v443 = vunpack.c.l.b16 %v229
      %v444 = vunpack.c.h.b16 %v229
      %v445 = vunpack.c.l.b16 %v230
      %v446 = vunpack.c.h.b16 %v230
      %v447 = vunpack.c.l.b16 %v231
      %v448 = vunpack.c.h.b16 %v231
      %v449 = vunpack.c.l.b16 %v232
      %v450 = vunpack.c.h.b16 %v232
      %v451 = vunpack.c.l.b16 %v233
      %v452 = vunpack.c.h.b16 %v233
      %v453 = vunpack.c.l.b16 %v234
      %v454 = vunpack.c.h.b16 %v234
      %v455 = vunpack.c.l.b16 %v235
      %v456 = vunpack.c.h.b16 %v235
      %v457 = vpack.c.b16 %v333, %v329
      %v458 = vpack.c.b16 %v334, %v330
      %v459 = vpack.c.b16 %v335, %v331
      %v460 = vpack.c.b16 %v336, %v332
      %v461 = vpack.c.b16 %v341, %v337
      %v462 = vpack.c.b16 %v342, %v338
      %v463 = vpack.c.b16 %v343, %v339
      %v464 = vpack.c.b16 %v344, %v340
      %v465 = vpack.c.b16 %v349, %v345
      %v466 = vpack.c.b16 %v350, %v346
      %v467 = vpack.c.b16 %v351, %v347
      %v468 = vpack.c.b16 %v352, %v348
      %v469 = vpack.c.b16 %v357, %v353
      %v470 = vpack.c.b16 %v358, %v354
      %v471 = vpack.c.b16 %v359, %v355
      %v472 = vpack.c.b16 %v360, %v356
      %v473 = vpack.c.b16 %v365, %v361
      %v474 = vpack.c.b16 %v366, %v362
      %v475 = vpack.c.b16 %v367, %v363
      %v476 = vpack.c.b16 %v368, %v364
      %v477 = vpack.c.b16 %v373, %v369
      %v478 = vpack.c.b16 %v374, %v370
      %v479 = vpack.c.b16 %v375, %v371
      %v480 = vpack.c.b16 %v376, %v372
      %v481 = vpack.c.b16 %v381, %v377
      %v482 = vpack.c.b16 %v382, %v378
      %v483 = vpack.c.b16 %v383, %v379
      %v484 = vpack.c.b16 %v384, %v380
      %v485 = vpack.c.b16 %v389, %v385
      %v486 = vpack.c.b16 %v390, %v386
      %v487 = vpack.c.b16 %v391, %v387
      %v488 = vpack.c.b16 %v392, %v388
      %v489 = vpack.c.b16 %v397, %v393
      %v490 = vpack.c.b16 %v398, %v394
      %v491 = vpack.c.b16 %v399, %v395
      %v492 = vpack.c.b16 %v400, %v396
      %v493 = vpack.c.b16 %v405, %v401
      %v494 = vpack.c.b16 %v406, %v402
      %v495 = vpack.c.b16 %v407, %v403
      %v496 = vpack.c.b16 %v408, %v404
      %v497 = vpack.c.b16 %v413, %v409
      %v498 = vpack.c.b16 %v414, %v410
      %v499 = vpack.c.b16 %v415, %v411
      %v500 = vpack.c.b16 %v416, %v412
      %v501 = vpack.c.b16 %v421, %v417
      %v502 = vpack.c.b16 %v422, %v418
      %v503 = vpack.c.b16 %v423, %v419
      %v504 = vpack.c.b16 %v424, %v420
      %v505 = vpack.c.b16 %v429, %v425
      %v506 = vpack.c.b16 %v430, %v426
      %v507 = vpack.c.b16 %v431, %v427
      %v508 = vpack.c.b16 %v432, %v428
      %v509 = vpack.c.b16 %v437, %v433
      %v510 = vpack.c.b16 %v438, %v434
      %v511 = vpack.c.b16 %v439, %v435
      %v512 = vpack.c.b16 %v440, %v436
      %v513 = vpack.c.b16 %v445, %v441
      %v514 = vpack.c.b16 %v446, %v442
      %v515 = vpack.c.b16 %v447, %v443
      %v516 = vpack.c.b16 %v448, %v444
      %v517 = vpack.c.b16 %v453, %v449
      %v518 = vpack.c.b16 %v454, %v450
      %v519 = vpack.c.b16 %v455, %v451
      %v520 = vpack.c.b16 %v456, %v452
      %585 = vmatprep.subr.bf16.mxu0 %v486
      %586 = vmatpush1.bf16.msra.mxu0 %v485
      %587 = vmatprep.subr.bf16.mxu0 %v482
      %588 = vmatpush1.bf16.msra.mxu0 %v481
      %589 = vmatprep.subr.bf16.mxu0 %v478
      %590 = vmatpush1.bf16.msra.mxu0 %v477
      %591 = vmatprep.subr.bf16.mxu0 %v474
      %592 = vmatpush1.bf16.msra.mxu0 %v473
      %593 = vmatprep.subr.bf16.mxu0 %v470
      %594 = vmatpush1.bf16.msra.mxu0 %v469
      %595 = vmatprep.subr.bf16.mxu0 %v466
      %596 = vmatpush1.bf16.msra.mxu0 %v465
      %597 = vmatprep.subr.bf16.mxu0 %v462
      %598 = vmatpush1.bf16.msra.mxu0 %v461
      %599 = vmatprep.subr.bf16.mxu0 %v458
      %600 = vmatpush1.bf16.msra.mxu0 %v457
      %601 = vmatprep.subr.bf16.mxu0 %v518
      %602 = vmatpush2.bf16.msra.mxu0 %v517
      %603 = vmatprep.subr.bf16.mxu0 %v514
      %604 = vmatpush2.bf16.msra.mxu0 %v513
      %605 = vmatprep.subr.bf16.mxu0 %v510
      %606 = vmatpush2.bf16.msra.mxu0 %v509
      %607 = vmatprep.subr.bf16.mxu0 %v506
      %608 = vmatpush2.bf16.msra.mxu0 %v505
      %609 = vmatprep.subr.bf16.mxu0 %v502
      %610 = vmatpush2.bf16.msra.mxu0 %v501
      %611 = vmatprep.subr.bf16.mxu0 %v498
      %612 = vmatpush2.bf16.msra.mxu0 %v497
      %613 = vmatprep.subr.bf16.mxu0 %v494
      %614 = vmatpush2.bf16.msra.mxu0 %v493
      %615 = vmatprep.subr.bf16.mxu0 %v490
      %616 = vmatpush2.bf16.msra.mxu0 %v489
      %617 = vmatprep.mubr.bf16.mxu0 %v262
      %618 = vmatmul.mubr.bf16.gmra.mxu0 %v261
      %v619 = vpop.f32.mrf.mxu0
      %v620 = vadd.f32 %v241, %v619
      %v621 = vpop.f32.mrf.mxu0
      %v622 = vadd.f32 %v245, %v621
      %v623 = vpop.f32.mrf.mxu0
      %v624 = vpop.f32.mrf.mxu0
      %625 = vdwg.mxu0
      %626 = vmatprep.subr.bf16.mxu0 %v488
      %627 = vmatpush1.bf16.msra.mxu0 %v487
      %628 = vmatprep.subr.bf16.mxu0 %v484
      %629 = vmatpush1.bf16.msra.mxu0 %v483
      %630 = vmatprep.subr.bf16.mxu0 %v480
      %631 = vmatpush1.bf16.msra.mxu0 %v479
      %632 = vmatprep.subr.bf16.mxu0 %v476
      %633 = vmatpush1.bf16.msra.mxu0 %v475
      %634 = vmatprep.subr.bf16.mxu0 %v472
      %635 = vmatpush1.bf16.msra.mxu0 %v471
      %636 = vmatprep.subr.bf16.mxu0 %v468
      %637 = vmatpush1.bf16.msra.mxu0 %v467
      %638 = vmatprep.subr.bf16.mxu0 %v464
      %639 = vmatpush1.bf16.msra.mxu0 %v463
      %640 = vmatprep.subr.bf16.mxu0 %v460
      %641 = vmatpush1.bf16.msra.mxu0 %v459
      %642 = vmatprep.subr.bf16.mxu0 %v520
      %643 = vmatpush2.bf16.msra.mxu0 %v519
      %644 = vmatprep.subr.bf16.mxu0 %v516
      %645 = vmatpush2.bf16.msra.mxu0 %v515
      %646 = vmatprep.subr.bf16.mxu0 %v512
      %647 = vmatpush2.bf16.msra.mxu0 %v511
      %648 = vmatprep.subr.bf16.mxu0 %v508
      %649 = vmatpush2.bf16.msra.mxu0 %v507
      %650 = vmatprep.subr.bf16.mxu0 %v504
      %651 = vmatpush2.bf16.msra.mxu0 %v503
      %652 = vmatprep.subr.bf16.mxu0 %v500
      %653 = vmatpush2.bf16.msra.mxu0 %v499
      %654 = vmatprep.subr.bf16.mxu0 %v496
      %655 = vmatpush2.bf16.msra.mxu0 %v495
      %656 = vmatprep.subr.bf16.mxu0 %v492
      %657 = vmatpush2.bf16.msra.mxu0 %v491
      %658 = vmatprep.mubr.bf16.mxu0 %v262
      %659 = vmatmul.mubr.bf16.gmra.mxu0 %v261
      %v660 = vpop.f32.mrf.mxu0
      %v661 = vadd.f32 %v249, %v660
      %v662 = vpop.f32.mrf.mxu0
      %v663 = vadd.f32 %v253, %v662
      %v664 = vpop.f32.mrf.mxu0
      %v665 = vpop.f32.mrf.mxu0
      %666 = vdwg.mxu0
      %v667 = vmax.f32 %v620, 0.0
      %v668 = vmax.f32 %v622, 0.0
      %v669 = vmax.f32 %v661, 0.0
      %v670 = vmax.f32 %v663, 0.0
      %v671 = vpack.c.bf16 %v667, %v667
      %v672 = vpack.c.bf16 %v668, %v668
      %v673 = vpack.c.bf16 %v669, %v669
      %v674 = vpack.c.bf16 %v670, %v670
      %v679 = vunpack.c.l.b16 %v671
      %v680 = vunpack.c.l.b16 %v672
      %v681 = vunpack.c.l.b16 %v673
      %v682 = vunpack.c.l.b16 %v674
      %v683 = vpack.c.b16 %v680, %v679
      %v684 = vpack.c.b16 %v682, %v681
      %687 = vst [vmem:[%s170] sm:$0xff] %v683
      %688 = vst [vmem:[%s170 + $0x8] sm:$0xff] %v684
      %p689 = scmp.lt.s32.totalorder %s14, 1
      %s690 = scalar_select %p689, %s14, 1
      %s691 = smul.addr %s690, 4
      %s692 = smul.addr %s691, 4
      %s693 = scalar_lea.vmem %s3, %s692
      // Predicated region
      $region33: #{bhst_predictor_forward.2} parent=31 // pred_check
        %p694 = pneg %p100
      $region34: #{bhst_predictor_forward.2} parent=31 // pred_check_branch
        %696 = sbr.rel (%p694) target = $region36
      $region35: #{bhst_predictor_forward.2} parent=31 // pred_region
        _
      $region36: #{bhst_predictor_forward.2} parent=31 // pred_fallthru
        _
    $region32: #{bhst_predictor_forward.2} parent=5 // pred_fallthru
      _
    %p697 = scmp.le.s32.totalorder 2, %s9
    // Predicated region
    $region37: #{bhst_predictor_forward.2} parent=5 // pred_check
      %p698 = pneg %p697
    $region38: #{bhst_predictor_forward.2} parent=5 // pred_check_branch
      %700 = sbr.rel (%p698) target = $region40
    $region39: #{bhst_predictor_forward.2} parent=5 // pred_region
      %s701 = ssub.s32 %s9, 2
      // Predicated region
      $region41: #{bhst_predictor_forward.2} parent=39 // pred_check
        %p702 = pneg %p106
      $region42: #{bhst_predictor_forward.2} parent=39 // pred_check_branch
        %704 = sbr.rel (%p702) target = $region44
      $region43: #{bhst_predictor_forward.2} parent=39 // pred_region
        %p705 = scmp.lt.s32.totalorder %s15, 1
        %s706 = scalar_select %p705, %s15, 1
        %s707 = smul.addr %s706, 4
        %s708 = smul.addr %s707, 4
        %s709 = scalar_lea.vmem %s3, %s708
      $region44: #{bhst_predictor_forward.2} parent=39 // pred_fallthru
        _
    $region40: #{bhst_predictor_forward.2} parent=5 // pred_fallthru
      _
  $region6: #{bhst_predictor_forward.2} parent=0 // loop_footer
    %s13 = sadd.s32 1, %s9
  $region7: #{bhst_predictor_forward.2} parent=0 // loop_footer_branch
    %8 = sbr.rel target = $region3
  $region8: #{bhst_predictor_forward.2} parent=0 // loop_exit
    _

// kernel: bhst_predictor_forward.3
$region0: #{bhst_predictor_forward.3}
  #allocation0 [shape = 'u32[]', space=smem, size = 0x4, offset = 0x4, fixed_abs, tag = 'smem constant byte address 0x4 - core index']
  #allocation1 [shape = 'u32[144,128]{1,0:T(1,128)}', space=vmem, size = 0x12000, scoped, tag = 'internal scratch']
  %s0 = inlined_call_operand.vmem [shape: bf16[2,128,32], index: 0, kind: input, shape index: {}]
  %s1 = inlined_call_operand.vmem [shape: bf16[3,32,32], index: 1, kind: input, shape index: {}]
  %s2 = inlined_call_operand.vmem [shape: f32[3,1,32], index: 2, kind: input, shape index: {}]
  %s3 = inlined_call_operand.vmem [shape: bf16[3,32,32], index: 3, kind: input, shape index: {}]
  %s4 = inlined_call_operand.vmem [shape: f32[3,1,32], index: 4, kind: input, shape index: {}]
  %s5 = inlined_call_operand.vmem [shape: f32[2,128,32], index: 5, kind: output, shape index: {}]
  %s6 = sld [smem:[#allocation0]]
  $region53: #{bhst_predictor_forward.3} parent=0
    _
  %s8 = ssub.s32 1, %s6
  %s9 = scalar_select 0, %s8, %s6
  loop: start=0, step=1, limit=4
  $region2: #{bhst_predictor_forward.3} parent=0 // loop_pre_header
    _
  $region3: #{bhst_predictor_forward.3} parent=0 // loop_header
    %s11 = sphi 0, %s15
    %p12 = scmp.ge.s32.totalorder %s11, 4
    %s21 = sphi 0, %s23
    %s24 = sphi 0, %s21
    %s25 = sphi 0, %s24
    %s41 = sphi 0, %s25
    %s45 = sphi 0, %s45
    %s47 = sphi 0, %s45
    %s48 = sphi 0, %s47
    %s62 = sphi 0, %s48
    %s66 = sphi 0, %s66
    %s68 = sphi 0, %s66
    %s69 = sphi 0, %s68
    %s83 = sphi 0, %s69
    %s87 = sphi 0, %s87
    %s89 = sphi 0, %s87
    %s90 = sphi 0, %s89
    %s104 = sphi 0, %s90
    %s108 = sphi 0, %s108
    %s110 = sphi 0, %s108
    %s111 = sphi 0, %s110
    %s125 = sphi 0, %s111
    %s131 = sphi 0, %s133
    %s134 = sphi 0, %s131
    %s135 = sphi 0, %s134
    %s151 = sphi 0, %s135
  $region4: #{bhst_predictor_forward.3} parent=0 // loop_header_branch
    %14 = sbr.rel (%p12) target = $region8
  $region5: #{bhst_predictor_forward.3} parent=0 // loop_body
    %s16 = ssub.s32 %s11, 1
    %s17 = ssub.s32 %s11, 2
    %s18 = sadd.s32 %s11, 1
    %s19 = ssub.s32 %s11, %s18
    %p20 = scmp.eq.s32.totalorder %s19, 0
    %s22 = sadd.s32 %s21, 1
    %s23 = scalar_select %p20, %s21, %s22
    %p26 = pneg %p20
    %p27 = scmp.eq.s32.totalorder %s11, 1
    %p28 = por %p26, %p27
    %p29 = scmp.ne.s32.totalorder %s21, %s24
    %p30 = scmp.eq.s32.totalorder %s11, 0
    %p31 = por %p29, %p30
    %p32 = scmp.ne.s32.totalorder %s21, %s24
    %p33 = scmp.eq.s32.totalorder %s16, 1
    %p34 = por %p32, %p33
    %p35 = scmp.ne.s32.totalorder %s24, %s25
    %p36 = scmp.eq.s32.totalorder %s16, 0
    %p37 = por %p35, %p36
    %p38 = scmp.ne.s32.totalorder %s24, %s25
    %p39 = scmp.eq.s32.totalorder %s17, 1
    %p40 = por %p38, %p39
    %p42 = scmp.ne.s32.totalorder %s25, %s41
    %p43 = scmp.eq.s32.totalorder %s17, 0
    %p44 = por %p42, %p43
    %s46 = sadd.s32 %s45, 1
    %p49 = scmp.eq.s32.totalorder %s11, 1
    %p50 = scmp.ne.s32.totalorder %s45, %s47
    %p51 = scmp.eq.s32.totalorder %s11, 0
    %p52 = por %p50, %p51
    %p53 = scmp.ne.s32.totalorder %s45, %s47
    %p54 = scmp.eq.s32.totalorder %s16, 1
    %p55 = por %p53, %p54
    %p56 = scmp.ne.s32.totalorder %s47, %s48
    %p57 = scmp.eq.s32.totalorder %s16, 0
    %p58 = por %p56, %p57
    %p59 = scmp.ne.s32.totalorder %s47, %s48
    %p60 = scmp.eq.s32.totalorder %s17, 1
    %p61 = por %p59, %p60
    %p63 = scmp.ne.s32.totalorder %s48, %s62
    %p64 = scmp.eq.s32.totalorder %s17, 0
    %p65 = por %p63, %p64
    %s67 = sadd.s32 %s66, 1
    %p70 = scmp.eq.s32.totalorder %s11, 1
    %p71 = scmp.ne.s32.totalorder %s66, %s68
    %p72 = scmp.eq.s32.totalorder %s11, 0
    %p73 = por %p71, %p72
    %p74 = scmp.ne.s32.totalorder %s66, %s68
    %p75 = scmp.eq.s32.totalorder %s16, 1
    %p76 = por %p74, %p75
    %p77 = scmp.ne.s32.totalorder %s68, %s69
    %p78 = scmp.eq.s32.totalorder %s16, 0
    %p79 = por %p77, %p78
    %p80 = scmp.ne.s32.totalorder %s68, %s69
    %p81 = scmp.eq.s32.totalorder %s17, 1
    %p82 = por %p80, %p81
    %p84 = scmp.ne.s32.totalorder %s69, %s83
    %p85 = scmp.eq.s32.totalorder %s17, 0
    %p86 = por %p84, %p85
    %s88 = sadd.s32 %s87, 1
    %p91 = scmp.eq.s32.totalorder %s11, 1
    %p92 = scmp.ne.s32.totalorder %s87, %s89
    %p93 = scmp.eq.s32.totalorder %s11, 0
    %p94 = por %p92, %p93
    %p95 = scmp.ne.s32.totalorder %s87, %s89
    %p96 = scmp.eq.s32.totalorder %s16, 1
    %p97 = por %p95, %p96
    %p98 = scmp.ne.s32.totalorder %s89, %s90
    %p99 = scmp.eq.s32.totalorder %s16, 0
    %p100 = por %p98, %p99
    %p101 = scmp.ne.s32.totalorder %s89, %s90
    %p102 = scmp.eq.s32.totalorder %s17, 1
    %p103 = por %p101, %p102
    %p105 = scmp.ne.s32.totalorder %s90, %s104
    %p106 = scmp.eq.s32.totalorder %s17, 0
    %p107 = por %p105, %p106
    %s109 = sadd.s32 %s108, 1
    %p112 = scmp.eq.s32.totalorder %s11, 1
    %p113 = scmp.ne.s32.totalorder %s108, %s110
    %p114 = scmp.eq.s32.totalorder %s11, 0
    %p115 = por %p113, %p114
    %p116 = scmp.ne.s32.totalorder %s108, %s110
    %p117 = scmp.eq.s32.totalorder %s16, 1
    %p118 = por %p116, %p117
    %p119 = scmp.ne.s32.totalorder %s110, %s111
    %p120 = scmp.eq.s32.totalorder %s16, 0
    %p121 = por %p119, %p120
    %p122 = scmp.ne.s32.totalorder %s110, %s111
    %p123 = scmp.eq.s32.totalorder %s17, 1
    %p124 = por %p122, %p123
    %p126 = scmp.ne.s32.totalorder %s111, %s125
    %p127 = scmp.eq.s32.totalorder %s17, 0
    %p128 = por %p126, %p127
    %s129 = ssub.s32 %s11, %s18
    %p130 = scmp.eq.s32.totalorder %s129, 0
    %s132 = sadd.s32 %s131, 1
    %s133 = scalar_select %p130, %s131, %s132
    %p136 = pneg %p130
    %p137 = scmp.eq.s32.totalorder %s11, 1
    %p138 = por %p136, %p137
    %p139 = scmp.ne.s32.totalorder %s131, %s134
    %p140 = scmp.eq.s32.totalorder %s11, 0
    %p141 = por %p139, %p140
    %p142 = scmp.ne.s32.totalorder %s131, %s134
    %p143 = scmp.eq.s32.totalorder %s16, 1
    %p144 = por %p142, %p143
    %p145 = scmp.ne.s32.totalorder %s134, %s135
    %p146 = scmp.eq.s32.totalorder %s16, 0
    %p147 = por %p145, %p146
    %p148 = scmp.ne.s32.totalorder %s134, %s135
    %p149 = scmp.eq.s32.totalorder %s17, 1
    %p150 = por %p148, %p149
    %p152 = scmp.ne.s32.totalorder %s135, %s151
    %p153 = scmp.eq.s32.totalorder %s17, 0
    %p154 = por %p152, %p153
    %p155 = scmp.le.s32.totalorder 1, %s11
    %p156 = scmp.lt.s32.totalorder %s11, 3
    %p157 = pnand %p155, %p156
    %p158 = pneg %p157
    // Predicated region
    $region9: #{bhst_predictor_forward.3} parent=5 // pred_check
      _
    $region10: #{bhst_predictor_forward.3} parent=5 // pred_check_branch
      %160 = sbr.rel (%p157) target = $region12
    $region11: #{bhst_predictor_forward.3} parent=5 // pred_region
      %s161 = ssub.s32 %s11, 1
      // Predicated region
      $region13: #{bhst_predictor_forward.3} parent=11 // pred_check
        %p162 = pneg %p58
      $region14: #{bhst_predictor_forward.3} parent=11 // pred_check_branch
        %164 = sbr.rel (%p162) target = $region16
      $region15: #{bhst_predictor_forward.3} parent=11 // pred_region
        _
      $region16: #{bhst_predictor_forward.3} parent=11 // pred_fallthru
        _
      // Predicated region
      $region17: #{bhst_predictor_forward.3} parent=11 // pred_check
        %p165 = pneg %p79
      $region18: #{bhst_predictor_forward.3} parent=11 // pred_check_branch
        %167 = sbr.rel (%p165) target = $region20
      $region19: #{bhst_predictor_forward.3} parent=11 // pred_region
        _
      $region20: #{bhst_predictor_forward.3} parent=11 // pred_fallthru
        _
      // Predicated region
      $region21: #{bhst_predictor_forward.3} parent=11 // pred_check
        %p168 = pneg %p100
      $region22: #{bhst_predictor_forward.3} parent=11 // pred_check_branch
        %170 = sbr.rel (%p168) target = $region24
      $region23: #{bhst_predictor_forward.3} parent=11 // pred_region
        _
      $region24: #{bhst_predictor_forward.3} parent=11 // pred_fallthru
        _
      // Predicated region
      $region25: #{bhst_predictor_forward.3} parent=11 // pred_check
        %p171 = pneg %p121
      $region26: #{bhst_predictor_forward.3} parent=11 // pred_check_branch
        %173 = sbr.rel (%p171) target = $region28
      $region27: #{bhst_predictor_forward.3} parent=11 // pred_region
        _
      $region28: #{bhst_predictor_forward.3} parent=11 // pred_fallthru
        _
    $region12: #{bhst_predictor_forward.3} parent=5 // pred_fallthru
      _
    %p174 = scmp.lt.s32.totalorder %s11, 2
    // Predicated region
    $region29: #{bhst_predictor_forward.3} parent=5 // pred_check
      %p175 = pneg %p174
    $region30: #{bhst_predictor_forward.3} parent=5 // pred_check_branch
      %177 = sbr.rel (%p175) target = $region32
    $region31: #{bhst_predictor_forward.3} parent=5 // pred_region
      // Predicated region
      $region33: #{bhst_predictor_forward.3} parent=31 // pred_check
        %p178 = pneg %p31
      $region34: #{bhst_predictor_forward.3} parent=31 // pred_check_branch
        %180 = sbr.rel (%p178) target = $region36
      $region35: #{bhst_predictor_forward.3} parent=31 // pred_region
        %p181 = scmp.lt.s32.totalorder %s11, 1
        %s182 = scalar_select %p181, %s11, 1
        %s183 = smul.addr %s182, 16
        %s184 = smul.addr %s183, 4
        %s185 = scalar_lea.vmem %s0, %s184
      $region36: #{bhst_predictor_forward.3} parent=31 // pred_fallthru
        _
    $region32: #{bhst_predictor_forward.3} parent=5 // pred_fallthru
      _
    %p186 = scmp.le.s32.totalorder 1, %s11
    %p187 = scmp.lt.s32.totalorder %s11, 3
    %p188 = pnand %p186, %p187
    %p189 = pneg %p188
    // Predicated region
    $region37: #{bhst_predictor_forward.3} parent=5 // pred_check
      _
    $region38: #{bhst_predictor_forward.3} parent=5 // pred_check_branch
      %191 = sbr.rel (%p188) target = $region40
    $region39: #{bhst_predictor_forward.3} parent=5 // pred_region
      %s192 = ssub.s32 %s11, 1
      %p193 = scmp.lt.s32.totalorder %s16, 1
      %s194 = scalar_select %p193, %s16, 1
      %s195 = smul.addr %s194, 16
      %s196 = smul.addr %s195, 4
      %s197 = scalar_lea.vmem %s0, %s196
      %p198 = pneg %p37
      %p199 = pneg %p34
      %p200 = pneg %p58
      %p201 = pneg %p55
      %p202 = pneg %p79
      %p203 = pneg %p76
      %p204 = pneg %p100
      %p205 = pneg %p97
      %p206 = pneg %p121
      %p207 = pneg %p118
      %p208 = pneg %p147
      %p209 = pneg %p144
      %p210 = scmp.lt.s32.totalorder %s16, 1
      %s211 = scalar_select %p210, %s16, 1
      %s212 = smul.addr %s211, 16
      %s213 = smul.addr %s212, 8
      %s214 = scalar_lea.vmem %s5, %s213
      %p215 = scmp.lt.s32.totalorder %s16, 1
      %s216 = scalar_select %p215, %s16, 1
      %s217 = smul.addr %s216, 16
      %s218 = smul.addr %s217, 4
      %s219 = scalar_lea.vmem %s0, %s218
      %p220 = scmp.lt.s32.totalorder %s16, 1
      %s221 = scalar_select %p220, %s16, 1
      %s222 = smul.addr %s221, 16
      %s223 = smul.addr %s222, 8
      %s224 = scalar_lea.vmem %s5, %s223
      %v226 = vld [vmem:[%s219] sm:$0xf]
      %v227 = vld [vmem:[%s219 + $0x4] sm:$0xf]
      %v228 = vld [vmem:[%s219 + $0x8] sm:$0xf]
      %v229 = vld [vmem:[%s219 + $0xc] sm:$0xf]
      %v230 = vld [vmem:[%s219 + $0x10] sm:$0xf]
      %v231 = vld [vmem:[%s219 + $0x14] sm:$0xf]
      %v232 = vld [vmem:[%s219 + $0x18] sm:$0xf]
      %v233 = vld [vmem:[%s219 + $0x1c] sm:$0xf]
      %v234 = vld [vmem:[%s219 + $0x20] sm:$0xf]
      %v235 = vld [vmem:[%s219 + $0x24] sm:$0xf]
      %v236 = vld [vmem:[%s219 + $0x28] sm:$0xf]
      %v237 = vld [vmem:[%s219 + $0x2c] sm:$0xf]
      %v238 = vld [vmem:[%s219 + $0x30] sm:$0xf]
      %v239 = vld [vmem:[%s219 + $0x34] sm:$0xf]
      %v240 = vld [vmem:[%s219 + $0x38] sm:$0xf]
      %v241 = vld [vmem:[%s219 + $0x3c] sm:$0xf]
      %v242 = vld [vmem:[%s1] sm:$0xf]
      %v243 = vld [vmem:[%s1 + $0x4] sm:$0xf]
      %v244 = vld [vmem:[%s1 + $0x8] sm:$0xf]
      %v245 = vld [vmem:[%s1 + $0xc] sm:$0xf]
      %v246 = vld [vmem:[%s2] sm:$0x1]
      %v248 = vlaneseq
      %v249 = vshrl.u32 %v248, 7
      %v250 = vsub.s32 0, %v249
      %v251 = vrot.slane %v246, %v250
      %v269 = vunpack.c.l.b16 %v226
      %v270 = vunpack.c.l.b16 %v227
      %v271 = vunpack.c.l.b16 %v228
      %v272 = vunpack.c.l.b16 %v229
      %v273 = vunpack.c.l.b16 %v230
      %v274 = vunpack.c.l.b16 %v231
      %v275 = vunpack.c.l.b16 %v232
      %v276 = vunpack.c.l.b16 %v233
      %v277 = vunpack.c.l.b16 %v234
      %v278 = vunpack.c.l.b16 %v235
      %v279 = vunpack.c.l.b16 %v236
      %v280 = vunpack.c.l.b16 %v237
      %v281 = vunpack.c.l.b16 %v238
      %v282 = vunpack.c.l.b16 %v239
      %v283 = vunpack.c.l.b16 %v240
      %v284 = vunpack.c.l.b16 %v241
      %v285 = vpack.c.b16 %v270, %v269
      %v286 = vpack.c.b16 %v272, %v271
      %v287 = vpack.c.b16 %v274, %v273
      %v288 = vpack.c.b16 %v276, %v275
      %v289 = vpack.c.b16 %v278, %v277
      %v290 = vpack.c.b16 %v280, %v279
      %v291 = vpack.c.b16 %v282, %v281
      %v292 = vpack.c.b16 %v284, %v283
      %v297 = vunpack.c.l.b16 %v242
      %v298 = vunpack.c.l.b16 %v243
      %v299 = vunpack.c.l.b16 %v244
      %v300 = vunpack.c.l.b16 %v245
      %v301 = vpack.c.b16 %v298, %v297
      %v302 = vpack.c.b16 %v300, %v299
      %vm305 = vcmask 261120
      %v307 = vsel %vm305, %v285, 0
      %v310 = vsel %vm305, %v286, 0
      %v313 = vsel %vm305, %v287, 0
      %v316 = vsel %vm305, %v288, 0
      %v319 = vsel %vm305, %v289, 0
      %v322 = vsel %vm305, %v290, 0
      %v325 = vsel %vm305, %v291, 0
      %v328 = vsel %vm305, %v292, 0
      %330 = vmatprep.subr.bf16.mxu0 0
      %331 = vmatpush1.bf16.msra.mxu0 0
      %332 = vmatprep.subr.bf16.mxu0 0
      %333 = vmatpush1.bf16.msra.mxu0 0
      %334 = vmatprep.subr.bf16.mxu0 0
      %335 = vmatpush1.bf16.msra.mxu0 0
      %336 = vmatprep.subr.bf16.mxu0 0
      %337 = vmatpush1.bf16.msra.mxu0 0
      %338 = vmatprep.subr.bf16.mxu0 0
      %339 = vmatpush1.bf16.msra.mxu0 0
      %340 = vmatprep.subr.bf16.mxu0 0
      %341 = vmatpush1.bf16.msra.mxu0 0
      %342 = vmatprep.subr.bf16.mxu0 0
      %343 = vmatpush1.bf16.msra.mxu0 %v302
      %344 = vmatprep.subr.bf16.mxu0 0
      %345 = vmatpush1.bf16.msra.mxu0 %v301
      %346 = vmatprep.subr.bf16.mxu0 0
      %347 = vmatpush2.bf16.msra.mxu0 0
      %348 = vmatprep.subr.bf16.mxu0 0
      %349 = vmatpush2.bf16.msra.mxu0 0
      %350 = vmatprep.subr.bf16.mxu0 0
      %351 = vmatpush2.bf16.msra.mxu0 0
      %352 = vmatprep.subr.bf16.mxu0 0
      %353 = vmatpush2.bf16.msra.mxu0 0
      %354 = vmatprep.subr.bf16.mxu0 0
      %355 = vmatpush2.bf16.msra.mxu0 0
      %356 = vmatprep.subr.bf16.mxu0 0
      %357 = vmatpush2.bf16.msra.mxu0 0
      %358 = vmatprep.subr.bf16.mxu0 0
      %359 = vmatpush2.bf16.msra.mxu0 0
      %360 = vmatprep.subr.bf16.mxu0 0
      %361 = vmatpush2.bf16.msra.mxu0 0
      %362 = vmatprep.mubr.bf16.mxu0 0
      %363 = vmatmul.mubr.bf16.gmra.mxu0 %v307
      %v364 = vpop.f32.mrf.mxu0
      %v365 = vadd.f32 %v251, %v364
      %v366 = vpop.f32.mrf.mxu0
      %v367 = vpop.f32.mrf.mxu0
      %v368 = vadd.f32 %v251, %v367
      %v369 = vpop.f32.mrf.mxu0
      %370 = vmatprep.mubr.bf16.mxu0 0
      %371 = vmatmul.mubr.bf16.gmra.mxu0 %v310
      %v372 = vpop.f32.mrf.mxu0
      %v373 = vadd.f32 %v251, %v372
      %v374 = vpop.f32.mrf.mxu0
      %v375 = vpop.f32.mrf.mxu0
      %v376 = vadd.f32 %v251, %v375
      %v377 = vpop.f32.mrf.mxu0
      %378 = vmatprep.mubr.bf16.mxu0 0
      %379 = vmatmul.mubr.bf16.gmra.mxu0 %v313
      %v380 = vpop.f32.mrf.mxu0
      %v381 = vadd.f32 %v251, %v380
      %v382 = vpop.f32.mrf.mxu0
      %v383 = vpop.f32.mrf.mxu0
      %v384 = vadd.f32 %v251, %v383
      %v385 = vpop.f32.mrf.mxu0
      %386 = vmatprep.mubr.bf16.mxu0 0
      %387 = vmatmul.mubr.bf16.gmra.mxu0 %v316
      %v388 = vpop.f32.mrf.mxu0
      %v389 = vadd.f32 %v251, %v388
      %v390 = vpop.f32.mrf.mxu0
      %v391 = vpop.f32.mrf.mxu0
      %v392 = vadd.f32 %v251, %v391
      %v393 = vpop.f32.mrf.mxu0
      %394 = vmatprep.mubr.bf16.mxu0 0
      %395 = vmatmul.mubr.bf16.gmra.mxu0 %v319
      %v396 = vpop.f32.mrf.mxu0
      %v397 = vadd.f32 %v251, %v396
      %v398 = vpop.f32.mrf.mxu0
      %v399 = vpop.f32.mrf.mxu0
      %v400 = vadd.f32 %v251, %v399
      %v401 = vpop.f32.mrf.mxu0
      %402 = vmatprep.mubr.bf16.mxu0 0
      %403 = vmatmul.mubr.bf16.gmra.mxu0 %v322
      %v404 = vpop.f32.mrf.mxu0
      %v405 = vadd.f32 %v251, %v404
      %v406 = vpop.f32.mrf.mxu0
      %v407 = vpop.f32.mrf.mxu0
      %v408 = vadd.f32 %v251, %v407
      %v409 = vpop.f32.mrf.mxu0
      %410 = vmatprep.mubr.bf16.mxu0 0
      %411 = vmatmul.mubr.bf16.gmra.mxu0 %v325
      %v412 = vpop.f32.mrf.mxu0
      %v413 = vadd.f32 %v251, %v412
      %v414 = vpop.f32.mrf.mxu0
      %v415 = vpop.f32.mrf.mxu0
      %v416 = vadd.f32 %v251, %v415
      %v417 = vpop.f32.mrf.mxu0
      %418 = vmatprep.mubr.bf16.mxu0 0
      %419 = vmatmul.mubr.bf16.gmra.mxu0 %v328
      %v420 = vpop.f32.mrf.mxu0
      %v421 = vadd.f32 %v251, %v420
      %v422 = vpop.f32.mrf.mxu0
      %v423 = vpop.f32.mrf.mxu0
      %v424 = vadd.f32 %v251, %v423
      %v425 = vpop.f32.mrf.mxu0
      %426 = vdwg.mxu0
      %s427 = scalar_lea.vmem %s1, 16
      %v428 = vld [vmem:[%s427] sm:$0xf]
      %v429 = vld [vmem:[%s427 + $0x4] sm:$0xf]
      %v430 = vld [vmem:[%s427 + $0x8] sm:$0xf]
      %v431 = vld [vmem:[%s427 + $0xc] sm:$0xf]
      %s432 = scalar_lea.vmem %s2, 1
      %v433 = vld [vmem:[%s432] sm:$0x1]
      %v435 = vlaneseq
      %v436 = vshrl.u32 %v435, 7
      %v437 = vsub.s32 0, %v436
      %v438 = vrot.slane %v433, %v437
      %v444 = vunpack.c.l.b16 %v428
      %v445 = vunpack.c.l.b16 %v429
      %v446 = vunpack.c.l.b16 %v430
      %v447 = vunpack.c.l.b16 %v431
      %v448 = vpack.c.b16 %v445, %v444
      %v449 = vpack.c.b16 %v447, %v446
      %452 = vmatprep.subr.bf16.mxu0 0
      %453 = vmatpush1.bf16.msra.mxu0 0
      %454 = vmatprep.subr.bf16.mxu0 0
      %455 = vmatpush1.bf16.msra.mxu0 0
      %456 = vmatprep.subr.bf16.mxu0 0
      %457 = vmatpush1.bf16.msra.mxu0 0
      %458 = vmatprep.subr.bf16.mxu0 0
      %459 = vmatpush1.bf16.msra.mxu0 0
      %460 = vmatprep.subr.bf16.mxu0 0
      %461 = vmatpush1.bf16.msra.mxu0 0
      %462 = vmatprep.subr.bf16.mxu0 0
      %463 = vmatpush1.bf16.msra.mxu0 0
      %464 = vmatprep.subr.bf16.mxu0 0
      %465 = vmatpush1.bf16.msra.mxu0 %v449
      %466 = vmatprep.subr.bf16.mxu0 0
      %467 = vmatpush1.bf16.msra.mxu0 %v448
      %468 = vmatprep.subr.bf16.mxu0 0
      %469 = vmatpush2.bf16.msra.mxu0 0
      %470 = vmatprep.subr.bf16.mxu0 0
      %471 = vmatpush2.bf16.msra.mxu0 0
      %472 = vmatprep.subr.bf16.mxu0 0
      %473 = vmatpush2.bf16.msra.mxu0 0
      %474 = vmatprep.subr.bf16.mxu0 0
      %475 = vmatpush2.bf16.msra.mxu0 0
      %476 = vmatprep.subr.bf16.mxu0 0
      %477 = vmatpush2.bf16.msra.mxu0 0
      %478 = vmatprep.subr.bf16.mxu0 0
      %479 = vmatpush2.bf16.msra.mxu0 0
      %480 = vmatprep.subr.bf16.mxu0 0
      %481 = vmatpush2.bf16.msra.mxu0 0
      %482 = vmatprep.subr.bf16.mxu0 0
      %483 = vmatpush2.bf16.msra.mxu0 0
      %484 = vmatprep.mubr.bf16.mxu0 0
      %485 = vmatmul.mubr.bf16.gmra.mxu0 %v307
      %v486 = vpop.f32.mrf.mxu0
      %v487 = vadd.f32 %v438, %v486
      %v488 = vpop.f32.mrf.mxu0
      %v489 = vpop.f32.mrf.mxu0
      %v490 = vadd.f32 %v438, %v489
      %v491 = vpop.f32.mrf.mxu0
      %492 = vmatprep.mubr.bf16.mxu0 0
      %493 = vmatmul.mubr.bf16.gmra.mxu0 %v310
      %v494 = vpop.f32.mrf.mxu0
      %v495 = vadd.f32 %v438, %v494
      %v496 = vpop.f32.mrf.mxu0
      %v497 = vpop.f32.mrf.mxu0
      %v498 = vadd.f32 %v438, %v497
      %v499 = vpop.f32.mrf.mxu0
      %500 = vmatprep.mubr.bf16.mxu0 0
      %501 = vmatmul.mubr.bf16.gmra.mxu0 %v313
      %v502 = vpop.f32.mrf.mxu0
      %v503 = vadd.f32 %v438, %v502
      %v504 = vpop.f32.mrf.mxu0
      %v505 = vpop.f32.mrf.mxu0
      %v506 = vadd.f32 %v438, %v505
      %v507 = vpop.f32.mrf.mxu0
      %508 = vmatprep.mubr.bf16.mxu0 0
      %509 = vmatmul.mubr.bf16.gmra.mxu0 %v316
      %v510 = vpop.f32.mrf.mxu0
      %v511 = vadd.f32 %v438, %v510
      %v512 = vpop.f32.mrf.mxu0
      %v513 = vpop.f32.mrf.mxu0
      %v514 = vadd.f32 %v438, %v513
      %v515 = vpop.f32.mrf.mxu0
      %516 = vmatprep.mubr.bf16.mxu0 0
      %517 = vmatmul.mubr.bf16.gmra.mxu0 %v319
      %v518 = vpop.f32.mrf.mxu0
      %v519 = vadd.f32 %v438, %v518
      %v520 = vpop.f32.mrf.mxu0
      %v521 = vpop.f32.mrf.mxu0
      %v522 = vadd.f32 %v438, %v521
      %v523 = vpop.f32.mrf.mxu0
      %524 = vmatprep.mubr.bf16.mxu0 0
      %525 = vmatmul.mubr.bf16.gmra.mxu0 %v322
      %v526 = vpop.f32.mrf.mxu0
      %v527 = vadd.f32 %v438, %v526
      %v528 = vpop.f32.mrf.mxu0
      %v529 = vpop.f32.mrf.mxu0
      %v530 = vadd.f32 %v438, %v529
      %v531 = vpop.f32.mrf.mxu0
      %532 = vmatprep.mubr.bf16.mxu0 0
      %533 = vmatmul.mubr.bf16.gmra.mxu0 %v325
      %v534 = vpop.f32.mrf.mxu0
      %v535 = vadd.f32 %v438, %v534
      %v536 = vpop.f32.mrf.mxu0
      %v537 = vpop.f32.mrf.mxu0
      %v538 = vadd.f32 %v438, %v537
      %v539 = vpop.f32.mrf.mxu0
      %540 = vmatprep.mubr.bf16.mxu0 0
      %541 = vmatmul.mubr.bf16.gmra.mxu0 %v328
      %v542 = vpop.f32.mrf.mxu0
      %v543 = vadd.f32 %v438, %v542
      %v544 = vpop.f32.mrf.mxu0
      %v545 = vpop.f32.mrf.mxu0
      %v546 = vadd.f32 %v438, %v545
      %v547 = vpop.f32.mrf.mxu0
      %548 = vdwg.mxu0
      %s549 = scalar_lea.vmem %s1, 32
      %v550 = vld [vmem:[%s549] sm:$0xf]
      %v551 = vld [vmem:[%s549 + $0x4] sm:$0xf]
      %v552 = vld [vmem:[%s549 + $0x8] sm:$0xf]
      %v553 = vld [vmem:[%s549 + $0xc] sm:$0xf]
      %s554 = scalar_lea.vmem %s2, 2
      %v555 = vld [vmem:[%s554] sm:$0x1]
      %v557 = vlaneseq
      %v558 = vshrl.u32 %v557, 7
      %v559 = vsub.s32 0, %v558
      %v560 = vrot.slane %v555, %v559
      %v566 = vunpack.c.l.b16 %v550
      %v567 = vunpack.c.l.b16 %v551
      %v568 = vunpack.c.l.b16 %v552
      %v569 = vunpack.c.l.b16 %v553
      %v570 = vpack.c.b16 %v567, %v566
      %v571 = vpack.c.b16 %v569, %v568
      %574 = vmatprep.subr.bf16.mxu0 0
      %575 = vmatpush1.bf16.msra.mxu0 0
      %576 = vmatprep.subr.bf16.mxu0 0
      %577 = vmatpush1.bf16.msra.mxu0 0
      %578 = vmatprep.subr.bf16.mxu0 0
      %579 = vmatpush1.bf16.msra.mxu0 0
      %580 = vmatprep.subr.bf16.mxu0 0
      %581 = vmatpush1.bf16.msra.mxu0 0
      %582 = vmatprep.subr.bf16.mxu0 0
      %583 = vmatpush1.bf16.msra.mxu0 0
      %584 = vmatprep.subr.bf16.mxu0 0
      %585 = vmatpush1.bf16.msra.mxu0 0
      %586 = vmatprep.subr.bf16.mxu0 0
      %587 = vmatpush1.bf16.msra.mxu0 %v571
      %588 = vmatprep.subr.bf16.mxu0 0
      %589 = vmatpush1.bf16.msra.mxu0 %v570
      %590 = vmatprep.subr.bf16.mxu0 0
      %591 = vmatpush2.bf16.msra.mxu0 0
      %592 = vmatprep.subr.bf16.mxu0 0
      %593 = vmatpush2.bf16.msra.mxu0 0
      %594 = vmatprep.subr.bf16.mxu0 0
      %595 = vmatpush2.bf16.msra.mxu0 0
      %596 = vmatprep.subr.bf16.mxu0 0
      %597 = vmatpush2.bf16.msra.mxu0 0
      %598 = vmatprep.subr.bf16.mxu0 0
      %599 = vmatpush2.bf16.msra.mxu0 0
      %600 = vmatprep.subr.bf16.mxu0 0
      %601 = vmatpush2.bf16.msra.mxu0 0
      %602 = vmatprep.subr.bf16.mxu0 0
      %603 = vmatpush2.bf16.msra.mxu0 0
      %604 = vmatprep.subr.bf16.mxu0 0
      %605 = vmatpush2.bf16.msra.mxu0 0
      %606 = vmatprep.mubr.bf16.mxu0 0
      %607 = vmatmul.mubr.bf16.gmra.mxu0 %v307
      %v608 = vpop.f32.mrf.mxu0
      %v609 = vadd.f32 %v560, %v608
      %v610 = vpop.f32.mrf.mxu0
      %v611 = vpop.f32.mrf.mxu0
      %v612 = vadd.f32 %v560, %v611
      %v613 = vpop.f32.mrf.mxu0
      %614 = vmatprep.mubr.bf16.mxu0 0
      %615 = vmatmul.mubr.bf16.gmra.mxu0 %v310
      %v616 = vpop.f32.mrf.mxu0
      %v617 = vadd.f32 %v560, %v616
      %v618 = vpop.f32.mrf.mxu0
      %v619 = vpop.f32.mrf.mxu0
      %v620 = vadd.f32 %v560, %v619
      %v621 = vpop.f32.mrf.mxu0
      %622 = vmatprep.mubr.bf16.mxu0 0
      %623 = vmatmul.mubr.bf16.gmra.mxu0 %v313
      %v624 = vpop.f32.mrf.mxu0
      %v625 = vadd.f32 %v560, %v624
      %v626 = vpop.f32.mrf.mxu0
      %v627 = vpop.f32.mrf.mxu0
      %v628 = vadd.f32 %v560, %v627
      %v629 = vpop.f32.mrf.mxu0
      %630 = vmatprep.mubr.bf16.mxu0 0
      %631 = vmatmul.mubr.bf16.gmra.mxu0 %v316
      %v632 = vpop.f32.mrf.mxu0
      %v633 = vadd.f32 %v560, %v632
      %v634 = vpop.f32.mrf.mxu0
      %v635 = vpop.f32.mrf.mxu0
      %v636 = vadd.f32 %v560, %v635
      %v637 = vpop.f32.mrf.mxu0
      %638 = vmatprep.mubr.bf16.mxu0 0
      %639 = vmatmul.mubr.bf16.gmra.mxu0 %v319
      %v640 = vpop.f32.mrf.mxu0
      %v641 = vadd.f32 %v560, %v640
      %v642 = vpop.f32.mrf.mxu0
      %v643 = vpop.f32.mrf.mxu0
      %v644 = vadd.f32 %v560, %v643
      %v645 = vpop.f32.mrf.mxu0
      %646 = vmatprep.mubr.bf16.mxu0 0
      %647 = vmatmul.mubr.bf16.gmra.mxu0 %v322
      %v648 = vpop.f32.mrf.mxu0
      %v649 = vadd.f32 %v560, %v648
      %v650 = vpop.f32.mrf.mxu0
      %v651 = vpop.f32.mrf.mxu0
      %v652 = vadd.f32 %v560, %v651
      %v653 = vpop.f32.mrf.mxu0
      %654 = vmatprep.mubr.bf16.mxu0 0
      %655 = vmatmul.mubr.bf16.gmra.mxu0 %v325
      %v656 = vpop.f32.mrf.mxu0
      %v657 = vadd.f32 %v560, %v656
      %v658 = vpop.f32.mrf.mxu0
      %v659 = vpop.f32.mrf.mxu0
      %v660 = vadd.f32 %v560, %v659
      %v661 = vpop.f32.mrf.mxu0
      %662 = vmatprep.mubr.bf16.mxu0 0
      %663 = vmatmul.mubr.bf16.gmra.mxu0 %v328
      %v664 = vpop.f32.mrf.mxu0
      %v665 = vadd.f32 %v560, %v664
      %v666 = vpop.f32.mrf.mxu0
      %v667 = vpop.f32.mrf.mxu0
      %v668 = vadd.f32 %v560, %v667
      %v669 = vpop.f32.mrf.mxu0
      %670 = vdwg.mxu0
      %v671 = vld [vmem:[%s3] sm:$0xf]
      %v672 = vld [vmem:[%s3 + $0x4] sm:$0xf]
      %v673 = vld [vmem:[%s3 + $0x8] sm:$0xf]
      %v674 = vld [vmem:[%s3 + $0xc] sm:$0xf]
      %s675 = scalar_lea.vmem %s3, 16
      %v676 = vld [vmem:[%s675] sm:$0xf]
      %v677 = vld [vmem:[%s675 + $0x4] sm:$0xf]
      %v678 = vld [vmem:[%s675 + $0x8] sm:$0xf]
      %v679 = vld [vmem:[%s675 + $0xc] sm:$0xf]
      %s680 = scalar_lea.vmem %s3, 32
      %v681 = vld [vmem:[%s680] sm:$0xf]
      %v682 = vld [vmem:[%s680 + $0x4] sm:$0xf]
      %v683 = vld [vmem:[%s680 + $0x8] sm:$0xf]
      %v684 = vld [vmem:[%s680 + $0xc] sm:$0xf]
      %v685 = vld [vmem:[%s4] sm:$0x1]
      %s686 = scalar_lea.vmem %s4, 1
      %v687 = vld [vmem:[%s686] sm:$0x1]
      %s688 = scalar_lea.vmem %s4, 2
      %v689 = vld [vmem:[%s688] sm:$0x1]
      %v691 = vlaneseq
      %v692 = vshrl.u32 %v691, 7
      %v693 = vsub.s32 0, %v692
      %v694 = vrot.slane %v685, %v693
      %v700 = vunpack.c.l.b16 %v671
      %v701 = vunpack.c.l.b16 %v672
      %v702 = vunpack.c.l.b16 %v673
      %v703 = vunpack.c.l.b16 %v674
      %v704 = vpack.c.b16 %v701, %v700
      %v705 = vpack.c.b16 %v703, %v702
      %v709 = vsel %vm305, 0, 0
      %711 = vmatprep.subr.bf16.mxu0 0
      %712 = vmatpush1.bf16.msra.mxu0 0
      %713 = vmatprep.subr.bf16.mxu0 0
      %714 = vmatpush1.bf16.msra.mxu0 0
      %715 = vmatprep.subr.bf16.mxu0 0
      %716 = vmatpush1.bf16.msra.mxu0 0
      %717 = vmatprep.subr.bf16.mxu0 0
      %718 = vmatpush1.bf16.msra.mxu0 0
      %719 = vmatprep.subr.bf16.mxu0 0
      %720 = vmatpush1.bf16.msra.mxu0 0
      %721 = vmatprep.subr.bf16.mxu0 0
      %722 = vmatpush1.bf16.msra.mxu0 0
      %723 = vmatprep.subr.bf16.mxu0 0
      %724 = vmatpush1.bf16.msra.mxu0 %v705
      %725 = vmatprep.subr.bf16.mxu0 0
      %726 = vmatpush1.bf16.msra.mxu0 %v704
      %727 = vmatprep.subr.bf16.mxu0 0
      %728 = vmatpush2.bf16.msra.mxu0 0
      %729 = vmatprep.subr.bf16.mxu0 0
      %730 = vmatpush2.bf16.msra.mxu0 0
      %731 = vmatprep.subr.bf16.mxu0 0
      %732 = vmatpush2.bf16.msra.mxu0 0
      %733 = vmatprep.subr.bf16.mxu0 0
      %734 = vmatpush2.bf16.msra.mxu0 0
      %735 = vmatprep.subr.bf16.mxu0 0
      %736 = vmatpush2.bf16.msra.mxu0 0
      %737 = vmatprep.subr.bf16.mxu0 0
      %738 = vmatpush2.bf16.msra.mxu0 0
      %739 = vmatprep.subr.bf16.mxu0 0
      %740 = vmatpush2.bf16.msra.mxu0 0
      %741 = vmatprep.subr.bf16.mxu0 0
      %742 = vmatpush2.bf16.msra.mxu0 0
      %743 = vmatprep.mubr.bf16.mxu0 0
      %744 = vmatmul.mubr.bf16.gmra.mxu0 %v709
      %v745 = vpop.f32.mrf.mxu0
      %v746 = vadd.f32 %v694, %v745
      %v747 = vpop.f32.mrf.mxu0
      %v748 = vpop.f32.mrf.mxu0
      %v749 = vadd.f32 %v694, %v748
      %v750 = vpop.f32.mrf.mxu0
      %751 = vdwg.mxu0
      %v753 = vlaneseq
      %v754 = vshrl.u32 %v753, 7
      %v755 = vsub.s32 0, %v754
      %v756 = vrot.slane %v687, %v755
      %v762 = vunpack.c.l.b16 %v676
      %v763 = vunpack.c.l.b16 %v677
      %v764 = vunpack.c.l.b16 %v678
      %v765 = vunpack.c.l.b16 %v679
      %v766 = vpack.c.b16 %v763, %v762
      %v767 = vpack.c.b16 %v765, %v764
      %770 = vmatprep.subr.bf16.mxu0 0
      %771 = vmatpush1.bf16.msra.mxu0 0
      %772 = vmatprep.subr.bf16.mxu0 0
      %773 = vmatpush1.bf16.msra.mxu0 0
      %774 = vmatprep.subr.bf16.mxu0 0
      %775 = vmatpush1.bf16.msra.mxu0 0
      %776 = vmatprep.subr.bf16.mxu0 0
      %777 = vmatpush1.bf16.msra.mxu0 0
      %778 = vmatprep.subr.bf16.mxu0 0
      %779 = vmatpush1.bf16.msra.mxu0 0
      %780 = vmatprep.subr.bf16.mxu0 0
      %781 = vmatpush1.bf16.msra.mxu0 0
      %782 = vmatprep.subr.bf16.mxu0 0
      %783 = vmatpush1.bf16.msra.mxu0 %v767
      %784 = vmatprep.subr.bf16.mxu0 0
      %785 = vmatpush1.bf16.msra.mxu0 %v766
      %786 = vmatprep.subr.bf16.mxu0 0
      %787 = vmatpush2.bf16.msra.mxu0 0
      %788 = vmatprep.subr.bf16.mxu0 0
      %789 = vmatpush2.bf16.msra.mxu0 0
      %790 = vmatprep.subr.bf16.mxu0 0
      %791 = vmatpush2.bf16.msra.mxu0 0
      %792 = vmatprep.subr.bf16.mxu0 0
      %793 = vmatpush2.bf16.msra.mxu0 0
      %794 = vmatprep.subr.bf16.mxu0 0
      %795 = vmatpush2.bf16.msra.mxu0 0
      %796 = vmatprep.subr.bf16.mxu0 0
      %797 = vmatpush2.bf16.msra.mxu0 0
      %798 = vmatprep.subr.bf16.mxu0 0
      %799 = vmatpush2.bf16.msra.mxu0 0
      %800 = vmatprep.subr.bf16.mxu0 0
      %801 = vmatpush2.bf16.msra.mxu0 0
      %802 = vmatprep.mubr.bf16.mxu0 0
      %803 = vmatmul.mubr.bf16.gmra.mxu0 %v709
      %v804 = vpop.f32.mrf.mxu0
      %v805 = vadd.f32 %v756, %v804
      %v806 = vpop.f32.mrf.mxu0
      %v807 = vpop.f32.mrf.mxu0
      %v808 = vadd.f32 %v756, %v807
      %v809 = vpop.f32.mrf.mxu0
      %810 = vdwg.mxu0
      %v812 = vlaneseq
      %v813 = vshrl.u32 %v812, 7
      %v814 = vsub.s32 0, %v813
      %v815 = vrot.slane %v689, %v814
      %v821 = vunpack.c.l.b16 %v681
      %v822 = vunpack.c.l.b16 %v682
      %v823 = vunpack.c.l.b16 %v683
      %v824 = vunpack.c.l.b16 %v684
      %v825 = vpack.c.b16 %v822, %v821
      %v826 = vpack.c.b16 %v824, %v823
      %829 = vmatprep.subr.bf16.mxu0 0
      %830 = vmatpush1.bf16.msra.mxu0 0
      %831 = vmatprep.subr.bf16.mxu0 0
      %832 = vmatpush1.bf16.msra.mxu0 0
      %833 = vmatprep.subr.bf16.mxu0 0
      %834 = vmatpush1.bf16.msra.mxu0 0
      %835 = vmatprep.subr.bf16.mxu0 0
      %836 = vmatpush1.bf16.msra.mxu0 0
      %837 = vmatprep.subr.bf16.mxu0 0
      %838 = vmatpush1.bf16.msra.mxu0 0
      %839 = vmatprep.subr.bf16.mxu0 0
      %840 = vmatpush1.bf16.msra.mxu0 0
      %841 = vmatprep.subr.bf16.mxu0 0
      %842 = vmatpush1.bf16.msra.mxu0 %v826
      %843 = vmatprep.subr.bf16.mxu0 0
      %844 = vmatpush1.bf16.msra.mxu0 %v825
      %845 = vmatprep.subr.bf16.mxu0 0
      %846 = vmatpush2.bf16.msra.mxu0 0
      %847 = vmatprep.subr.bf16.mxu0 0
      %848 = vmatpush2.bf16.msra.mxu0 0
      %849 = vmatprep.subr.bf16.mxu0 0
      %850 = vmatpush2.bf16.msra.mxu0 0
      %851 = vmatprep.subr.bf16.mxu0 0
      %852 = vmatpush2.bf16.msra.mxu0 0
      %853 = vmatprep.subr.bf16.mxu0 0
      %854 = vmatpush2.bf16.msra.mxu0 0
      %855 = vmatprep.subr.bf16.mxu0 0
      %856 = vmatpush2.bf16.msra.mxu0 0
      %857 = vmatprep.subr.bf16.mxu0 0
      %858 = vmatpush2.bf16.msra.mxu0 0
      %859 = vmatprep.subr.bf16.mxu0 0
      %860 = vmatpush2.bf16.msra.mxu0 0
      %861 = vmatprep.mubr.bf16.mxu0 0
      %862 = vmatmul.mubr.bf16.gmra.mxu0 %v709
      %v863 = vpop.f32.mrf.mxu0
      %v864 = vadd.f32 %v815, %v863
      %v865 = vpop.f32.mrf.mxu0
      %v866 = vpop.f32.mrf.mxu0
      %v867 = vadd.f32 %v815, %v866
      %v868 = vpop.f32.mrf.mxu0
      %869 = vdwg.mxu0
      %v870 = vadd.f32 %v365, %v746
      %v871 = vadd.f32 %v368, %v749
      %v872 = vxor.u32 %v870, 2147483648
      %v873 = vxor.u32 %v871, 2147483648
      %v874 = vmul.f32 %v872, 1.442695
      %v875 = vpow.pop %v874
      %v876 = vmul.f32 %v873, 1.442695
      %v877 = vpow.pop %v876
      %v878 = vadd.f32 %v875, 1.0
      %v879 = vadd.f32 %v877, 1.0
      %v880 = vrcp.pop %v878
      %v881 = vmul.f32 1.0, %v880
      %v882 = vrcp.pop %v879
      %v883 = vmul.f32 1.0, %v882
      %v884 = vadd.f32 %v487, %v805
      %v885 = vadd.f32 %v490, %v808
      %v886 = vxor.u32 %v884, 2147483648
      %v887 = vxor.u32 %v885, 2147483648
      %v888 = vmul.f32 %v886, 1.442695
      %v889 = vpow.pop %v888
      %v890 = vmul.f32 %v887, 1.442695
      %v891 = vpow.pop %v890
      %v892 = vadd.f32 %v889, 1.0
      %v893 = vadd.f32 %v891, 1.0
      %v894 = vrcp.pop %v892
      %v895 = vmul.f32 1.0, %v894
      %v896 = vrcp.pop %v893
      %v897 = vmul.f32 1.0, %v896
      %v898 = vmul.f32 %v881, %v864
      %v899 = vmul.f32 %v883, %v867
      %v900 = vadd.f32 %v609, %v898
      %v901 = vadd.f32 %v612, %v899
      %v902 = vtanh.pop %v900
      %v903 = vtanh.pop %v901
      %v904 = vsub.f32 1.0, %v895
      %v905 = vsub.f32 1.0, %v897
      %v906 = vmul.f32 %v904, %v902
      %v907 = vmul.f32 %v905, %v903
      %v908 = vmul.f32 %v895, 0.0
      %v909 = vmul.f32 %v897, 0.0
      %v910 = vadd.f32 %v906, %v908
      %v911 = vadd.f32 %v907, %v909
      %912 = vst.msk [vmem:[%s224] sm:$0xff] %vm305, %v910
      %913 = vst.msk [vmem:[%s224 + $0x8] sm:$0xff] %vm305, %v911
      %v914 = vpack.c.bf16 %v911, %v910
      %v916 = vsel %vm305, %v914, 0
      %918 = vmatprep.subr.bf16.mxu0 0
      %919 = vmatpush1.bf16.msra.mxu0 0
      %920 = vmatprep.subr.bf16.mxu0 0
      %921 = vmatpush1.bf16.msra.mxu0 0
      %922 = vmatprep.subr.bf16.mxu0 0
      %923 = vmatpush1.bf16.msra.mxu0 0
      %924 = vmatprep.subr.bf16.mxu0 0
      %925 = vmatpush1.bf16.msra.mxu0 0
      %926 = vmatprep.subr.bf16.mxu0 0
      %927 = vmatpush1.bf16.msra.mxu0 0
      %928 = vmatprep.subr.bf16.mxu0 0
      %929 = vmatpush1.bf16.msra.mxu0 0
      %930 = vmatprep.subr.bf16.mxu0 0
      %931 = vmatpush1.bf16.msra.mxu0 %v705
      %932 = vmatprep.subr.bf16.mxu0 0
      %933 = vmatpush1.bf16.msra.mxu0 %v704
      %934 = vmatprep.subr.bf16.mxu0 0
      %935 = vmatpush2.bf16.msra.mxu0 0
      %936 = vmatprep.subr.bf16.mxu0 0
      %937 = vmatpush2.bf16.msra.mxu0 0
      %938 = vmatprep.subr.bf16.mxu0 0
      %939 = vmatpush2.bf16.msra.mxu0 0
      %940 = vmatprep.subr.bf16.mxu0 0
      %941 = vmatpush2.bf16.msra.mxu0 0
      %942 = vmatprep.subr.bf16.mxu0 0
      %943 = vmatpush2.bf16.msra.mxu0 0
      %944 = vmatprep.subr.bf16.mxu0 0
      %945 = vmatpush2.bf16.msra.mxu0 0
      %946 = vmatprep.subr.bf16.mxu0 0
      %947 = vmatpush2.bf16.msra.mxu0 0
      %948 = vmatprep.subr.bf16.mxu0 0
      %949 = vmatpush2.bf16.msra.mxu0 0
      %950 = vmatprep.mubr.bf16.mxu0 0
      %951 = vmatmul.mubr.bf16.gmra.mxu0 %v916
      %v952 = vpop.f32.mrf.mxu0
      %v953 = vadd.f32 %v694, %v952
      %v954 = vpop.f32.mrf.mxu0
      %v955 = vpop.f32.mrf.mxu0
      %v956 = vadd.f32 %v694, %v955
      %v957 = vpop.f32.mrf.mxu0
      %958 = vdwg.mxu0
      %959 = vmatprep.subr.bf16.mxu0 0
      %960 = vmatpush1.bf16.msra.mxu0 0
      %961 = vmatprep.subr.bf16.mxu0 0
      %962 = vmatpush1.bf16.msra.mxu0 0
      %963 = vmatprep.subr.bf16.mxu0 0
      %964 = vmatpush1.bf16.msra.mxu0 0
      %965 = vmatprep.subr.bf16.mxu0 0
      %966 = vmatpush1.bf16.msra.mxu0 0
      %967 = vmatprep.subr.bf16.mxu0 0
      %968 = vmatpush1.bf16.msra.mxu0 0
      %969 = vmatprep.subr.bf16.mxu0 0
      %970 = vmatpush1.bf16.msra.mxu0 0
      %971 = vmatprep.subr.bf16.mxu0 0
      %972 = vmatpush1.bf16.msra.mxu0 %v767
      %973 = vmatprep.subr.bf16.mxu0 0
      %974 = vmatpush1.bf16.msra.mxu0 %v766
      %975 = vmatprep.subr.bf16.mxu0 0
      %976 = vmatpush2.bf16.msra.mxu0 0
      %977 = vmatprep.subr.bf16.mxu0 0
      %978 = vmatpush2.bf16.msra.mxu0 0
      %979 = vmatprep.subr.bf16.mxu0 0
      %980 = vmatpush2.bf16.msra.mxu0 0
      %981 = vmatprep.subr.bf16.mxu0 0
      %982 = vmatpush2.bf16.msra.mxu0 0
      %983 = vmatprep.subr.bf16.mxu0 0
      %984 = vmatpush2.bf16.msra.mxu0 0
      %985 = vmatprep.subr.bf16.mxu0 0
      %986 = vmatpush2.bf16.msra.mxu0 0
      %987 = vmatprep.subr.bf16.mxu0 0
      %988 = vmatpush2.bf16.msra.mxu0 0
      %989 = vmatprep.subr.bf16.mxu0 0
      %990 = vmatpush2.bf16.msra.mxu0 0
      %991 = vmatprep.mubr.bf16.mxu0 0
      %992 = vmatmul.mubr.bf16.gmra.mxu0 %v916
      %v993 = vpop.f32.mrf.mxu0
      %v994 = vadd.f32 %v756, %v993
      %v995 = vpop.f32.mrf.mxu0
      %v996 = vpop.f32.mrf.mxu0
      %v997 = vadd.f32 %v756, %v996
      %v998 = vpop.f32.mrf.mxu0
      %999 = vdwg.mxu0
      %1000 = vmatprep.subr.bf16.mxu0 0
      %1001 = vmatpush1.bf16.msra.mxu0 0
      %1002 = vmatprep.subr.bf16.mxu0 0
      %1003 = vmatpush1.bf16.msra.mxu0 0
      %1004 = vmatprep.subr.bf16.mxu0 0
      %1005 = vmatpush1.bf16.msra.mxu0 0
      %1006 = vmatprep.subr.bf16.mxu0 0
      %1007 = vmatpush1.bf16.msra.mxu0 0
      %1008 = vmatprep.subr.bf16.mxu0 0
      %1009 = vmatpush1.bf16.msra.mxu0 0
      %1010 = vmatprep.subr.bf16.mxu0 0
      %1011 = vmatpush1.bf16.msra.mxu0 0
      %1012 = vmatprep.subr.bf16.mxu0 0
      %1013 = vmatpush1.bf16.msra.mxu0 %v826
      %1014 = vmatprep.subr.bf16.mxu0 0
      %1015 = vmatpush1.bf16.msra.mxu0 %v825
      %1016 = vmatprep.subr.bf16.mxu0 0
      %1017 = vmatpush2.bf16.msra.mxu0 0
      %1018 = vmatprep.subr.bf16.mxu0 0
      %1019 = vmatpush2.bf16.msra.mxu0 0
      %1020 = vmatprep.subr.bf16.mxu0 0
      %1021 = vmatpush2.bf16.msra.mxu0 0
      %1022 = vmatprep.subr.bf16.mxu0 0
      %1023 = vmatpush2.bf16.msra.mxu0 0
      %1024 = vmatprep.subr.bf16.mxu0 0
      %1025 = vmatpush2.bf16.msra.mxu0 0
      %1026 = vmatprep.subr.bf16.mxu0 0
      %1027 = vmatpush2.bf16.msra.mxu0 0
      %1028 = vmatprep.subr.bf16.mxu0 0
      %1029 = vmatpush2.bf16.msra.mxu0 0
      %1030 = vmatprep.subr.bf16.mxu0 0
      %1031 = vmatpush2.bf16.msra.mxu0 0
      %1032 = vmatprep.mubr.bf16.mxu0 0
      %1033 = vmatmul.mubr.bf16.gmra.mxu0 %v916
      %v1034 = vpop.f32.mrf.mxu0
      %v1035 = vadd.f32 %v815, %v1034
      %v1036 = vpop.f32.mrf.mxu0
      %v1037 = vpop.f32.mrf.mxu0
      %v1038 = vadd.f32 %v815, %v1037
      %v1039 = vpop.f32.mrf.mxu0
      %1040 = vdwg.mxu0
      %v1041 = vadd.f32 %v373, %v953
      %v1042 = vadd.f32 %v376, %v956
      %v1043 = vxor.u32 %v1041, 2147483648
      %v1044 = vxor.u32 %v1042, 2147483648
      %v1045 = vmul.f32 %v1043, 1.442695
      %v1046 = vpow.pop %v1045
      %v1047 = vmul.f32 %v1044, 1.442695
      %v1048 = vpow.pop %v1047
      %v1049 = vadd.f32 %v1046, 1.0
      %v1050 = vadd.f32 %v1048, 1.0
      %v1051 = vrcp.pop %v1049
      %v1052 = vmul.f32 1.0, %v1051
      %v1053 = vrcp.pop %v1050
      %v1054 = vmul.f32 1.0, %v1053
      %v1055 = vadd.f32 %v495, %v994
      %v1056 = vadd.f32 %v498, %v997
      %v1057 = vxor.u32 %v1055, 2147483648
      %v1058 = vxor.u32 %v1056, 2147483648
      %v1059 = vmul.f32 %v1057, 1.442695
      %v1060 = vpow.pop %v1059
      %v1061 = vmul.f32 %v1058, 1.442695
      %v1062 = vpow.pop %v1061
      %v1063 = vadd.f32 %v1060, 1.0
      %v1064 = vadd.f32 %v1062, 1.0
      %v1065 = vrcp.pop %v1063
      %v1066 = vmul.f32 1.0, %v1065
      %v1067 = vrcp.pop %v1064
      %v1068 = vmul.f32 1.0, %v1067
      %v1069 = vmul.f32 %v1052, %v1035
      %v1070 = vmul.f32 %v1054, %v1038
      %v1071 = vadd.f32 %v617, %v1069
      %v1072 = vadd.f32 %v620, %v1070
      %v1073 = vtanh.pop %v1071
      %v1074 = vtanh.pop %v1072
      %v1075 = vsub.f32 1.0, %v1066
      %v1076 = vsub.f32 1.0, %v1068
      %v1077 = vmul.f32 %v1075, %v1073
      %v1078 = vmul.f32 %v1076, %v1074
      %v1079 = vmul.f32 %v1066, %v910
      %v1080 = vmul.f32 %v1068, %v911
      %v1081 = vadd.f32 %v1077, %v1079
      %v1082 = vadd.f32 %v1078, %v1080
      %1083 = vst.msk [vmem:[%s224 + $0x10] sm:$0xff] %vm305, %v1081
      %1084 = vst.msk [vmem:[%s224 + $0x18] sm:$0xff] %vm305, %v1082
      %v1085 = vpack.c.bf16 %v1082, %v1081
      %v1087 = vsel %vm305, %v1085, 0
      %1089 = vmatprep.subr.bf16.mxu0 0
      %1090 = vmatpush1.bf16.msra.mxu0 0
      %1091 = vmatprep.subr.bf16.mxu0 0
      %1092 = vmatpush1.bf16.msra.mxu0 0
      %1093 = vmatprep.subr.bf16.mxu0 0
      %1094 = vmatpush1.bf16.msra.mxu0 0
      %1095 = vmatprep.subr.bf16.mxu0 0
      %1096 = vmatpush1.bf16.msra.mxu0 0
      %1097 = vmatprep.subr.bf16.mxu0 0
      %1098 = vmatpush1.bf16.msra.mxu0 0
      %1099 = vmatprep.subr.bf16.mxu0 0
      %1100 = vmatpush1.bf16.msra.mxu0 0
      %1101 = vmatprep.subr.bf16.mxu0 0
      %1102 = vmatpush1.bf16.msra.mxu0 %v705
      %1103 = vmatprep.subr.bf16.mxu0 0
      %1104 = vmatpush1.bf16.msra.mxu0 %v704
      %1105 = vmatprep.subr.bf16.mxu0 0
      %1106 = vmatpush2.bf16.msra.mxu0 0
      %1107 = vmatprep.subr.bf16.mxu0 0
      %1108 = vmatpush2.bf16.msra.mxu0 0
      %1109 = vmatprep.subr.bf16.mxu0 0
      %1110 = vmatpush2.bf16.msra.mxu0 0
      %1111 = vmatprep.subr.bf16.mxu0 0
      %1112 = vmatpush2.bf16.msra.mxu0 0
      %1113 = vmatprep.subr.bf16.mxu0 0
      %1114 = vmatpush2.bf16.msra.mxu0 0
      %1115 = vmatprep.subr.bf16.mxu0 0
      %1116 = vmatpush2.bf16.msra.mxu0 0
      %1117 = vmatprep.subr.bf16.mxu0 0
      %1118 = vmatpush2.bf16.msra.mxu0 0
      %1119 = vmatprep.subr.bf16.mxu0 0
      %1120 = vmatpush2.bf16.msra.mxu0 0
      %1121 = vmatprep.mubr.bf16.mxu0 0
      %1122 = vmatmul.mubr.bf16.gmra.mxu0 %v1087
      %v1123 = vpop.f32.mrf.mxu0
      %v1124 = vadd.f32 %v694, %v1123
      %v1125 = vpop.f32.mrf.mxu0
      %v1126 = vpop.f32.mrf.mxu0
      %v1127 = vadd.f32 %v694, %v1126
      %v1128 = vpop.f32.mrf.mxu0
      %1129 = vdwg.mxu0
      %1130 = vmatprep.subr.bf16.mxu0 0
      %1131 = vmatpush1.bf16.msra.mxu0 0
      %1132 = vmatprep.subr.bf16.mxu0 0
      %1133 = vmatpush1.bf16.msra.mxu0 0
      %1134 = vmatprep.subr.bf16.mxu0 0
      %1135 = vmatpush1.bf16.msra.mxu0 0
      %1136 = vmatprep.subr.bf16.mxu0 0
      %1137 = vmatpush1.bf16.msra.mxu0 0
      %1138 = vmatprep.subr.bf16.mxu0 0
      %1139 = vmatpush1.bf16.msra.mxu0 0
      %1140 = vmatprep.subr.bf16.mxu0 0
      %1141 = vmatpush1.bf16.msra.mxu0 0
      %1142 = vmatprep.subr.bf16.mxu0 0
      %1143 = vmatpush1.bf16.msra.mxu0 %v767
      %1144 = vmatprep.subr.bf16.mxu0 0
      %1145 = vmatpush1.bf16.msra.mxu0 %v766
      %1146 = vmatprep.subr.bf16.mxu0 0
      %1147 = vmatpush2.bf16.msra.mxu0 0
      %1148 = vmatprep.subr.bf16.mxu0 0
      %1149 = vmatpush2.bf16.msra.mxu0 0
      %1150 = vmatprep.subr.bf16.mxu0 0
      %1151 = vmatpush2.bf16.msra.mxu0 0
      %1152 = vmatprep.subr.bf16.mxu0 0
      %1153 = vmatpush2.bf16.msra.mxu0 0
      %1154 = vmatprep.subr.bf16.mxu0 0
      %1155 = vmatpush2.bf16.msra.mxu0 0
      %1156 = vmatprep.subr.bf16.mxu0 0
      %1157 = vmatpush2.bf16.msra.mxu0 0
      %1158 = vmatprep.subr.bf16.mxu0 0
      %1159 = vmatpush2.bf16.msra.mxu0 0
      %1160 = vmatprep.subr.bf16.mxu0 0
      %1161 = vmatpush2.bf16.msra.mxu0 0
      %1162 = vmatprep.mubr.bf16.mxu0 0
      %1163 = vmatmul.mubr.bf16.gmra.mxu0 %v1087
      %v1164 = vpop.f32.mrf.mxu0
      %v1165 = vadd.f32 %v756, %v1164
      %v1166 = vpop.f32.mrf.mxu0
      %v1167 = vpop.f32.mrf.mxu0
      %v1168 = vadd.f32 %v756, %v1167
      %v1169 = vpop.f32.mrf.mxu0
      %1170 = vdwg.mxu0
      %1171 = vmatprep.subr.bf16.mxu0 0
      %1172 = vmatpush1.bf16.msra.mxu0 0
      %1173 = vmatprep.subr.bf16.mxu0 0
      %1174 = vmatpush1.bf16.msra.mxu0 0
      %1175 = vmatprep.subr.bf16.mxu0 0
      %1176 = vmatpush1.bf16.msra.mxu0 0
      %1177 = vmatprep.subr.bf16.mxu0 0
      %1178 = vmatpush1.bf16.msra.mxu0 0
      %1179 = vmatprep.subr.bf16.mxu0 0
      %1180 = vmatpush1.bf16.msra.mxu0 0
      %1181 = vmatprep.subr.bf16.mxu0 0
      %1182 = vmatpush1.bf16.msra.mxu0 0
      %1183 = vmatprep.subr.bf16.mxu0 0
      %1184 = vmatpush1.bf16.msra.mxu0 %v826
      %1185 = vmatprep.subr.bf16.mxu0 0
      %1186 = vmatpush1.bf16.msra.mxu0 %v825
      %1187 = vmatprep.subr.bf16.mxu0 0
      %1188 = vmatpush2.bf16.msra.mxu0 0
      %1189 = vmatprep.subr.bf16.mxu0 0
      %1190 = vmatpush2.bf16.msra.mxu0 0
      %1191 = vmatprep.subr.bf16.mxu0 0
      %1192 = vmatpush2.bf16.msra.mxu0 0
      %1193 = vmatprep.subr.bf16.mxu0 0
      %1194 = vmatpush2.bf16.msra.mxu0 0
      %1195 = vmatprep.subr.bf16.mxu0 0
      %1196 = vmatpush2.bf16.msra.mxu0 0
      %1197 = vmatprep.subr.bf16.mxu0 0
      %1198 = vmatpush2.bf16.msra.mxu0 0
      %1199 = vmatprep.subr.bf16.mxu0 0
      %1200 = vmatpush2.bf16.msra.mxu0 0
      %1201 = vmatprep.subr.bf16.mxu0 0
      %1202 = vmatpush2.bf16.msra.mxu0 0
      %1203 = vmatprep.mubr.bf16.mxu0 0
      %1204 = vmatmul.mubr.bf16.gmra.mxu0 %v1087
      %v1205 = vpop.f32.mrf.mxu0
      %v1206 = vadd.f32 %v815, %v1205
      %v1207 = vpop.f32.mrf.mxu0
      %v1208 = vpop.f32.mrf.mxu0
      %v1209 = vadd.f32 %v815, %v1208
      %v1210 = vpop.f32.mrf.mxu0
      %1211 = vdwg.mxu0
      %v1212 = vadd.f32 %v381, %v1124
      %v1213 = vadd.f32 %v384, %v1127
      %v1214 = vxor.u32 %v1212, 2147483648
      %v1215 = vxor.u32 %v1213, 2147483648
      %v1216 = vmul.f32 %v1214, 1.442695
      %v1217 = vpow.pop %v1216
      %v1218 = vmul.f32 %v1215, 1.442695
      %v1219 = vpow.pop %v1218
      %v1220 = vadd.f32 %v1217, 1.0
      %v1221 = vadd.f32 %v1219, 1.0
      %v1222 = vrcp.pop %v1220
      %v1223 = vmul.f32 1.0, %v1222
      %v1224 = vrcp.pop %v1221
      %v1225 = vmul.f32 1.0, %v1224
      %v1226 = vadd.f32 %v503, %v1165
      %v1227 = vadd.f32 %v506, %v1168
      %v1228 = vxor.u32 %v1226, 2147483648
      %v1229 = vxor.u32 %v1227, 2147483648
      %v1230 = vmul.f32 %v1228, 1.442695
      %v1231 = vpow.pop %v1230
      %v1232 = vmul.f32 %v1229, 1.442695
      %v1233 = vpow.pop %v1232
      %v1234 = vadd.f32 %v1231, 1.0
      %v1235 = vadd.f32 %v1233, 1.0
      %v1236 = vrcp.pop %v1234
      %v1237 = vmul.f32 1.0, %v1236
      %v1238 = vrcp.pop %v1235
      %v1239 = vmul.f32 1.0, %v1238
      %v1240 = vmul.f32 %v1223, %v1206
      %v1241 = vmul.f32 %v1225, %v1209
      %v1242 = vadd.f32 %v625, %v1240
      %v1243 = vadd.f32 %v628, %v1241
      %v1244 = vtanh.pop %v1242
      %v1245 = vtanh.pop %v1243
      %v1246 = vsub.f32 1.0, %v1237
      %v1247 = vsub.f32 1.0, %v1239
      %v1248 = vmul.f32 %v1246, %v1244
      %v1249 = vmul.f32 %v1247, %v1245
      %v1250 = vmul.f32 %v1237, %v1081
      %v1251 = vmul.f32 %v1239, %v1082
      %v1252 = vadd.f32 %v1248, %v1250
      %v1253 = vadd.f32 %v1249, %v1251
      %1254 = vst.msk [vmem:[%s224 + $0x20] sm:$0xff] %vm305, %v1252
      %1255 = vst.msk [vmem:[%s224 + $0x28] sm:$0xff] %vm305, %v1253
      %v1256 = vpack.c.bf16 %v1253, %v1252
      %v1258 = vsel %vm305, %v1256, 0
      %1260 = vmatprep.subr.bf16.mxu0 0
      %1261 = vmatpush1.bf16.msra.mxu0 0
      %1262 = vmatprep.subr.bf16.mxu0 0
      %1263 = vmatpush1.bf16.msra.mxu0 0
      %1264 = vmatprep.subr.bf16.mxu0 0
      %1265 = vmatpush1.bf16.msra.mxu0 0
      %1266 = vmatprep.subr.bf16.mxu0 0
      %1267 = vmatpush1.bf16.msra.mxu0 0
      %1268 = vmatprep.subr.bf16.mxu0 0
      %1269 = vmatpush1.bf16.msra.mxu0 0
      %1270 = vmatprep.subr.bf16.mxu0 0
      %1271 = vmatpush1.bf16.msra.mxu0 0
      %1272 = vmatprep.subr.bf16.mxu0 0
      %1273 = vmatpush1.bf16.msra.mxu0 %v705
      %1274 = vmatprep.subr.bf16.mxu0 0
      %1275 = vmatpush1.bf16.msra.mxu0 %v704
      %1276 = vmatprep.subr.bf16.mxu0 0
      %1277 = vmatpush2.bf16.msra.mxu0 0
      %1278 = vmatprep.subr.bf16.mxu0 0
      %1279 = vmatpush2.bf16.msra.mxu0 0
      %1280 = vmatprep.subr.bf16.mxu0 0
      %1281 = vmatpush2.bf16.msra.mxu0 0
      %1282 = vmatprep.subr.bf16.mxu0 0
      %1283 = vmatpush2.bf16.msra.mxu0 0
      %1284 = vmatprep.subr.bf16.mxu0 0
      %1285 = vmatpush2.bf16.msra.mxu0 0
      %1286 = vmatprep.subr.bf16.mxu0 0
      %1287 = vmatpush2.bf16.msra.mxu0 0
      %1288 = vmatprep.subr.bf16.mxu0 0
      %1289 = vmatpush2.bf16.msra.mxu0 0
      %1290 = vmatprep.subr.bf16.mxu0 0
      %1291 = vmatpush2.bf16.msra.mxu0 0
      %1292 = vmatprep.mubr.bf16.mxu0 0
      %1293 = vmatmul.mubr.bf16.gmra.mxu0 %v1258
      %v1294 = vpop.f32.mrf.mxu0
      %v1295 = vadd.f32 %v694, %v1294
      %v1296 = vpop.f32.mrf.mxu0
      %v1297 = vpop.f32.mrf.mxu0
      %v1298 = vadd.f32 %v694, %v1297
      %v1299 = vpop.f32.mrf.mxu0
      %1300 = vdwg.mxu0
      %1301 = vmatprep.subr.bf16.mxu0 0
      %1302 = vmatpush1.bf16.msra.mxu0 0
      %1303 = vmatprep.subr.bf16.mxu0 0
      %1304 = vmatpush1.bf16.msra.mxu0 0
      %1305 = vmatprep.subr.bf16.mxu0 0
      %1306 = vmatpush1.bf16.msra.mxu0 0
      %1307 = vmatprep.subr.bf16.mxu0 0
      %1308 = vmatpush1.bf16.msra.mxu0 0
      %1309 = vmatprep.subr.bf16.mxu0 0
      %1310 = vmatpush1.bf16.msra.mxu0 0
      %1311 = vmatprep.subr.bf16.mxu0 0
      %1312 = vmatpush1.bf16.msra.mxu0 0
      %1313 = vmatprep.subr.bf16.mxu0 0
      %1314 = vmatpush1.bf16.msra.mxu0 %v767
      %1315 = vmatprep.subr.bf16.mxu0 0
      %1316 = vmatpush1.bf16.msra.mxu0 %v766
      %1317 = vmatprep.subr.bf16.mxu0 0
      %1318 = vmatpush2.bf16.msra.mxu0 0
      %1319 = vmatprep.subr.bf16.mxu0 0
      %1320 = vmatpush2.bf16.msra.mxu0 0
      %1321 = vmatprep.subr.bf16.mxu0 0
      %1322 = vmatpush2.bf16.msra.mxu0 0
      %1323 = vmatprep.subr.bf16.mxu0 0
      %1324 = vmatpush2.bf16.msra.mxu0 0
      %1325 = vmatprep.subr.bf16.mxu0 0
      %1326 = vmatpush2.bf16.msra.mxu0 0
      %1327 = vmatprep.subr.bf16.mxu0 0
      %1328 = vmatpush2.bf16.msra.mxu0 0
      %1329 = vmatprep.subr.bf16.mxu0 0
      %1330 = vmatpush2.bf16.msra.mxu0 0
      %1331 = vmatprep.subr.bf16.mxu0 0
      %1332 = vmatpush2.bf16.msra.mxu0 0
      %1333 = vmatprep.mubr.bf16.mxu0 0
      %1334 = vmatmul.mubr.bf16.gmra.mxu0 %v1258
      %v1335 = vpop.f32.mrf.mxu0
      %v1336 = vadd.f32 %v756, %v1335
      %v1337 = vpop.f32.mrf.mxu0
      %v1338 = vpop.f32.mrf.mxu0
      %v1339 = vadd.f32 %v756, %v1338
      %v1340 = vpop.f32.mrf.mxu0
      %1341 = vdwg.mxu0
      %1342 = vmatprep.subr.bf16.mxu0 0
      %1343 = vmatpush1.bf16.msra.mxu0 0
      %1344 = vmatprep.subr.bf16.mxu0 0
      %1345 = vmatpush1.bf16.msra.mxu0 0
      %1346 = vmatprep.subr.bf16.mxu0 0
      %1347 = vmatpush1.bf16.msra.mxu0 0
      %1348 = vmatprep.subr.bf16.mxu0 0
      %1349 = vmatpush1.bf16.msra.mxu0 0
      %1350 = vmatprep.subr.bf16.mxu0 0
      %1351 = vmatpush1.bf16.msra.mxu0 0
      %1352 = vmatprep.subr.bf16.mxu0 0
      %1353 = vmatpush1.bf16.msra.mxu0 0
      %1354 = vmatprep.subr.bf16.mxu0 0
      %1355 = vmatpush1.bf16.msra.mxu0 %v826
      %1356 = vmatprep.subr.bf16.mxu0 0
      %1357 = vmatpush1.bf16.msra.mxu0 %v825
      %1358 = vmatprep.subr.bf16.mxu0 0
      %1359 = vmatpush2.bf16.msra.mxu0 0
      %1360 = vmatprep.subr.bf16.mxu0 0
      %1361 = vmatpush2.bf16.msra.mxu0 0
      %1362 = vmatprep.subr.bf16.mxu0 0
      %1363 = vmatpush2.bf16.msra.mxu0 0
      %1364 = vmatprep.subr.bf16.mxu0 0
      %1365 = vmatpush2.bf16.msra.mxu0 0
      %1366 = vmatprep.subr.bf16.mxu0 0
      %1367 = vmatpush2.bf16.msra.mxu0 0
      %1368 = vmatprep.subr.bf16.mxu0 0
      %1369 = vmatpush2.bf16.msra.mxu0 0
      %1370 = vmatprep.subr.bf16.mxu0 0
      %1371 = vmatpush2.bf16.msra.mxu0 0
      %1372 = vmatprep.subr.bf16.mxu0 0
      %1373 = vmatpush2.bf16.msra.mxu0 0
      %1374 = vmatprep.mubr.bf16.mxu0 0
      %1375 = vmatmul.mubr.bf16.gmra.mxu0 %v1258
      %v1376 = vpop.f32.mrf.mxu0
      %v1377 = vadd.f32 %v815, %v1376
      %v1378 = vpop.f32.mrf.mxu0
      %v1379 = vpop.f32.mrf.mxu0
      %v1380 = vadd.f32 %v815, %v1379
      %v1381 = vpop.f32.mrf.mxu0
      %1382 = vdwg.mxu0
      %v1383 = vadd.f32 %v389, %v1295
      %v1384 = vadd.f32 %v392, %v1298
      %v1385 = vxor.u32 %v1383, 2147483648
      %v1386 = vxor.u32 %v1384, 2147483648
      %v1387 = vmul.f32 %v1385, 1.442695
      %v1388 = vpow.pop %v1387
      %v1389 = vmul.f32 %v1386, 1.442695
      %v1390 = vpow.pop %v1389
      %v1391 = vadd.f32 %v1388, 1.0
      %v1392 = vadd.f32 %v1390, 1.0
      %v1393 = vrcp.pop %v1391
      %v1394 = vmul.f32 1.0, %v1393
      %v1395 = vrcp.pop %v1392
      %v1396 = vmul.f32 1.0, %v1395
      %v1397 = vadd.f32 %v511, %v1336
      %v1398 = vadd.f32 %v514, %v1339
      %v1399 = vxor.u32 %v1397, 2147483648
      %v1400 = vxor.u32 %v1398, 2147483648
      %v1401 = vmul.f32 %v1399, 1.442695
      %v1402 = vpow.pop %v1401
      %v1403 = vmul.f32 %v1400, 1.442695
      %v1404 = vpow.pop %v1403
      %v1405 = vadd.f32 %v1402, 1.0
      %v1406 = vadd.f32 %v1404, 1.0
      %v1407 = vrcp.pop %v1405
      %v1408 = vmul.f32 1.0, %v1407
      %v1409 = vrcp.pop %v1406
      %v1410 = vmul.f32 1.0, %v1409
      %v1411 = vmul.f32 %v1394, %v1377
      %v1412 = vmul.f32 %v1396, %v1380
      %v1413 = vadd.f32 %v633, %v1411
      %v1414 = vadd.f32 %v636, %v1412
      %v1415 = vtanh.pop %v1413
      %v1416 = vtanh.pop %v1414
      %v1417 = vsub.f32 1.0, %v1408
      %v1418 = vsub.f32 1.0, %v1410
      %v1419 = vmul.f32 %v1417, %v1415
      %v1420 = vmul.f32 %v1418, %v1416
      %v1421 = vmul.f32 %v1408, %v1252
      %v1422 = vmul.f32 %v1410, %v1253
      %v1423 = vadd.f32 %v1419, %v1421
      %v1424 = vadd.f32 %v1420, %v1422
      %1425 = vst.msk [vmem:[%s224 + $0x30] sm:$0xff] %vm305, %v1423
      %1426 = vst.msk [vmem:[%s224 + $0x38] sm:$0xff] %vm305, %v1424
      %v1427 = vpack.c.bf16 %v1424, %v1423
      %v1429 = vsel %vm305, %v1427, 0
      %1431 = vmatprep.subr.bf16.mxu0 0
      %1432 = vmatpush1.bf16.msra.mxu0 0
      %1433 = vmatprep.subr.bf16.mxu0 0
      %1434 = vmatpush1.bf16.msra.mxu0 0
      %1435 = vmatprep.subr.bf16.mxu0 0
      %1436 = vmatpush1.bf16.msra.mxu0 0
      %1437 = vmatprep.subr.bf16.mxu0 0
      %1438 = vmatpush1.bf16.msra.mxu0 0
      %1439 = vmatprep.subr.bf16.mxu0 0
      %1440 = vmatpush1.bf16.msra.mxu0 0
      %1441 = vmatprep.subr.bf16.mxu0 0
      %1442 = vmatpush1.bf16.msra.mxu0 0
      %1443 = vmatprep.subr.bf16.mxu0 0
      %1444 = vmatpush1.bf16.msra.mxu0 %v705
      %1445 = vmatprep.subr.bf16.mxu0 0
      %1446 = vmatpush1.bf16.msra.mxu0 %v704
      %1447 = vmatprep.subr.bf16.mxu0 0
      %1448 = vmatpush2.bf16.msra.mxu0 0
      %1449 = vmatprep.subr.bf16.mxu0 0
      %1450 = vmatpush2.bf16.msra.mxu0 0
      %1451 = vmatprep.subr.bf16.mxu0 0
      %1452 = vmatpush2.bf16.msra.mxu0 0
      %1453 = vmatprep.subr.bf16.mxu0 0
      %1454 = vmatpush2.bf16.msra.mxu0 0
      %1455 = vmatprep.subr.bf16.mxu0 0
      %1456 = vmatpush2.bf16.msra.mxu0 0
      %1457 = vmatprep.subr.bf16.mxu0 0
      %1458 = vmatpush2.bf16.msra.mxu0 0
      %1459 = vmatprep.subr.bf16.mxu0 0
      %1460 = vmatpush2.bf16.msra.mxu0 0
      %1461 = vmatprep.subr.bf16.mxu0 0
      %1462 = vmatpush2.bf16.msra.mxu0 0
      %1463 = vmatprep.mubr.bf16.mxu0 0
      %1464 = vmatmul.mubr.bf16.gmra.mxu0 %v1429
      %v1465 = vpop.f32.mrf.mxu0
      %v1466 = vadd.f32 %v694, %v1465
      %v1467 = vpop.f32.mrf.mxu0
      %v1468 = vpop.f32.mrf.mxu0
      %v1469 = vadd.f32 %v694, %v1468
      %v1470 = vpop.f32.mrf.mxu0
      %1471 = vdwg.mxu0
      %1472 = vmatprep.subr.bf16.mxu0 0
      %1473 = vmatpush1.bf16.msra.mxu0 0
      %1474 = vmatprep.subr.bf16.mxu0 0
      %1475 = vmatpush1.bf16.msra.mxu0 0
      %1476 = vmatprep.subr.bf16.mxu0 0
      %1477 = vmatpush1.bf16.msra.mxu0 0
      %1478 = vmatprep.subr.bf16.mxu0 0
      %1479 = vmatpush1.bf16.msra.mxu0 0
      %1480 = vmatprep.subr.bf16.mxu0 0
      %1481 = vmatpush1.bf16.msra.mxu0 0
      %1482 = vmatprep.subr.bf16.mxu0 0
      %1483 = vmatpush1.bf16.msra.mxu0 0
      %1484 = vmatprep.subr.bf16.mxu0 0
      %1485 = vmatpush1.bf16.msra.mxu0 %v767
      %1486 = vmatprep.subr.bf16.mxu0 0
      %1487 = vmatpush1.bf16.msra.mxu0 %v766
      %1488 = vmatprep.subr.bf16.mxu0 0
      %1489 = vmatpush2.bf16.msra.mxu0 0
      %1490 = vmatprep.subr.bf16.mxu0 0
      %1491 = vmatpush2.bf16.msra.mxu0 0
      %1492 = vmatprep.subr.bf16.mxu0 0
      %1493 = vmatpush2.bf16.msra.mxu0 0
      %1494 = vmatprep.subr.bf16.mxu0 0
      %1495 = vmatpush2.bf16.msra.mxu0 0
      %1496 = vmatprep.subr.bf16.mxu0 0
      %1497 = vmatpush2.bf16.msra.mxu0 0
      %1498 = vmatprep.subr.bf16.mxu0 0
      %1499 = vmatpush2.bf16.msra.mxu0 0
      %1500 = vmatprep.subr.bf16.mxu0 0
      %1501 = vmatpush2.bf16.msra.mxu0 0
      %1502 = vmatprep.subr.bf16.mxu0 0
      %1503 = vmatpush2.bf16.msra.mxu0 0
      %1504 = vmatprep.mubr.bf16.mxu0 0
      %1505 = vmatmul.mubr.bf16.gmra.mxu0 %v1429
      %v1506 = vpop.f32.mrf.mxu0
      %v1507 = vadd.f32 %v756, %v1506
      %v1508 = vpop.f32.mrf.mxu0
      %v1509 = vpop.f32.mrf.mxu0
      %v1510 = vadd.f32 %v756, %v1509
      %v1511 = vpop.f32.mrf.mxu0
      %1512 = vdwg.mxu0
      %1513 = vmatprep.subr.bf16.mxu0 0
      %1514 = vmatpush1.bf16.msra.mxu0 0
      %1515 = vmatprep.subr.bf16.mxu0 0
      %1516 = vmatpush1.bf16.msra.mxu0 0
      %1517 = vmatprep.subr.bf16.mxu0 0
      %1518 = vmatpush1.bf16.msra.mxu0 0
      %1519 = vmatprep.subr.bf16.mxu0 0
      %1520 = vmatpush1.bf16.msra.mxu0 0
      %1521 = vmatprep.subr.bf16.mxu0 0
      %1522 = vmatpush1.bf16.msra.mxu0 0
      %1523 = vmatprep.subr.bf16.mxu0 0
      %1524 = vmatpush1.bf16.msra.mxu0 0
      %1525 = vmatprep.subr.bf16.mxu0 0
      %1526 = vmatpush1.bf16.msra.mxu0 %v826
      %1527 = vmatprep.subr.bf16.mxu0 0
      %1528 = vmatpush1.bf16.msra.mxu0 %v825
      %1529 = vmatprep.subr.bf16.mxu0 0
      %1530 = vmatpush2.bf16.msra.mxu0 0
      %1531 = vmatprep.subr.bf16.mxu0 0
      %1532 = vmatpush2.bf16.msra.mxu0 0
      %1533 = vmatprep.subr.bf16.mxu0 0
      %1534 = vmatpush2.bf16.msra.mxu0 0
      %1535 = vmatprep.subr.bf16.mxu0 0
      %1536 = vmatpush2.bf16.msra.mxu0 0
      %1537 = vmatprep.subr.bf16.mxu0 0
      %1538 = vmatpush2.bf16.msra.mxu0 0
      %1539 = vmatprep.subr.bf16.mxu0 0
      %1540 = vmatpush2.bf16.msra.mxu0 0
      %1541 = vmatprep.subr.bf16.mxu0 0
      %1542 = vmatpush2.bf16.msra.mxu0 0
      %1543 = vmatprep.subr.bf16.mxu0 0
      %1544 = vmatpush2.bf16.msra.mxu0 0
      %1545 = vmatprep.mubr.bf16.mxu0 0
      %1546 = vmatmul.mubr.bf16.gmra.mxu0 %v1429
      %v1547 = vpop.f32.mrf.mxu0
      %v1548 = vadd.f32 %v815, %v1547
      %v1549 = vpop.f32.mrf.mxu0
      %v1550 = vpop.f32.mrf.mxu0
      %v1551 = vadd.f32 %v815, %v1550
      %v1552 = vpop.f32.mrf.mxu0
      %1553 = vdwg.mxu0
      %v1554 = vadd.f32 %v397, %v1466
      %v1555 = vadd.f32 %v400, %v1469
      %v1556 = vxor.u32 %v1554, 2147483648
      %v1557 = vxor.u32 %v1555, 2147483648
      %v1558 = vmul.f32 %v1556, 1.442695
      %v1559 = vpow.pop %v1558
      %v1560 = vmul.f32 %v1557, 1.442695
      %v1561 = vpow.pop %v1560
      %v1562 = vadd.f32 %v1559, 1.0
      %v1563 = vadd.f32 %v1561, 1.0
      %v1564 = vrcp.pop %v1562
      %v1565 = vmul.f32 1.0, %v1564
      %v1566 = vrcp.pop %v1563
      %v1567 = vmul.f32 1.0, %v1566
      %v1568 = vadd.f32 %v519, %v1507
      %v1569 = vadd.f32 %v522, %v1510
      %v1570 = vxor.u32 %v1568, 2147483648
      %v1571 = vxor.u32 %v1569, 2147483648
      %v1572 = vmul.f32 %v1570, 1.442695
      %v1573 = vpow.pop %v1572
      %v1574 = vmul.f32 %v1571, 1.442695
      %v1575 = vpow.pop %v1574
      %v1576 = vadd.f32 %v1573, 1.0
      %v1577 = vadd.f32 %v1575, 1.0
      %v1578 = vrcp.pop %v1576
      %v1579 = vmul.f32 1.0, %v1578
      %v1580 = vrcp.pop %v1577
      %v1581 = vmul.f32 1.0, %v1580
      %v1582 = vmul.f32 %v1565, %v1548
      %v1583 = vmul.f32 %v1567, %v1551
      %v1584 = vadd.f32 %v641, %v1582
      %v1585 = vadd.f32 %v644, %v1583
      %v1586 = vtanh.pop %v1584
      %v1587 = vtanh.pop %v1585
      %v1588 = vsub.f32 1.0, %v1579
      %v1589 = vsub.f32 1.0, %v1581
      %v1590 = vmul.f32 %v1588, %v1586
      %v1591 = vmul.f32 %v1589, %v1587
      %v1592 = vmul.f32 %v1579, %v1423
      %v1593 = vmul.f32 %v1581, %v1424
      %v1594 = vadd.f32 %v1590, %v1592
      %v1595 = vadd.f32 %v1591, %v1593
      %1596 = vst.msk [vmem:[%s224 + $0x40] sm:$0xff] %vm305, %v1594
      %1597 = vst.msk [vmem:[%s224 + $0x48] sm:$0xff] %vm305, %v1595
      %v1598 = vpack.c.bf16 %v1595, %v1594
      %v1600 = vsel %vm305, %v1598, 0
      %1602 = vmatprep.subr.bf16.mxu0 0
      %1603 = vmatpush1.bf16.msra.mxu0 0
      %1604 = vmatprep.subr.bf16.mxu0 0
      %1605 = vmatpush1.bf16.msra.mxu0 0
      %1606 = vmatprep.subr.bf16.mxu0 0
      %1607 = vmatpush1.bf16.msra.mxu0 0
      %1608 = vmatprep.subr.bf16.mxu0 0
      %1609 = vmatpush1.bf16.msra.mxu0 0
      %1610 = vmatprep.subr.bf16.mxu0 0
      %1611 = vmatpush1.bf16.msra.mxu0 0
      %1612 = vmatprep.subr.bf16.mxu0 0
      %1613 = vmatpush1.bf16.msra.mxu0 0
      %1614 = vmatprep.subr.bf16.mxu0 0
      %1615 = vmatpush1.bf16.msra.mxu0 %v705
      %1616 = vmatprep.subr.bf16.mxu0 0
      %1617 = vmatpush1.bf16.msra.mxu0 %v704
      %1618 = vmatprep.subr.bf16.mxu0 0
      %1619 = vmatpush2.bf16.msra.mxu0 0
      %1620 = vmatprep.subr.bf16.mxu0 0
      %1621 = vmatpush2.bf16.msra.mxu0 0
      %1622 = vmatprep.subr.bf16.mxu0 0
      %1623 = vmatpush2.bf16.msra.mxu0 0
      %1624 = vmatprep.subr.bf16.mxu0 0
      %1625 = vmatpush2.bf16.msra.mxu0 0
      %1626 = vmatprep.subr.bf16.mxu0 0
      %1627 = vmatpush2.bf16.msra.mxu0 0
      %1628 = vmatprep.subr.bf16.mxu0 0
      %1629 = vmatpush2.bf16.msra.mxu0 0
      %1630 = vmatprep.subr.bf16.mxu0 0
      %1631 = vmatpush2.bf16.msra.mxu0 0
      %1632 = vmatprep.subr.bf16.mxu0 0
      %1633 = vmatpush2.bf16.msra.mxu0 0
      %1634 = vmatprep.mubr.bf16.mxu0 0
      %1635 = vmatmul.mubr.bf16.gmra.mxu0 %v1600
      %v1636 = vpop.f32.mrf.mxu0
      %v1637 = vadd.f32 %v694, %v1636
      %v1638 = vpop.f32.mrf.mxu0
      %v1639 = vpop.f32.mrf.mxu0
      %v1640 = vadd.f32 %v694, %v1639
      %v1641 = vpop.f32.mrf.mxu0
      %1642 = vdwg.mxu0
      %1643 = vmatprep.subr.bf16.mxu0 0
      %1644 = vmatpush1.bf16.msra.mxu0 0
      %1645 = vmatprep.subr.bf16.mxu0 0
      %1646 = vmatpush1.bf16.msra.mxu0 0
      %1647 = vmatprep.subr.bf16.mxu0 0
      %1648 = vmatpush1.bf16.msra.mxu0 0
      %1649 = vmatprep.subr.bf16.mxu0 0
      %1650 = vmatpush1.bf16.msra.mxu0 0
      %1651 = vmatprep.subr.bf16.mxu0 0
      %1652 = vmatpush1.bf16.msra.mxu0 0
      %1653 = vmatprep.subr.bf16.mxu0 0
      %1654 = vmatpush1.bf16.msra.mxu0 0
      %1655 = vmatprep.subr.bf16.mxu0 0
      %1656 = vmatpush1.bf16.msra.mxu0 %v767
      %1657 = vmatprep.subr.bf16.mxu0 0
      %1658 = vmatpush1.bf16.msra.mxu0 %v766
      %1659 = vmatprep.subr.bf16.mxu0 0
      %1660 = vmatpush2.bf16.msra.mxu0 0
      %1661 = vmatprep.subr.bf16.mxu0 0
      %1662 = vmatpush2.bf16.msra.mxu0 0
      %1663 = vmatprep.subr.bf16.mxu0 0
      %1664 = vmatpush2.bf16.msra.mxu0 0
      %1665 = vmatprep.subr.bf16.mxu0 0
      %1666 = vmatpush2.bf16.msra.mxu0 0
      %1667 = vmatprep.subr.bf16.mxu0 0
      %1668 = vmatpush2.bf16.msra.mxu0 0
      %1669 = vmatprep.subr.bf16.mxu0 0
      %1670 = vmatpush2.bf16.msra.mxu0 0
      %1671 = vmatprep.subr.bf16.mxu0 0
      %1672 = vmatpush2.bf16.msra.mxu0 0
      %1673 = vmatprep.subr.bf16.mxu0 0
      %1674 = vmatpush2.bf16.msra.mxu0 0
      %1675 = vmatprep.mubr.bf16.mxu0 0
      %1676 = vmatmul.mubr.bf16.gmra.mxu0 %v1600
      %v1677 = vpop.f32.mrf.mxu0
      %v1678 = vadd.f32 %v756, %v1677
      %v1679 = vpop.f32.mrf.mxu0
      %v1680 = vpop.f32.mrf.mxu0
      %v1681 = vadd.f32 %v756, %v1680
      %v1682 = vpop.f32.mrf.mxu0
      %1683 = vdwg.mxu0
      %1684 = vmatprep.subr.bf16.mxu0 0
      %1685 = vmatpush1.bf16.msra.mxu0 0
      %1686 = vmatprep.subr.bf16.mxu0 0
      %1687 = vmatpush1.bf16.msra.mxu0 0
      %1688 = vmatprep.subr.bf16.mxu0 0
      %1689 = vmatpush1.bf16.msra.mxu0 0
      %1690 = vmatprep.subr.bf16.mxu0 0
      %1691 = vmatpush1.bf16.msra.mxu0 0
      %1692 = vmatprep.subr.bf16.mxu0 0
      %1693 = vmatpush1.bf16.msra.mxu0 0
      %1694 = vmatprep.subr.bf16.mxu0 0
      %1695 = vmatpush1.bf16.msra.mxu0 0
      %1696 = vmatprep.subr.bf16.mxu0 0
      %1697 = vmatpush1.bf16.msra.mxu0 %v826
      %1698 = vmatprep.subr.bf16.mxu0 0
      %1699 = vmatpush1.bf16.msra.mxu0 %v825
      %1700 = vmatprep.subr.bf16.mxu0 0
      %1701 = vmatpush2.bf16.msra.mxu0 0
      %1702 = vmatprep.subr.bf16.mxu0 0
      %1703 = vmatpush2.bf16.msra.mxu0 0
      %1704 = vmatprep.subr.bf16.mxu0 0
      %1705 = vmatpush2.bf16.msra.mxu0 0
      %1706 = vmatprep.subr.bf16.mxu0 0
      %1707 = vmatpush2.bf16.msra.mxu0 0
      %1708 = vmatprep.subr.bf16.mxu0 0
      %1709 = vmatpush2.bf16.msra.mxu0 0
      %1710 = vmatprep.subr.bf16.mxu0 0
      %1711 = vmatpush2.bf16.msra.mxu0 0
      %1712 = vmatprep.subr.bf16.mxu0 0
      %1713 = vmatpush2.bf16.msra.mxu0 0
      %1714 = vmatprep.subr.bf16.mxu0 0
      %1715 = vmatpush2.bf16.msra.mxu0 0
      %1716 = vmatprep.mubr.bf16.mxu0 0
      %1717 = vmatmul.mubr.bf16.gmra.mxu0 %v1600
      %v1718 = vpop.f32.mrf.mxu0
      %v1719 = vadd.f32 %v815, %v1718
      %v1720 = vpop.f32.mrf.mxu0
      %v1721 = vpop.f32.mrf.mxu0
      %v1722 = vadd.f32 %v815, %v1721
      %v1723 = vpop.f32.mrf.mxu0
      %1724 = vdwg.mxu0
      %v1725 = vadd.f32 %v405, %v1637
      %v1726 = vadd.f32 %v408, %v1640
      %v1727 = vxor.u32 %v1725, 2147483648
      %v1728 = vxor.u32 %v1726, 2147483648
      %v1729 = vmul.f32 %v1727, 1.442695
      %v1730 = vpow.pop %v1729
      %v1731 = vmul.f32 %v1728, 1.442695
      %v1732 = vpow.pop %v1731
      %v1733 = vadd.f32 %v1730, 1.0
      %v1734 = vadd.f32 %v1732, 1.0
      %v1735 = vrcp.pop %v1733
      %v1736 = vmul.f32 1.0, %v1735
      %v1737 = vrcp.pop %v1734
      %v1738 = vmul.f32 1.0, %v1737
      %v1739 = vadd.f32 %v527, %v1678
      %v1740 = vadd.f32 %v530, %v1681
      %v1741 = vxor.u32 %v1739, 2147483648
      %v1742 = vxor.u32 %v1740, 2147483648
      %v1743 = vmul.f32 %v1741, 1.442695
      %v1744 = vpow.pop %v1743
      %v1745 = vmul.f32 %v1742, 1.442695
      %v1746 = vpow.pop %v1745
      %v1747 = vadd.f32 %v1744, 1.0
      %v1748 = vadd.f32 %v1746, 1.0
      %v1749 = vrcp.pop %v1747
      %v1750 = vmul.f32 1.0, %v1749
      %v1751 = vrcp.pop %v1748
      %v1752 = vmul.f32 1.0, %v1751
      %v1753 = vmul.f32 %v1736, %v1719
      %v1754 = vmul.f32 %v1738, %v1722
      %v1755 = vadd.f32 %v649, %v1753
      %v1756 = vadd.f32 %v652, %v1754
      %v1757 = vtanh.pop %v1755
      %v1758 = vtanh.pop %v1756
      %v1759 = vsub.f32 1.0, %v1750
      %v1760 = vsub.f32 1.0, %v1752
      %v1761 = vmul.f32 %v1759, %v1757
      %v1762 = vmul.f32 %v1760, %v1758
      %v1763 = vmul.f32 %v1750, %v1594
      %v1764 = vmul.f32 %v1752, %v1595
      %v1765 = vadd.f32 %v1761, %v1763
      %v1766 = vadd.f32 %v1762, %v1764
      %1767 = vst.msk [vmem:[%s224 + $0x50] sm:$0xff] %vm305, %v1765
      %1768 = vst.msk [vmem:[%s224 + $0x58] sm:$0xff] %vm305, %v1766
      %v1769 = vpack.c.bf16 %v1766, %v1765
      %v1771 = vsel %vm305, %v1769, 0
      %1773 = vmatprep.subr.bf16.mxu0 0
      %1774 = vmatpush1.bf16.msra.mxu0 0
      %1775 = vmatprep.subr.bf16.mxu0 0
      %1776 = vmatpush1.bf16.msra.mxu0 0
      %1777 = vmatprep.subr.bf16.mxu0 0
      %1778 = vmatpush1.bf16.msra.mxu0 0
      %1779 = vmatprep.subr.bf16.mxu0 0
      %1780 = vmatpush1.bf16.msra.mxu0 0
      %1781 = vmatprep.subr.bf16.mxu0 0
      %1782 = vmatpush1.bf16.msra.mxu0 0
      %1783 = vmatprep.subr.bf16.mxu0 0
      %1784 = vmatpush1.bf16.msra.mxu0 0
      %1785 = vmatprep.subr.bf16.mxu0 0
      %1786 = vmatpush1.bf16.msra.mxu0 %v705
      %1787 = vmatprep.subr.bf16.mxu0 0
      %1788 = vmatpush1.bf16.msra.mxu0 %v704
      %1789 = vmatprep.subr.bf16.mxu0 0
      %1790 = vmatpush2.bf16.msra.mxu0 0
      %1791 = vmatprep.subr.bf16.mxu0 0
      %1792 = vmatpush2.bf16.msra.mxu0 0
      %1793 = vmatprep.subr.bf16.mxu0 0
      %1794 = vmatpush2.bf16.msra.mxu0 0
      %1795 = vmatprep.subr.bf16.mxu0 0
      %1796 = vmatpush2.bf16.msra.mxu0 0
      %1797 = vmatprep.subr.bf16.mxu0 0
      %1798 = vmatpush2.bf16.msra.mxu0 0
      %1799 = vmatprep.subr.bf16.mxu0 0
      %1800 = vmatpush2.bf16.msra.mxu0 0
      %1801 = vmatprep.subr.bf16.mxu0 0
      %1802 = vmatpush2.bf16.msra.mxu0 0
      %1803 = vmatprep.subr.bf16.mxu0 0
      %1804 = vmatpush2.bf16.msra.mxu0 0
      %1805 = vmatprep.mubr.bf16.mxu0 0
      %1806 = vmatmul.mubr.bf16.gmra.mxu0 %v1771
      %v1807 = vpop.f32.mrf.mxu0
      %v1808 = vadd.f32 %v694, %v1807
      %v1809 = vpop.f32.mrf.mxu0
      %v1810 = vpop.f32.mrf.mxu0
      %v1811 = vadd.f32 %v694, %v1810
      %v1812 = vpop.f32.mrf.mxu0
      %1813 = vdwg.mxu0
      %1814 = vmatprep.subr.bf16.mxu0 0
      %1815 = vmatpush1.bf16.msra.mxu0 0
      %1816 = vmatprep.subr.bf16.mxu0 0
      %1817 = vmatpush1.bf16.msra.mxu0 0
      %1818 = vmatprep.subr.bf16.mxu0 0
      %1819 = vmatpush1.bf16.msra.mxu0 0
      %1820 = vmatprep.subr.bf16.mxu0 0
      %1821 = vmatpush1.bf16.msra.mxu0 0
      %1822 = vmatprep.subr.bf16.mxu0 0
      %1823 = vmatpush1.bf16.msra.mxu0 0
      %1824 = vmatprep.subr.bf16.mxu0 0
      %1825 = vmatpush1.bf16.msra.mxu0 0
      %1826 = vmatprep.subr.bf16.mxu0 0
      %1827 = vmatpush1.bf16.msra.mxu0 %v767
      %1828 = vmatprep.subr.bf16.mxu0 0
      %1829 = vmatpush1.bf16.msra.mxu0 %v766
      %1830 = vmatprep.subr.bf16.mxu0 0
      %1831 = vmatpush2.bf16.msra.mxu0 0
      %1832 = vmatprep.subr.bf16.mxu0 0
      %1833 = vmatpush2.bf16.msra.mxu0 0
      %1834 = vmatprep.subr.bf16.mxu0 0
      %1835 = vmatpush2.bf16.msra.mxu0 0
      %1836 = vmatprep.subr.bf16.mxu0 0
      %1837 = vmatpush2.bf16.msra.mxu0 0
      %1838 = vmatprep.subr.bf16.mxu0 0
      %1839 = vmatpush2.bf16.msra.mxu0 0
      %1840 = vmatprep.subr.bf16.mxu0 0
      %1841 = vmatpush2.bf16.msra.mxu0 0
      %1842 = vmatprep.subr.bf16.mxu0 0
      %1843 = vmatpush2.bf16.msra.mxu0 0
      %1844 = vmatprep.subr.bf16.mxu0 0
      %1845 = vmatpush2.bf16.msra.mxu0 0
      %1846 = vmatprep.mubr.bf16.mxu0 0
      %1847 = vmatmul.mubr.bf16.gmra.mxu0 %v1771
      %v1848 = vpop.f32.mrf.mxu0
      %v1849 = vadd.f32 %v756, %v1848
      %v1850 = vpop.f32.mrf.mxu0
      %v1851 = vpop.f32.mrf.mxu0
      %v1852 = vadd.f32 %v756, %v1851
      %v1853 = vpop.f32.mrf.mxu0
      %1854 = vdwg.mxu0
      %1855 = vmatprep.subr.bf16.mxu0 0
      %1856 = vmatpush1.bf16.msra.mxu0 0
      %1857 = vmatprep.subr.bf16.mxu0 0
      %1858 = vmatpush1.bf16.msra.mxu0 0
      %1859 = vmatprep.subr.bf16.mxu0 0
      %1860 = vmatpush1.bf16.msra.mxu0 0
      %1861 = vmatprep.subr.bf16.mxu0 0
      %1862 = vmatpush1.bf16.msra.mxu0 0
      %1863 = vmatprep.subr.bf16.mxu0 0
      %1864 = vmatpush1.bf16.msra.mxu0 0
      %1865 = vmatprep.subr.bf16.mxu0 0
      %1866 = vmatpush1.bf16.msra.mxu0 0
      %1867 = vmatprep.subr.bf16.mxu0 0
      %1868 = vmatpush1.bf16.msra.mxu0 %v826
      %1869 = vmatprep.subr.bf16.mxu0 0
      %1870 = vmatpush1.bf16.msra.mxu0 %v825
      %1871 = vmatprep.subr.bf16.mxu0 0
      %1872 = vmatpush2.bf16.msra.mxu0 0
      %1873 = vmatprep.subr.bf16.mxu0 0
      %1874 = vmatpush2.bf16.msra.mxu0 0
      %1875 = vmatprep.subr.bf16.mxu0 0
      %1876 = vmatpush2.bf16.msra.mxu0 0
      %1877 = vmatprep.subr.bf16.mxu0 0
      %1878 = vmatpush2.bf16.msra.mxu0 0
      %1879 = vmatprep.subr.bf16.mxu0 0
      %1880 = vmatpush2.bf16.msra.mxu0 0
      %1881 = vmatprep.subr.bf16.mxu0 0
      %1882 = vmatpush2.bf16.msra.mxu0 0
      %1883 = vmatprep.subr.bf16.mxu0 0
      %1884 = vmatpush2.bf16.msra.mxu0 0
      %1885 = vmatprep.subr.bf16.mxu0 0
      %1886 = vmatpush2.bf16.msra.mxu0 0
      %1887 = vmatprep.mubr.bf16.mxu0 0
      %1888 = vmatmul.mubr.bf16.gmra.mxu0 %v1771
      %v1889 = vpop.f32.mrf.mxu0
      %v1890 = vadd.f32 %v815, %v1889
      %v1891 = vpop.f32.mrf.mxu0
      %v1892 = vpop.f32.mrf.mxu0
      %v1893 = vadd.f32 %v815, %v1892
      %v1894 = vpop.f32.mrf.mxu0
      %1895 = vdwg.mxu0
      %v1896 = vadd.f32 %v413, %v1808
      %v1897 = vadd.f32 %v416, %v1811
      %v1898 = vxor.u32 %v1896, 2147483648
      %v1899 = vxor.u32 %v1897, 2147483648
      %v1900 = vmul.f32 %v1898, 1.442695
      %v1901 = vpow.pop %v1900
      %v1902 = vmul.f32 %v1899, 1.442695
      %v1903 = vpow.pop %v1902
      %v1904 = vadd.f32 %v1901, 1.0
      %v1905 = vadd.f32 %v1903, 1.0
      %v1906 = vrcp.pop %v1904
      %v1907 = vmul.f32 1.0, %v1906
      %v1908 = vrcp.pop %v1905
      %v1909 = vmul.f32 1.0, %v1908
      %v1910 = vadd.f32 %v535, %v1849
      %v1911 = vadd.f32 %v538, %v1852
      %v1912 = vxor.u32 %v1910, 2147483648
      %v1913 = vxor.u32 %v1911, 2147483648
      %v1914 = vmul.f32 %v1912, 1.442695
      %v1915 = vpow.pop %v1914
      %v1916 = vmul.f32 %v1913, 1.442695
      %v1917 = vpow.pop %v1916
      %v1918 = vadd.f32 %v1915, 1.0
      %v1919 = vadd.f32 %v1917, 1.0
      %v1920 = vrcp.pop %v1918
      %v1921 = vmul.f32 1.0, %v1920
      %v1922 = vrcp.pop %v1919
      %v1923 = vmul.f32 1.0, %v1922
      %v1924 = vmul.f32 %v1907, %v1890
      %v1925 = vmul.f32 %v1909, %v1893
      %v1926 = vadd.f32 %v657, %v1924
      %v1927 = vadd.f32 %v660, %v1925
      %v1928 = vtanh.pop %v1926
      %v1929 = vtanh.pop %v1927
      %v1930 = vsub.f32 1.0, %v1921
      %v1931 = vsub.f32 1.0, %v1923
      %v1932 = vmul.f32 %v1930, %v1928
      %v1933 = vmul.f32 %v1931, %v1929
      %v1934 = vmul.f32 %v1921, %v1765
      %v1935 = vmul.f32 %v1923, %v1766
      %v1936 = vadd.f32 %v1932, %v1934
      %v1937 = vadd.f32 %v1933, %v1935
      %1938 = vst.msk [vmem:[%s224 + $0x60] sm:$0xff] %vm305, %v1936
      %1939 = vst.msk [vmem:[%s224 + $0x68] sm:$0xff] %vm305, %v1937
      %v1940 = vpack.c.bf16 %v1937, %v1936
      %v1942 = vsel %vm305, %v1940, 0
      %1944 = vmatprep.subr.bf16.mxu0 0
      %1945 = vmatpush1.bf16.msra.mxu0 0
      %1946 = vmatprep.subr.bf16.mxu0 0
      %1947 = vmatpush1.bf16.msra.mxu0 0
      %1948 = vmatprep.subr.bf16.mxu0 0
      %1949 = vmatpush1.bf16.msra.mxu0 0
      %1950 = vmatprep.subr.bf16.mxu0 0
      %1951 = vmatpush1.bf16.msra.mxu0 0
      %1952 = vmatprep.subr.bf16.mxu0 0
      %1953 = vmatpush1.bf16.msra.mxu0 0
      %1954 = vmatprep.subr.bf16.mxu0 0
      %1955 = vmatpush1.bf16.msra.mxu0 0
      %1956 = vmatprep.subr.bf16.mxu0 0
      %1957 = vmatpush1.bf16.msra.mxu0 %v705
      %1958 = vmatprep.subr.bf16.mxu0 0
      %1959 = vmatpush1.bf16.msra.mxu0 %v704
      %1960 = vmatprep.subr.bf16.mxu0 0
      %1961 = vmatpush2.bf16.msra.mxu0 0
      %1962 = vmatprep.subr.bf16.mxu0 0
      %1963 = vmatpush2.bf16.msra.mxu0 0
      %1964 = vmatprep.subr.bf16.mxu0 0
      %1965 = vmatpush2.bf16.msra.mxu0 0
      %1966 = vmatprep.subr.bf16.mxu0 0
      %1967 = vmatpush2.bf16.msra.mxu0 0
      %1968 = vmatprep.subr.bf16.mxu0 0
      %1969 = vmatpush2.bf16.msra.mxu0 0
      %1970 = vmatprep.subr.bf16.mxu0 0
      %1971 = vmatpush2.bf16.msra.mxu0 0
      %1972 = vmatprep.subr.bf16.mxu0 0
      %1973 = vmatpush2.bf16.msra.mxu0 0
      %1974 = vmatprep.subr.bf16.mxu0 0
      %1975 = vmatpush2.bf16.msra.mxu0 0
      %1976 = vmatprep.mubr.bf16.mxu0 0
      %1977 = vmatmul.mubr.bf16.gmra.mxu0 %v1942
      %v1978 = vpop.f32.mrf.mxu0
      %v1979 = vadd.f32 %v694, %v1978
      %v1980 = vpop.f32.mrf.mxu0
      %v1981 = vpop.f32.mrf.mxu0
      %v1982 = vadd.f32 %v694, %v1981
      %v1983 = vpop.f32.mrf.mxu0
      %1984 = vdwg.mxu0
      %1985 = vmatprep.subr.bf16.mxu0 0
      %1986 = vmatpush1.bf16.msra.mxu0 0
      %1987 = vmatprep.subr.bf16.mxu0 0
      %1988 = vmatpush1.bf16.msra.mxu0 0
      %1989 = vmatprep.subr.bf16.mxu0 0
      %1990 = vmatpush1.bf16.msra.mxu0 0
      %1991 = vmatprep.subr.bf16.mxu0 0
      %1992 = vmatpush1.bf16.msra.mxu0 0
      %1993 = vmatprep.subr.bf16.mxu0 0
      %1994 = vmatpush1.bf16.msra.mxu0 0
      %1995 = vmatprep.subr.bf16.mxu0 0
      %1996 = vmatpush1.bf16.msra.mxu0 0
      %1997 = vmatprep.subr.bf16.mxu0 0
      %1998 = vmatpush1.bf16.msra.mxu0 %v767
      %1999 = vmatprep.subr.bf16.mxu0 0
      %2000 = vmatpush1.bf16.msra.mxu0 %v766
      %2001 = vmatprep.subr.bf16.mxu0 0
      %2002 = vmatpush2.bf16.msra.mxu0 0
      %2003 = vmatprep.subr.bf16.mxu0 0
      %2004 = vmatpush2.bf16.msra.mxu0 0
      %2005 = vmatprep.subr.bf16.mxu0 0
      %2006 = vmatpush2.bf16.msra.mxu0 0
      %2007 = vmatprep.subr.bf16.mxu0 0
      %2008 = vmatpush2.bf16.msra.mxu0 0
      %2009 = vmatprep.subr.bf16.mxu0 0
      %2010 = vmatpush2.bf16.msra.mxu0 0
      %2011 = vmatprep.subr.bf16.mxu0 0
      %2012 = vmatpush2.bf16.msra.mxu0 0
      %2013 = vmatprep.subr.bf16.mxu0 0
      %2014 = vmatpush2.bf16.msra.mxu0 0
      %2015 = vmatprep.subr.bf16.mxu0 0
      %2016 = vmatpush2.bf16.msra.mxu0 0
      %2017 = vmatprep.mubr.bf16.mxu0 0
      %2018 = vmatmul.mubr.bf16.gmra.mxu0 %v1942
      %v2019 = vpop.f32.mrf.mxu0
      %v2020 = vadd.f32 %v756, %v2019
      %v2021 = vpop.f32.mrf.mxu0
      %v2022 = vpop.f32.mrf.mxu0
      %v2023 = vadd.f32 %v756, %v2022
      %v2024 = vpop.f32.mrf.mxu0
      %2025 = vdwg.mxu0
      %2026 = vmatprep.subr.bf16.mxu0 0
      %2027 = vmatpush1.bf16.msra.mxu0 0
      %2028 = vmatprep.subr.bf16.mxu0 0
      %2029 = vmatpush1.bf16.msra.mxu0 0
      %2030 = vmatprep.subr.bf16.mxu0 0
      %2031 = vmatpush1.bf16.msra.mxu0 0
      %2032 = vmatprep.subr.bf16.mxu0 0
      %2033 = vmatpush1.bf16.msra.mxu0 0
      %2034 = vmatprep.subr.bf16.mxu0 0
      %2035 = vmatpush1.bf16.msra.mxu0 0
      %2036 = vmatprep.subr.bf16.mxu0 0
      %2037 = vmatpush1.bf16.msra.mxu0 0
      %2038 = vmatprep.subr.bf16.mxu0 0
      %2039 = vmatpush1.bf16.msra.mxu0 %v826
      %2040 = vmatprep.subr.bf16.mxu0 0
      %2041 = vmatpush1.bf16.msra.mxu0 %v825
      %2042 = vmatprep.subr.bf16.mxu0 0
      %2043 = vmatpush2.bf16.msra.mxu0 0
      %2044 = vmatprep.subr.bf16.mxu0 0
      %2045 = vmatpush2.bf16.msra.mxu0 0
      %2046 = vmatprep.subr.bf16.mxu0 0
      %2047 = vmatpush2.bf16.msra.mxu0 0
      %2048 = vmatprep.subr.bf16.mxu0 0
      %2049 = vmatpush2.bf16.msra.mxu0 0
      %2050 = vmatprep.subr.bf16.mxu0 0
      %2051 = vmatpush2.bf16.msra.mxu0 0
      %2052 = vmatprep.subr.bf16.mxu0 0
      %2053 = vmatpush2.bf16.msra.mxu0 0
      %2054 = vmatprep.subr.bf16.mxu0 0
      %2055 = vmatpush2.bf16.msra.mxu0 0
      %2056 = vmatprep.subr.bf16.mxu0 0
      %2057 = vmatpush2.bf16.msra.mxu0 0
      %2058 = vmatprep.mubr.bf16.mxu0 0
      %2059 = vmatmul.mubr.bf16.gmra.mxu0 %v1942
      %v2060 = vpop.f32.mrf.mxu0
      %v2061 = vadd.f32 %v815, %v2060
      %v2062 = vpop.f32.mrf.mxu0
      %v2063 = vpop.f32.mrf.mxu0
      %v2064 = vadd.f32 %v815, %v2063
      %v2065 = vpop.f32.mrf.mxu0
      %2066 = vdwg.mxu0
      %v2067 = vadd.f32 %v421, %v1979
      %v2068 = vadd.f32 %v424, %v1982
      %v2069 = vxor.u32 %v2067, 2147483648
      %v2070 = vxor.u32 %v2068, 2147483648
      %v2071 = vmul.f32 %v2069, 1.442695
      %v2072 = vpow.pop %v2071
      %v2073 = vmul.f32 %v2070, 1.442695
      %v2074 = vpow.pop %v2073
      %v2075 = vadd.f32 %v2072, 1.0
      %v2076 = vadd.f32 %v2074, 1.0
      %v2077 = vrcp.pop %v2075
      %v2078 = vmul.f32 1.0, %v2077
      %v2079 = vrcp.pop %v2076
      %v2080 = vmul.f32 1.0, %v2079
      %v2081 = vadd.f32 %v543, %v2020
      %v2082 = vadd.f32 %v546, %v2023
      %v2083 = vxor.u32 %v2081, 2147483648
      %v2084 = vxor.u32 %v2082, 2147483648
      %v2085 = vmul.f32 %v2083, 1.442695
      %v2086 = vpow.pop %v2085
      %v2087 = vmul.f32 %v2084, 1.442695
      %v2088 = vpow.pop %v2087
      %v2089 = vadd.f32 %v2086, 1.0
      %v2090 = vadd.f32 %v2088, 1.0
      %v2091 = vrcp.pop %v2089
      %v2092 = vmul.f32 1.0, %v2091
      %v2093 = vrcp.pop %v2090
      %v2094 = vmul.f32 1.0, %v2093
      %v2095 = vmul.f32 %v2078, %v2061
      %v2096 = vmul.f32 %v2080, %v2064
      %v2097 = vadd.f32 %v665, %v2095
      %v2098 = vadd.f32 %v668, %v2096
      %v2099 = vtanh.pop %v2097
      %v2100 = vtanh.pop %v2098
      %v2101 = vsub.f32 1.0, %v2092
      %v2102 = vsub.f32 1.0, %v2094
      %v2103 = vmul.f32 %v2101, %v2099
      %v2104 = vmul.f32 %v2102, %v2100
      %v2105 = vmul.f32 %v2092, %v1936
      %v2106 = vmul.f32 %v2094, %v1937
      %v2107 = vadd.f32 %v2103, %v2105
      %v2108 = vadd.f32 %v2104, %v2106
      %2109 = vst.msk [vmem:[%s224 + $0x70] sm:$0xff] %vm305, %v2107
      %2110 = vst.msk [vmem:[%s224 + $0x78] sm:$0xff] %vm305, %v2108
      %p2111 = scmp.lt.s32.totalorder %s16, 1
      %s2112 = scalar_select %p2111, %s16, 1
      %s2113 = smul.addr %s2112, 16
      %s2114 = smul.addr %s2113, 8
      %s2115 = scalar_lea.vmem %s5, %s2114
      // Predicated region
      $region41: #{bhst_predictor_forward.3} parent=39 // pred_check
        %p2116 = pneg %p144
      $region42: #{bhst_predictor_forward.3} parent=39 // pred_check_branch
        %2118 = sbr.rel (%p2116) target = $region44
      $region43: #{bhst_predictor_forward.3} parent=39 // pred_region
        _
      $region44: #{bhst_predictor_forward.3} parent=39 // pred_fallthru
        _
    $region40: #{bhst_predictor_forward.3} parent=5 // pred_fallthru
      _
    %p2119 = scmp.le.s32.totalorder 2, %s11
    // Predicated region
    $region45: #{bhst_predictor_forward.3} parent=5 // pred_check
      %p2120 = pneg %p2119
    $region46: #{bhst_predictor_forward.3} parent=5 // pred_check_branch
      %2122 = sbr.rel (%p2120) target = $region48
    $region47: #{bhst_predictor_forward.3} parent=5 // pred_region
      %s2123 = ssub.s32 %s11, 2
      // Predicated region
      $region49: #{bhst_predictor_forward.3} parent=47 // pred_check
        %p2124 = pneg %p150
      $region50: #{bhst_predictor_forward.3} parent=47 // pred_check_branch
        %2126 = sbr.rel (%p2124) target = $region52
      $region51: #{bhst_predictor_forward.3} parent=47 // pred_region
        %p2127 = scmp.lt.s32.totalorder %s17, 1
        %s2128 = scalar_select %p2127, %s17, 1
        %s2129 = smul.addr %s2128, 16
        %s2130 = smul.addr %s2129, 8
        %s2131 = scalar_lea.vmem %s5, %s2130
      $region52: #{bhst_predictor_forward.3} parent=47 // pred_fallthru
        _
    $region48: #{bhst_predictor_forward.3} parent=5 // pred_fallthru
      _
  $region6: #{bhst_predictor_forward.3} parent=0 // loop_footer
    %s15 = sadd.s32 1, %s11
  $region7: #{bhst_predictor_forward.3} parent=0 // loop_footer_branch
    %10 = sbr.rel target = $region3
  $region8: #{bhst_predictor_forward.3} parent=0 // loop_exit
    _

</llo_original>
